<compile_context>
chip_gen: v6e
topology: v6e:2x2x1
jax: 0.10.0
libtpu: 0.0.40
codegen_flags: <defaults>
</compile_context>

<pallas_src>
import jax
import jax.numpy as jnp
from jax.experimental import pallas as pl
from jax.experimental.pallas import tpu as pltpu


LANE = 128


def smn_lstm_kernel(x_ref, len_ref, w_emb_ref, b_emb_ref,
                    w_ih_ref, w_hh_ref, b_lstm_ref, out_ref):
    """One batch tile of the SMNEncoder: embedding + LSTM + last-valid-step hidden.

    Feature-major layout (features on sublanes, batch/time*batch on lanes):
      x_ref      : (1, D, T*Bt)  mxu_dtype  fused coords+time, column = t*Bt + b
      len_ref    : (1, Bt)       int32      valid lengths for this batch tile
      w_emb_ref  : (E, D)        mxu_dtype  spatio-temporal embedding (transposed)
      b_emb_ref  : (E, 1)        f32
      w_ih_ref   : (4H, E)       mxu_dtype  LSTM input->hidden (transposed)
      w_hh_ref   : (4H, H)       f32        LSTM hidden->hidden (transposed)
      b_lstm_ref : (4H, 1)       f32        b_ih + b_hh
      out_ref    : (H, Bt)       f32        hidden at last valid step (transposed)
    """
    H, Bt = out_ref.shape
    H4 = 4 * H
    T = x_ref.shape[-1] // Bt
    mxu_dtype = w_ih_ref.dtype

    # ---- Hoisted, non-recurrent input path: ONE lane-dense matmul chain over all
    # timesteps (MXU, bf16 operands, f32 accumulation). ----
    x = x_ref[0]                                                     # (D, T*Bt)
    e_all = jnp.tanh(
        jnp.dot(w_emb_ref[...], x, preferred_element_type=jnp.float32)
        + b_emb_ref[...])                                            # (E, T*Bt) f32

    # g-gate rows (2H:3H) of W_ih / b_lstm / W_hh are pre-scaled by 2 (hoisted) so
    # each step needs a single sigmoid over the whole 4H register; the g gate is
    # recovered with tanh(z) = 2*sigmoid(2z) - 1.  (~45% less EUP work/step.)
    row = jax.lax.broadcasted_iota(jnp.int32, (H4, 1), 0)
    gscale = jnp.where((row >= 2 * H) & (row < 3 * H),
                       jnp.float32(2.0), jnp.float32(1.0))           # (4H, 1)
    w_ih_s = (w_ih_ref[...].astype(jnp.float32) * gscale).astype(mxu_dtype)
    b_s = b_lstm_ref[...] * gscale                                   # (4H, 1)
    w_hh_s = w_hh_ref[...] * gscale                                  # (4H, H) f32

    a_all = (jnp.dot(w_ih_s, e_all.astype(mxu_dtype),
                     preferred_element_type=jnp.float32)
             + b_s)                                                  # (4H, T*Bt) f32

    # ---- Loop-invariants hoisted (JAX does not CSE broadcast_in_dim). ----
    lens_b = jnp.broadcast_to(len_ref[...], (H, Bt))                 # (H, Bt) int32

    h = jnp.zeros((H, Bt), jnp.float32)
    c = jnp.zeros((H, Bt), jnp.float32)

    # ---- Serial path: only W_hh @ h + gating.  T is small & static -> full unroll.
    # TODO(synk): for T > ~32 switch to lax.fori_loop(..., unroll=4) with a_all
    #             parked in VMEM scratch to bound vreg live ranges.
    # TODO(synk): pltpu.matmul_push_rhs does not help in this orientation (the
    #             loop-invariant operand W_hh is the LHS, not the RHS).
    for t in range(T):
        gates = a_all[:, t * Bt:(t + 1) * Bt] + jnp.dot(
            w_hh_s, h, preferred_element_type=jnp.float32)           # (4H, Bt)

        s = jax.nn.sigmoid(gates)              # single EUP pass over all 4 gates
        i_g = s[0 * H:1 * H, :]
        f_g = s[1 * H:2 * H, :]
        g_g = 2.0 * s[2 * H:3 * H, :] - 1.0    # == tanh(g pre-activation)
        o_g = s[3 * H:4 * H, :]

        c_new = f_g * c + i_g * g_g
        h_new = o_g * jnp.tanh(c_new)

        # Freeze state once t >= trajectory length (padded / packed sequences).
        valid = lens_b > t
        c = jnp.where(valid, c_new, c)
        h = jnp.where(valid, h_new, h)

    out_ref[...] = h  # hidden at last valid step == trajectory embedding (H, Bt)


def init_traj_network_params(key, target_size, coord_dim=2, time_dim=1, emb_dim=16):
    d_in = coord_dim + time_dim
    H = target_size
    k = jax.random.split(key, 5)
    scale = 0.1
    return {
        "w_emb": scale * jax.random.normal(k[0], (d_in, emb_dim), jnp.float32),
        "b_emb": jnp.zeros((1, emb_dim), jnp.float32),
        "w_ih": scale * jax.random.normal(k[1], (emb_dim, 4 * H), jnp.float32),
        "w_hh": scale * jax.random.normal(k[2], (H, 4 * H), jnp.float32),
        "b_lstm": scale * jax.random.normal(k[3], (1, 4 * H), jnp.float32),
    }


def _round_up(n, m):
    return ((n + m - 1) // m) * m


def traj_network_forward(inputs_arrays, time_arrays, inputs_len_arrays, network_data,
                         params, mxu_dtype=jnp.bfloat16):
    """Equivalent of Traj_Network.forward -> anchor_embedding of shape [B, target_size]."""
    del network_data  # TODO(synk): unused (SMNEncoder road-network usage not given)

    coords = jnp.asarray(inputs_arrays, jnp.float32)                 # (B0, T, 2)
    times = jnp.asarray(time_arrays, jnp.float32)                    # (B0, T)
    lens = jnp.asarray(inputs_len_arrays, jnp.int32).reshape(-1)     # (B0,)

    B0, T, _ = coords.shape
    x = jnp.concatenate([coords, times[..., None]], axis=-1)         # (B0, T, 3)
    D = x.shape[-1]
    E = params["w_emb"].shape[1]
    H = params["w_hh"].shape[0]

    # ---- Batch tiling: "parallel" grid over batch tiles (both v7x TensorCores);
    # lane-aligned Bt=128 at scale, full-array tile for small batches. ----
    if B0 > LANE:
        Bt = LANE            # could be raised on v5e/v6e (larger VMEM budget)
    else:
        Bt = max(8, _round_up(B0, 8))
    Bp = _round_up(B0, Bt)
    nB = Bp // Bt

    if Bp != B0:
        x = jnp.pad(x, ((0, Bp - B0), (0, 0), (0, 0)))
        lens = jnp.pad(lens, (0, Bp - B0))   # padded rows: len 0 -> state stays zero

    # Lane-dense, feature-major layout: for batch tile j, column t*Bt + b holds
    # (trajectory j*Bt + b, step t).  Wrapper-side reshapes are layout plumbing.
    x_blk = (x.reshape(nB, Bt, T, D)
              .transpose(0, 3, 2, 1)                                 # (nB, D, T, Bt)
              .reshape(nB, D, T * Bt)
              .astype(mxu_dtype))
    lens2 = lens.reshape(1, Bp)

    w_embT = params["w_emb"].T.astype(mxu_dtype)                     # (E, D)
    b_embT = params["b_emb"].reshape(E, 1).astype(jnp.float32)       # (E, 1)
    w_ihT = params["w_ih"].T.astype(mxu_dtype)                       # (4H, E)
    w_hhT = params["w_hh"].T.astype(jnp.float32)                     # (4H, H)
    b_lstmT = params["b_lstm"].reshape(4 * H, 1).astype(jnp.float32)  # (4H, 1)

    # ---- Explicit VMEM budget per grid step (a_all stays live across the whole
    # unrolled recurrence); keeps larger (T, Bt) inside v7x's 64 MiB VMEM. ----
    isz = jnp.dtype(mxu_dtype).itemsize
    est = (2 * D * T * Bt * isz              # x block (double-buffered)
           + E * T * Bt * 4                  # e_all
           + 4 * H * T * Bt * 4              # a_all (live f32)
           + (E * D + 4 * H * E) * isz       # mxu-dtype weights
           + (4 * H * H + 4 * H + E) * 4     # f32 weights / biases
           + 4 * H * Bt * 4)                 # h, c, lens_b, out
    vmem_limit = int(min(64 * 2 ** 20, max(32 * 2 ** 20, 2 * est)))

    out = pl.pallas_call(
        smn_lstm_kernel,
        out_shape=jax.ShapeDtypeStruct((H, Bp), jnp.float32),
        grid_spec=pltpu.PrefetchScalarGridSpec(
            num_scalar_prefetch=0,
            grid=(nB,),
            in_specs=[
                pl.BlockSpec((1, D, T * Bt), lambda j: (j, 0, 0)),   # fused inputs, tile j
                pl.BlockSpec((1, Bt), lambda j: (0, j)),             # lengths, tile j
                pl.BlockSpec((E, D), lambda j: (0, 0)),              # w_emb^T
                pl.BlockSpec((E, 1), lambda j: (0, 0)),              # b_emb^T
                pl.BlockSpec((4 * H, E), lambda j: (0, 0)),          # w_ih^T
                pl.BlockSpec((4 * H, H), lambda j: (0, 0)),          # w_hh^T
                pl.BlockSpec((4 * H, 1), lambda j: (0, 0)),          # b_lstm^T
            ],
            out_specs=pl.BlockSpec((H, Bt), lambda j: (0, j)),       # lane-dense output
        ),
        compiler_params=pltpu.CompilerParams(
            dimension_semantics=("parallel",),
            vmem_limit_bytes=vmem_limit),
    )(x_blk, lens2, w_embT, b_embT, w_ihT, w_hhT, b_lstmT)

    return out.T[:B0]                                                # (B0, H)


def traj_network_reference(inputs_arrays, time_arrays, inputs_len_arrays, params):
    """Pure-JAX f32 reference (lax.scan) for correctness checking."""
    coords = jnp.asarray(inputs_arrays, jnp.float32)
    times = jnp.asarray(time_arrays, jnp.float32)
    lens = jnp.asarray(inputs_len_arrays, jnp.int32).reshape(-1, 1)
    x = jnp.concatenate([coords, times[..., None]], axis=-1)         # (B, T, 3)
    x = jnp.transpose(x, (1, 0, 2))                                  # (T, B, 3)
    B = x.shape[1]
    H = params["w_hh"].shape[0]

    def step(carry, inp):
        h, c = carry
        t, x_t = inp
        e = jnp.tanh(x_t @ params["w_emb"] + params["b_emb"])
        gates = e @ params["w_ih"] + h @ params["w_hh"] + params["b_lstm"]
        i_g = jax.nn.sigmoid(gates[:, 0 * H:1 * H])
        f_g = jax.nn.sigmoid(gates[:, 1 * H:2 * H])
        g_g = jnp.tanh(gates[:, 2 * H:3 * H])
        o_g = jax.nn.sigmoid(gates[:, 3 * H:4 * H])
        c_new = f_g * c + i_g * g_g
        h_new = o_g * jnp.tanh(c_new)
        valid = t < lens
        h = jnp.where(valid, h_new, h)
        c = jnp.where(valid, c_new, c)
        return (h, c), None

    init = (jnp.zeros((B, H), jnp.float32), jnp.zeros((B, H), jnp.float32))
    (h, _), _ = jax.lax.scan(step, init, (jnp.arange(x.shape[0]), x))
    return h


if __name__ == "__main__":
    # Module hyperparameters (as in Traj_Network.__init__)
    target_size = 32
    batch_size = 4
    sampling_num = 2  # unused by forward()

    T = 8  # trajectory length (padded)
    key = jax.random.PRNGKey(0)
    k_in, k_t, k_p = jax.random.split(key, 3)

    inputs_arrays = jax.random.normal(k_in, (batch_size, T, 2), jnp.float32)  # coords
    time_arrays = jax.random.uniform(k_t, (batch_size, T), jnp.float32)       # timestamps
    inputs_len_arrays = jnp.array([8, 5, 7, 3], jnp.int32)                    # valid lens
    network_data = None  # road-network graph placeholder

    params = init_traj_network_params(k_p, target_size)

    emb = traj_network_forward(inputs_arrays, time_arrays, inputs_len_arrays,
                               network_data, params)
    emb = jax.block_until_ready(emb)

    ref = traj_network_reference(inputs_arrays, time_arrays, inputs_len_arrays, params)
    assert emb.shape == (batch_size, target_size)
    # bf16 MXU operands on the hoisted input path -> slightly looser tolerance vs
    # the pure-f32 reference (the tanh-via-sigmoid rewrite itself is exact).
    assert jnp.allclose(emb, ref, rtol=2e-2, atol=2e-3), "mismatch vs JAX reference"

    print("KERNEL_OK")
</pallas_src>

<mosaic_0001>
module attributes {stable_mosaic.version = 11 : i64} {
  func.func @smn_lstm_kernel(%arg0: i32, %arg1: memref<1x3x64xbf16, #tpu.memory_space<vmem>>, %arg2: memref<1x8xi32, #tpu.memory_space<vmem>>, %arg3: memref<16x3xbf16, #tpu.memory_space<vmem>>, %arg4: memref<16x1xf32, #tpu.memory_space<vmem>>, %arg5: memref<128x16xbf16, #tpu.memory_space<vmem>>, %arg6: memref<128x32xf32, #tpu.memory_space<vmem>>, %arg7: memref<128x1xf32, #tpu.memory_space<vmem>>, %arg8: memref<32x8xf32, #tpu.memory_space<vmem>>) attributes {dimension_semantics = [#tpu.dimension_semantics<parallel>], iteration_bounds = array<i64: 1>, scalar_prefetch = 0 : i64, scratch_operands = 0 : i64, tpu.core_type = #tpu.core_type<tc>, window_params = [{transform_indices = @transform_0, window_bounds = array<i64: 1, 3, 64>}, {transform_indices = @transform_1, window_bounds = array<i64: 1, 8>}, {pipeline_mode = #tpu.pipeline_mode<synchronous>, transform_indices = @transform_2, window_bounds = array<i64: 16, 3>}, {pipeline_mode = #tpu.pipeline_mode<synchronous>, transform_indices = @transform_3, window_bounds = array<i64: 16, 1>}, {pipeline_mode = #tpu.pipeline_mode<synchronous>, transform_indices = @transform_4, window_bounds = array<i64: 128, 16>}, {pipeline_mode = #tpu.pipeline_mode<synchronous>, transform_indices = @transform_5, window_bounds = array<i64: 128, 32>}, {pipeline_mode = #tpu.pipeline_mode<synchronous>, transform_indices = @transform_6, window_bounds = array<i64: 128, 1>}, {transform_indices = @transform_7, window_bounds = array<i64: 32, 8>}]} {
    %c0 = arith.constant 0 : index
    %c0_0 = arith.constant 0 : index
    %c0_1 = arith.constant 0 : index
    %0 = vector.load %arg1[%c0, %c0_0, %c0_1] : memref<1x3x64xbf16, #tpu.memory_space<vmem>>, vector<1x3x64xbf16>
    %1 = vector.shape_cast %0 : vector<1x3x64xbf16> to vector<3x64xbf16>
    %c0_2 = arith.constant 0 : index
    %c0_3 = arith.constant 0 : index
    %2 = vector.load %arg3[%c0_2, %c0_3] : memref<16x3xbf16, #tpu.memory_space<vmem>>, vector<16x3xbf16>
    %cst = arith.constant dense<0.000000e+00> : vector<16x64xf32>
    %3 = tpu.matmul %2, %1, %cst {dimension_numbers = #tpu.dot_dimension_numbers<[1], [0], [0], [1], [0, 0, 1, 1], [], []>} : vector<16x3xbf16>, vector<3x64xbf16>, vector<16x64xf32> -> vector<16x64xf32>
    %c0_4 = arith.constant 0 : index
    %c0_5 = arith.constant 0 : index
    %4 = vector.load %arg4[%c0_4, %c0_5] : memref<16x1xf32, #tpu.memory_space<vmem>>, vector<16x1xf32>
    %5 = vector.broadcast %4 : vector<16x1xf32> to vector<16x64xf32>
    %6 = arith.addf %3, %5 : vector<16x64xf32>
    %7 = math.tanh %6 : vector<16x64xf32>
    %8 = tpu.iota {dimensions = array<i32: 0>} : vector<128x1xi32>
    %c64_i32 = arith.constant 64 : i32
    %9 = vector.broadcast %c64_i32 : i32 to vector<128x1xi32>
    %10 = arith.cmpi sge, %8, %9 : vector<128x1xi32>
    %c96_i32 = arith.constant 96 : i32
    %11 = vector.broadcast %c96_i32 : i32 to vector<128x1xi32>
    %12 = arith.cmpi slt, %8, %11 : vector<128x1xi32>
    %13 = arith.andi %10, %12 : vector<128x1xi1>
    %cst_6 = arith.constant 2.000000e+00 : f32
    %cst_7 = arith.constant 1.000000e+00 : f32
    %14 = vector.broadcast %cst_6 : f32 to vector<128x1xf32>
    %15 = vector.broadcast %cst_7 : f32 to vector<128x1xf32>
    %16 = arith.select %13, %14, %15 : vector<128x1xi1>, vector<128x1xf32>
    %c0_8 = arith.constant 0 : index
    %c0_9 = arith.constant 0 : index
    %17 = vector.load %arg5[%c0_8, %c0_9] : memref<128x16xbf16, #tpu.memory_space<vmem>>, vector<128x16xbf16>
    %18 = arith.extf %17 : vector<128x16xbf16> to vector<128x16xf32>
    %19 = vector.broadcast %16 : vector<128x1xf32> to vector<128x16xf32>
    %20 = arith.mulf %18, %19 : vector<128x16xf32>
    %21 = arith.truncf %20 : vector<128x16xf32> to vector<128x16xbf16>
    %c0_10 = arith.constant 0 : index
    %c0_11 = arith.constant 0 : index
    %22 = vector.load %arg7[%c0_10, %c0_11] : memref<128x1xf32, #tpu.memory_space<vmem>>, vector<128x1xf32>
    %23 = arith.mulf %22, %16 : vector<128x1xf32>
    %c0_12 = arith.constant 0 : index
    %c0_13 = arith.constant 0 : index
    %24 = vector.load %arg6[%c0_12, %c0_13] : memref<128x32xf32, #tpu.memory_space<vmem>>, vector<128x32xf32>
    %25 = vector.broadcast %16 : vector<128x1xf32> to vector<128x32xf32>
    %26 = arith.mulf %24, %25 : vector<128x32xf32>
    %27 = arith.truncf %7 : vector<16x64xf32> to vector<16x64xbf16>
    %cst_14 = arith.constant dense<0.000000e+00> : vector<128x64xf32>
    %28 = tpu.matmul %21, %27, %cst_14 {dimension_numbers = #tpu.dot_dimension_numbers<[1], [0], [0], [1], [0, 0, 1, 1], [], []>} : vector<128x16xbf16>, vector<16x64xbf16>, vector<128x64xf32> -> vector<128x64xf32>
    %29 = vector.broadcast %23 : vector<128x1xf32> to vector<128x64xf32>
    %30 = arith.addf %28, %29 : vector<128x64xf32>
    %c0_15 = arith.constant 0 : index
    %c0_16 = arith.constant 0 : index
    %31 = vector.load %arg2[%c0_15, %c0_16] : memref<1x8xi32, #tpu.memory_space<vmem>>, vector<1x8xi32>
    %32 = vector.shape_cast %31 : vector<1x8xi32> to vector<1x8xi32>
    %33 = vector.broadcast %32 : vector<1x8xi32> to vector<32x8xi32>
    %cst_17 = arith.constant 0.000000e+00 : f32
    %34 = vector.broadcast %cst_17 : f32 to vector<32x8xf32>
    %cst_18 = arith.constant 0.000000e+00 : f32
    %35 = vector.broadcast %cst_18 : f32 to vector<32x8xf32>
    %36 = vector.extract_strided_slice %30 {offsets = [0, 0], sizes = [128, 8], strides = [1, 1]} : vector<128x64xf32> to vector<128x8xf32>
    %cst_19 = arith.constant dense<0.000000e+00> : vector<128x8xf32>
    %37 = tpu.matmul %26, %34, %cst_19 {dimension_numbers = #tpu.dot_dimension_numbers<[1], [0], [0], [1], [0, 0, 1, 1], [], []>} : vector<128x32xf32>, vector<32x8xf32>, vector<128x8xf32> -> vector<128x8xf32>
    %38 = arith.addf %36, %37 : vector<128x8xf32>
    %39 = arith.negf %38 : vector<128x8xf32>
    %40 = math.exp %39 : vector<128x8xf32>
    %cst_20 = arith.constant 1.000000e+00 : f32
    %41 = vector.broadcast %cst_20 : f32 to vector<128x8xf32>
    %42 = arith.addf %41, %40 : vector<128x8xf32>
    %43 = arith.divf %41, %42 : vector<128x8xf32>
    %44 = vector.extract_strided_slice %43 {offsets = [0, 0], sizes = [32, 8], strides = [1, 1]} : vector<128x8xf32> to vector<32x8xf32>
    %45 = vector.extract_strided_slice %43 {offsets = [32, 0], sizes = [32, 8], strides = [1, 1]} : vector<128x8xf32> to vector<32x8xf32>
    %46 = vector.extract_strided_slice %43 {offsets = [64, 0], sizes = [32, 8], strides = [1, 1]} : vector<128x8xf32> to vector<32x8xf32>
    %cst_21 = arith.constant 2.000000e+00 : f32
    %47 = vector.broadcast %cst_21 : f32 to vector<32x8xf32>
    %48 = arith.mulf %47, %46 : vector<32x8xf32>
    %cst_22 = arith.constant 1.000000e+00 : f32
    %49 = vector.broadcast %cst_22 : f32 to vector<32x8xf32>
    %50 = arith.subf %48, %49 : vector<32x8xf32>
    %51 = vector.extract_strided_slice %43 {offsets = [96, 0], sizes = [32, 8], strides = [1, 1]} : vector<128x8xf32> to vector<32x8xf32>
    %52 = arith.mulf %45, %35 : vector<32x8xf32>
    %53 = arith.mulf %44, %50 : vector<32x8xf32>
    %54 = arith.addf %52, %53 : vector<32x8xf32>
    %55 = math.tanh %54 : vector<32x8xf32>
    %56 = arith.mulf %51, %55 : vector<32x8xf32>
    %c0_i32 = arith.constant 0 : i32
    %57 = vector.broadcast %c0_i32 : i32 to vector<32x8xi32>
    %58 = arith.cmpi sgt, %33, %57 : vector<32x8xi32>
    %59 = arith.select %58, %54, %35 : vector<32x8xi1>, vector<32x8xf32>
    %60 = arith.select %58, %56, %34 : vector<32x8xi1>, vector<32x8xf32>
    %61 = vector.extract_strided_slice %30 {offsets = [0, 8], sizes = [128, 8], strides = [1, 1]} : vector<128x64xf32> to vector<128x8xf32>
    %cst_23 = arith.constant dense<0.000000e+00> : vector<128x8xf32>
    %62 = tpu.matmul %26, %60, %cst_23 {dimension_numbers = #tpu.dot_dimension_numbers<[1], [0], [0], [1], [0, 0, 1, 1], [], []>} : vector<128x32xf32>, vector<32x8xf32>, vector<128x8xf32> -> vector<128x8xf32>
    %63 = arith.addf %61, %62 : vector<128x8xf32>
    %64 = arith.negf %63 : vector<128x8xf32>
    %65 = math.exp %64 : vector<128x8xf32>
    %cst_24 = arith.constant 1.000000e+00 : f32
    %66 = vector.broadcast %cst_24 : f32 to vector<128x8xf32>
    %67 = arith.addf %66, %65 : vector<128x8xf32>
    %68 = arith.divf %66, %67 : vector<128x8xf32>
    %69 = vector.extract_strided_slice %68 {offsets = [0, 0], sizes = [32, 8], strides = [1, 1]} : vector<128x8xf32> to vector<32x8xf32>
    %70 = vector.extract_strided_slice %68 {offsets = [32, 0], sizes = [32, 8], strides = [1, 1]} : vector<128x8xf32> to vector<32x8xf32>
    %71 = vector.extract_strided_slice %68 {offsets = [64, 0], sizes = [32, 8], strides = [1, 1]} : vector<128x8xf32> to vector<32x8xf32>
    %cst_25 = arith.constant 2.000000e+00 : f32
    %72 = vector.broadcast %cst_25 : f32 to vector<32x8xf32>
    %73 = arith.mulf %72, %71 : vector<32x8xf32>
    %cst_26 = arith.constant 1.000000e+00 : f32
    %74 = vector.broadcast %cst_26 : f32 to vector<32x8xf32>
    %75 = arith.subf %73, %74 : vector<32x8xf32>
    %76 = vector.extract_strided_slice %68 {offsets = [96, 0], sizes = [32, 8], strides = [1, 1]} : vector<128x8xf32> to vector<32x8xf32>
    %77 = arith.mulf %70, %59 : vector<32x8xf32>
    %78 = arith.mulf %69, %75 : vector<32x8xf32>
    %79 = arith.addf %77, %78 : vector<32x8xf32>
    %80 = math.tanh %79 : vector<32x8xf32>
    %81 = arith.mulf %76, %80 : vector<32x8xf32>
    %c1_i32 = arith.constant 1 : i32
    %82 = vector.broadcast %c1_i32 : i32 to vector<32x8xi32>
    %83 = arith.cmpi sgt, %33, %82 : vector<32x8xi32>
    %84 = arith.select %83, %79, %59 : vector<32x8xi1>, vector<32x8xf32>
    %85 = arith.select %83, %81, %60 : vector<32x8xi1>, vector<32x8xf32>
    %86 = vector.extract_strided_slice %30 {offsets = [0, 16], sizes = [128, 8], strides = [1, 1]} : vector<128x64xf32> to vector<128x8xf32>
    %cst_27 = arith.constant dense<0.000000e+00> : vector<128x8xf32>
    %87 = tpu.matmul %26, %85, %cst_27 {dimension_numbers = #tpu.dot_dimension_numbers<[1], [0], [0], [1], [0, 0, 1, 1], [], []>} : vector<128x32xf32>, vector<32x8xf32>, vector<128x8xf32> -> vector<128x8xf32>
    %88 = arith.addf %86, %87 : vector<128x8xf32>
    %89 = arith.negf %88 : vector<128x8xf32>
    %90 = math.exp %89 : vector<128x8xf32>
    %cst_28 = arith.constant 1.000000e+00 : f32
    %91 = vector.broadcast %cst_28 : f32 to vector<128x8xf32>
    %92 = arith.addf %91, %90 : vector<128x8xf32>
    %93 = arith.divf %91, %92 : vector<128x8xf32>
    %94 = vector.extract_strided_slice %93 {offsets = [0, 0], sizes = [32, 8], strides = [1, 1]} : vector<128x8xf32> to vector<32x8xf32>
    %95 = vector.extract_strided_slice %93 {offsets = [32, 0], sizes = [32, 8], strides = [1, 1]} : vector<128x8xf32> to vector<32x8xf32>
    %96 = vector.extract_strided_slice %93 {offsets = [64, 0], sizes = [32, 8], strides = [1, 1]} : vector<128x8xf32> to vector<32x8xf32>
    %cst_29 = arith.constant 2.000000e+00 : f32
    %97 = vector.broadcast %cst_29 : f32 to vector<32x8xf32>
    %98 = arith.mulf %97, %96 : vector<32x8xf32>
    %cst_30 = arith.constant 1.000000e+00 : f32
    %99 = vector.broadcast %cst_30 : f32 to vector<32x8xf32>
    %100 = arith.subf %98, %99 : vector<32x8xf32>
    %101 = vector.extract_strided_slice %93 {offsets = [96, 0], sizes = [32, 8], strides = [1, 1]} : vector<128x8xf32> to vector<32x8xf32>
    %102 = arith.mulf %95, %84 : vector<32x8xf32>
    %103 = arith.mulf %94, %100 : vector<32x8xf32>
    %104 = arith.addf %102, %103 : vector<32x8xf32>
    %105 = math.tanh %104 : vector<32x8xf32>
    %106 = arith.mulf %101, %105 : vector<32x8xf32>
    %c2_i32 = arith.constant 2 : i32
    %107 = vector.broadcast %c2_i32 : i32 to vector<32x8xi32>
    %108 = arith.cmpi sgt, %33, %107 : vector<32x8xi32>
    %109 = arith.select %108, %104, %84 : vector<32x8xi1>, vector<32x8xf32>
    %110 = arith.select %108, %106, %85 : vector<32x8xi1>, vector<32x8xf32>
    %111 = vector.extract_strided_slice %30 {offsets = [0, 24], sizes = [128, 8], strides = [1, 1]} : vector<128x64xf32> to vector<128x8xf32>
    %cst_31 = arith.constant dense<0.000000e+00> : vector<128x8xf32>
    %112 = tpu.matmul %26, %110, %cst_31 {dimension_numbers = #tpu.dot_dimension_numbers<[1], [0], [0], [1], [0, 0, 1, 1], [], []>} : vector<128x32xf32>, vector<32x8xf32>, vector<128x8xf32> -> vector<128x8xf32>
    %113 = arith.addf %111, %112 : vector<128x8xf32>
    %114 = arith.negf %113 : vector<128x8xf32>
    %115 = math.exp %114 : vector<128x8xf32>
    %cst_32 = arith.constant 1.000000e+00 : f32
    %116 = vector.broadcast %cst_32 : f32 to vector<128x8xf32>
    %117 = arith.addf %116, %115 : vector<128x8xf32>
    %118 = arith.divf %116, %117 : vector<128x8xf32>
    %119 = vector.extract_strided_slice %118 {offsets = [0, 0], sizes = [32, 8], strides = [1, 1]} : vector<128x8xf32> to vector<32x8xf32>
    %120 = vector.extract_strided_slice %118 {offsets = [32, 0], sizes = [32, 8], strides = [1, 1]} : vector<128x8xf32> to vector<32x8xf32>
    %121 = vector.extract_strided_slice %118 {offsets = [64, 0], sizes = [32, 8], strides = [1, 1]} : vector<128x8xf32> to vector<32x8xf32>
    %cst_33 = arith.constant 2.000000e+00 : f32
    %122 = vector.broadcast %cst_33 : f32 to vector<32x8xf32>
    %123 = arith.mulf %122, %121 : vector<32x8xf32>
    %cst_34 = arith.constant 1.000000e+00 : f32
    %124 = vector.broadcast %cst_34 : f32 to vector<32x8xf32>
    %125 = arith.subf %123, %124 : vector<32x8xf32>
    %126 = vector.extract_strided_slice %118 {offsets = [96, 0], sizes = [32, 8], strides = [1, 1]} : vector<128x8xf32> to vector<32x8xf32>
    %127 = arith.mulf %120, %109 : vector<32x8xf32>
    %128 = arith.mulf %119, %125 : vector<32x8xf32>
    %129 = arith.addf %127, %128 : vector<32x8xf32>
    %130 = math.tanh %129 : vector<32x8xf32>
    %131 = arith.mulf %126, %130 : vector<32x8xf32>
    %c3_i32 = arith.constant 3 : i32
    %132 = vector.broadcast %c3_i32 : i32 to vector<32x8xi32>
    %133 = arith.cmpi sgt, %33, %132 : vector<32x8xi32>
    %134 = arith.select %133, %129, %109 : vector<32x8xi1>, vector<32x8xf32>
    %135 = arith.select %133, %131, %110 : vector<32x8xi1>, vector<32x8xf32>
    %136 = vector.extract_strided_slice %30 {offsets = [0, 32], sizes = [128, 8], strides = [1, 1]} : vector<128x64xf32> to vector<128x8xf32>
    %cst_35 = arith.constant dense<0.000000e+00> : vector<128x8xf32>
    %137 = tpu.matmul %26, %135, %cst_35 {dimension_numbers = #tpu.dot_dimension_numbers<[1], [0], [0], [1], [0, 0, 1, 1], [], []>} : vector<128x32xf32>, vector<32x8xf32>, vector<128x8xf32> -> vector<128x8xf32>
    %138 = arith.addf %136, %137 : vector<128x8xf32>
    %139 = arith.negf %138 : vector<128x8xf32>
    %140 = math.exp %139 : vector<128x8xf32>
    %cst_36 = arith.constant 1.000000e+00 : f32
    %141 = vector.broadcast %cst_36 : f32 to vector<128x8xf32>
    %142 = arith.addf %141, %140 : vector<128x8xf32>
    %143 = arith.divf %141, %142 : vector<128x8xf32>
    %144 = vector.extract_strided_slice %143 {offsets = [0, 0], sizes = [32, 8], strides = [1, 1]} : vector<128x8xf32> to vector<32x8xf32>
    %145 = vector.extract_strided_slice %143 {offsets = [32, 0], sizes = [32, 8], strides = [1, 1]} : vector<128x8xf32> to vector<32x8xf32>
    %146 = vector.extract_strided_slice %143 {offsets = [64, 0], sizes = [32, 8], strides = [1, 1]} : vector<128x8xf32> to vector<32x8xf32>
    %cst_37 = arith.constant 2.000000e+00 : f32
    %147 = vector.broadcast %cst_37 : f32 to vector<32x8xf32>
    %148 = arith.mulf %147, %146 : vector<32x8xf32>
    %cst_38 = arith.constant 1.000000e+00 : f32
    %149 = vector.broadcast %cst_38 : f32 to vector<32x8xf32>
    %150 = arith.subf %148, %149 : vector<32x8xf32>
    %151 = vector.extract_strided_slice %143 {offsets = [96, 0], sizes = [32, 8], strides = [1, 1]} : vector<128x8xf32> to vector<32x8xf32>
    %152 = arith.mulf %145, %134 : vector<32x8xf32>
    %153 = arith.mulf %144, %150 : vector<32x8xf32>
    %154 = arith.addf %152, %153 : vector<32x8xf32>
    %155 = math.tanh %154 : vector<32x8xf32>
    %156 = arith.mulf %151, %155 : vector<32x8xf32>
    %c4_i32 = arith.constant 4 : i32
    %157 = vector.broadcast %c4_i32 : i32 to vector<32x8xi32>
    %158 = arith.cmpi sgt, %33, %157 : vector<32x8xi32>
    %159 = arith.select %158, %154, %134 : vector<32x8xi1>, vector<32x8xf32>
    %160 = arith.select %158, %156, %135 : vector<32x8xi1>, vector<32x8xf32>
    %161 = vector.extract_strided_slice %30 {offsets = [0, 40], sizes = [128, 8], strides = [1, 1]} : vector<128x64xf32> to vector<128x8xf32>
    %cst_39 = arith.constant dense<0.000000e+00> : vector<128x8xf32>
    %162 = tpu.matmul %26, %160, %cst_39 {dimension_numbers = #tpu.dot_dimension_numbers<[1], [0], [0], [1], [0, 0, 1, 1], [], []>} : vector<128x32xf32>, vector<32x8xf32>, vector<128x8xf32> -> vector<128x8xf32>
    %163 = arith.addf %161, %162 : vector<128x8xf32>
    %164 = arith.negf %163 : vector<128x8xf32>
    %165 = math.exp %164 : vector<128x8xf32>
    %cst_40 = arith.constant 1.000000e+00 : f32
    %166 = vector.broadcast %cst_40 : f32 to vector<128x8xf32>
    %167 = arith.addf %166, %165 : vector<128x8xf32>
    %168 = arith.divf %166, %167 : vector<128x8xf32>
    %169 = vector.extract_strided_slice %168 {offsets = [0, 0], sizes = [32, 8], strides = [1, 1]} : vector<128x8xf32> to vector<32x8xf32>
    %170 = vector.extract_strided_slice %168 {offsets = [32, 0], sizes = [32, 8], strides = [1, 1]} : vector<128x8xf32> to vector<32x8xf32>
    %171 = vector.extract_strided_slice %168 {offsets = [64, 0], sizes = [32, 8], strides = [1, 1]} : vector<128x8xf32> to vector<32x8xf32>
    %cst_41 = arith.constant 2.000000e+00 : f32
    %172 = vector.broadcast %cst_41 : f32 to vector<32x8xf32>
    %173 = arith.mulf %172, %171 : vector<32x8xf32>
    %cst_42 = arith.constant 1.000000e+00 : f32
    %174 = vector.broadcast %cst_42 : f32 to vector<32x8xf32>
    %175 = arith.subf %173, %174 : vector<32x8xf32>
    %176 = vector.extract_strided_slice %168 {offsets = [96, 0], sizes = [32, 8], strides = [1, 1]} : vector<128x8xf32> to vector<32x8xf32>
    %177 = arith.mulf %170, %159 : vector<32x8xf32>
    %178 = arith.mulf %169, %175 : vector<32x8xf32>
    %179 = arith.addf %177, %178 : vector<32x8xf32>
    %180 = math.tanh %179 : vector<32x8xf32>
    %181 = arith.mulf %176, %180 : vector<32x8xf32>
    %c5_i32 = arith.constant 5 : i32
    %182 = vector.broadcast %c5_i32 : i32 to vector<32x8xi32>
    %183 = arith.cmpi sgt, %33, %182 : vector<32x8xi32>
    %184 = arith.select %183, %179, %159 : vector<32x8xi1>, vector<32x8xf32>
    %185 = arith.select %183, %181, %160 : vector<32x8xi1>, vector<32x8xf32>
    %186 = vector.extract_strided_slice %30 {offsets = [0, 48], sizes = [128, 8], strides = [1, 1]} : vector<128x64xf32> to vector<128x8xf32>
    %cst_43 = arith.constant dense<0.000000e+00> : vector<128x8xf32>
    %187 = tpu.matmul %26, %185, %cst_43 {dimension_numbers = #tpu.dot_dimension_numbers<[1], [0], [0], [1], [0, 0, 1, 1], [], []>} : vector<128x32xf32>, vector<32x8xf32>, vector<128x8xf32> -> vector<128x8xf32>
    %188 = arith.addf %186, %187 : vector<128x8xf32>
    %189 = arith.negf %188 : vector<128x8xf32>
    %190 = math.exp %189 : vector<128x8xf32>
    %cst_44 = arith.constant 1.000000e+00 : f32
    %191 = vector.broadcast %cst_44 : f32 to vector<128x8xf32>
    %192 = arith.addf %191, %190 : vector<128x8xf32>
    %193 = arith.divf %191, %192 : vector<128x8xf32>
    %194 = vector.extract_strided_slice %193 {offsets = [0, 0], sizes = [32, 8], strides = [1, 1]} : vector<128x8xf32> to vector<32x8xf32>
    %195 = vector.extract_strided_slice %193 {offsets = [32, 0], sizes = [32, 8], strides = [1, 1]} : vector<128x8xf32> to vector<32x8xf32>
    %196 = vector.extract_strided_slice %193 {offsets = [64, 0], sizes = [32, 8], strides = [1, 1]} : vector<128x8xf32> to vector<32x8xf32>
    %cst_45 = arith.constant 2.000000e+00 : f32
    %197 = vector.broadcast %cst_45 : f32 to vector<32x8xf32>
    %198 = arith.mulf %197, %196 : vector<32x8xf32>
    %cst_46 = arith.constant 1.000000e+00 : f32
    %199 = vector.broadcast %cst_46 : f32 to vector<32x8xf32>
    %200 = arith.subf %198, %199 : vector<32x8xf32>
    %201 = vector.extract_strided_slice %193 {offsets = [96, 0], sizes = [32, 8], strides = [1, 1]} : vector<128x8xf32> to vector<32x8xf32>
    %202 = arith.mulf %195, %184 : vector<32x8xf32>
    %203 = arith.mulf %194, %200 : vector<32x8xf32>
    %204 = arith.addf %202, %203 : vector<32x8xf32>
    %205 = math.tanh %204 : vector<32x8xf32>
    %206 = arith.mulf %201, %205 : vector<32x8xf32>
    %c6_i32 = arith.constant 6 : i32
    %207 = vector.broadcast %c6_i32 : i32 to vector<32x8xi32>
    %208 = arith.cmpi sgt, %33, %207 : vector<32x8xi32>
    %209 = arith.select %208, %204, %184 : vector<32x8xi1>, vector<32x8xf32>
    %210 = arith.select %208, %206, %185 : vector<32x8xi1>, vector<32x8xf32>
    %211 = vector.extract_strided_slice %30 {offsets = [0, 56], sizes = [128, 8], strides = [1, 1]} : vector<128x64xf32> to vector<128x8xf32>
    %cst_47 = arith.constant dense<0.000000e+00> : vector<128x8xf32>
    %212 = tpu.matmul %26, %210, %cst_47 {dimension_numbers = #tpu.dot_dimension_numbers<[1], [0], [0], [1], [0, 0, 1, 1], [], []>} : vector<128x32xf32>, vector<32x8xf32>, vector<128x8xf32> -> vector<128x8xf32>
    %213 = arith.addf %211, %212 : vector<128x8xf32>
    %214 = arith.negf %213 : vector<128x8xf32>
    %215 = math.exp %214 : vector<128x8xf32>
    %cst_48 = arith.constant 1.000000e+00 : f32
    %216 = vector.broadcast %cst_48 : f32 to vector<128x8xf32>
    %217 = arith.addf %216, %215 : vector<128x8xf32>
    %218 = arith.divf %216, %217 : vector<128x8xf32>
    %219 = vector.extract_strided_slice %218 {offsets = [0, 0], sizes = [32, 8], strides = [1, 1]} : vector<128x8xf32> to vector<32x8xf32>
    %220 = vector.extract_strided_slice %218 {offsets = [32, 0], sizes = [32, 8], strides = [1, 1]} : vector<128x8xf32> to vector<32x8xf32>
    %221 = vector.extract_strided_slice %218 {offsets = [64, 0], sizes = [32, 8], strides = [1, 1]} : vector<128x8xf32> to vector<32x8xf32>
    %cst_49 = arith.constant 2.000000e+00 : f32
    %222 = vector.broadcast %cst_49 : f32 to vector<32x8xf32>
    %223 = arith.mulf %222, %221 : vector<32x8xf32>
    %cst_50 = arith.constant 1.000000e+00 : f32
    %224 = vector.broadcast %cst_50 : f32 to vector<32x8xf32>
    %225 = arith.subf %223, %224 : vector<32x8xf32>
    %226 = vector.extract_strided_slice %218 {offsets = [96, 0], sizes = [32, 8], strides = [1, 1]} : vector<128x8xf32> to vector<32x8xf32>
    %227 = arith.mulf %220, %209 : vector<32x8xf32>
    %228 = arith.mulf %219, %225 : vector<32x8xf32>
    %229 = arith.addf %227, %228 : vector<32x8xf32>
    %230 = math.tanh %229 : vector<32x8xf32>
    %231 = arith.mulf %226, %230 : vector<32x8xf32>
    %c7_i32 = arith.constant 7 : i32
    %232 = vector.broadcast %c7_i32 : i32 to vector<32x8xi32>
    %233 = arith.cmpi sgt, %33, %232 : vector<32x8xi32>
    %234 = arith.select %233, %231, %210 : vector<32x8xi1>, vector<32x8xf32>
    %c0_51 = arith.constant 0 : index
    %c0_52 = arith.constant 0 : index
    %235 = vector.load %arg8[%c0_51, %c0_52] : memref<32x8xf32, #tpu.memory_space<vmem>>, vector<32x8xf32>
    tpu.vector_store %arg8[%c0_51, %c0_52], %234 {strides = array<i32>} : memref<32x8xf32, #tpu.memory_space<vmem>>, vector<32x8xf32>,
    return
  }
  func.func @transform_0(%arg0: i32) -> (i32, i32, i32) {
    %c0_i32 = arith.constant 0 : i32
    %c0_i32_0 = arith.constant 0 : i32
    %c0_i32_1 = arith.constant 0 : i32
    return %arg0, %c0_i32, %c0_i32_0 : i32, i32, i32
  }
  func.func @transform_1(%arg0: i32) -> (i32, i32) {
    %c0_i32 = arith.constant 0 : i32
    %c0_i32_0 = arith.constant 0 : i32
    return %c0_i32, %arg0 : i32, i32
  }
  func.func @transform_2(%arg0: i32) -> (i32, i32) {
    %c0_i32 = arith.constant 0 : i32
    %c0_i32_0 = arith.constant 0 : i32
    %c0_i32_1 = arith.constant 0 : i32
    return %c0_i32, %c0_i32_0 : i32, i32
  }
  func.func @transform_3(%arg0: i32) -> (i32, i32) {
    %c0_i32 = arith.constant 0 : i32
    %c0_i32_0 = arith.constant 0 : i32
    %c0_i32_1 = arith.constant 0 : i32
    return %c0_i32, %c0_i32_0 : i32, i32
  }
  func.func @transform_4(%arg0: i32) -> (i32, i32) {
    %c0_i32 = arith.constant 0 : i32
    %c0_i32_0 = arith.constant 0 : i32
    %c0_i32_1 = arith.constant 0 : i32
    return %c0_i32, %c0_i32_0 : i32, i32
  }
  func.func @transform_5(%arg0: i32) -> (i32, i32) {
    %c0_i32 = arith.constant 0 : i32
    %c0_i32_0 = arith.constant 0 : i32
    %c0_i32_1 = arith.constant 0 : i32
    return %c0_i32, %c0_i32_0 : i32, i32
  }
  func.func @transform_6(%arg0: i32) -> (i32, i32) {
    %c0_i32 = arith.constant 0 : i32
    %c0_i32_0 = arith.constant 0 : i32
    %c0_i32_1 = arith.constant 0 : i32
    return %c0_i32, %c0_i32_0 : i32, i32
  }
  func.func @transform_7(%arg0: i32) -> (i32, i32) {
    %c0_i32 = arith.constant 0 : i32
    %c0_i32_0 = arith.constant 0 : i32
    return %c0_i32, %arg0 : i32, i32
  }
}

</mosaic_0001>

<llo_original>
// kernel: tpu_custom_call.1
$region0: #{tpu_custom_call.1}
  #allocation0 [shape = 'u32[]', space=smem, size = 0x4, offset = 0x4, fixed_abs, tag = 'smem constant byte address 0x4 - core index']
  #allocation1 [shape = 'u32[144,128]{1,0:T(1,128)}', space=vmem, size = 0x12000, scoped, tag = 'internal scratch']
  %s0 = inlined_call_operand.vmem [shape: bf16[1,3,64], index: 0, kind: input, shape index: {}]
  %s1 = inlined_call_operand.vmem [shape: s32[1,8], index: 1, kind: input, shape index: {}]
  %s2 = inlined_call_operand.vmem [shape: bf16[16,3], index: 2, kind: input, shape index: {}]
  %s3 = inlined_call_operand.vmem [shape: f32[16,1], index: 3, kind: input, shape index: {}]
  %s4 = inlined_call_operand.vmem [shape: bf16[128,16], index: 4, kind: input, shape index: {}]
  %s5 = inlined_call_operand.vmem [shape: f32[128,32], index: 5, kind: input, shape index: {}]
  %s6 = inlined_call_operand.vmem [shape: f32[128,1], index: 6, kind: input, shape index: {}]
  %s7 = inlined_call_operand.vmem [shape: f32[32,8], index: 7, kind: output, shape index: {}]
  %s8 = sld [smem:[#allocation0]]
  $region38: #{tpu_custom_call.1} parent=0
    _
  %s10 = ssub.s32 1, %s8
  %s11 = scalar_select 0, %s10, %s8
  // Predicated region
  $region2: #{tpu_custom_call.1} parent=0 // pred_check
    _
  $region3: #{tpu_custom_call.1} parent=0 // pred_check_branch
    %13 = sbr.rel (0) target = $region5
  $region4: #{tpu_custom_call.1} parent=0 // pred_region
    _
  $region5: #{tpu_custom_call.1} parent=0 // pred_fallthru
    _
  // Predicated region
  $region6: #{tpu_custom_call.1} parent=0 // pred_check
    _
  $region7: #{tpu_custom_call.1} parent=0 // pred_check_branch
    %15 = sbr.rel (0) target = $region9
  $region8: #{tpu_custom_call.1} parent=0 // pred_region
    _
  $region9: #{tpu_custom_call.1} parent=0 // pred_fallthru
    _
  // Predicated region
  $region10: #{tpu_custom_call.1} parent=0 // pred_check
    _
  $region11: #{tpu_custom_call.1} parent=0 // pred_check_branch
    %17 = sbr.rel (0) target = $region13
  $region12: #{tpu_custom_call.1} parent=0 // pred_region
    _
  $region13: #{tpu_custom_call.1} parent=0 // pred_fallthru
    _
  // Predicated region
  $region14: #{tpu_custom_call.1} parent=0 // pred_check
    _
  $region15: #{tpu_custom_call.1} parent=0 // pred_check_branch
    %19 = sbr.rel (0) target = $region17
  $region16: #{tpu_custom_call.1} parent=0 // pred_region
    _
  $region17: #{tpu_custom_call.1} parent=0 // pred_fallthru
    _
  // Predicated region
  $region18: #{tpu_custom_call.1} parent=0 // pred_check
    _
  $region19: #{tpu_custom_call.1} parent=0 // pred_check_branch
    %21 = sbr.rel (0) target = $region21
  $region20: #{tpu_custom_call.1} parent=0 // pred_region
    _
  $region21: #{tpu_custom_call.1} parent=0 // pred_fallthru
    _
  // Predicated region
  $region22: #{tpu_custom_call.1} parent=0 // pred_check
    _
  $region23: #{tpu_custom_call.1} parent=0 // pred_check_branch
    %23 = sbr.rel (0) target = $region25
  $region24: #{tpu_custom_call.1} parent=0 // pred_region
    _
  $region25: #{tpu_custom_call.1} parent=0 // pred_fallthru
    _
  // Predicated region
  $region26: #{tpu_custom_call.1} parent=0 // pred_check
    _
  $region27: #{tpu_custom_call.1} parent=0 // pred_check_branch
    %25 = sbr.rel (0) target = $region29
  $region28: #{tpu_custom_call.1} parent=0 // pred_region
    _
  $region29: #{tpu_custom_call.1} parent=0 // pred_fallthru
    _
  %v27 = vld [vmem:[%s0] sm:$0x3]
  %v28 = vld [vmem:[%s2] sm:$0xf]
  %v29 = vld [vmem:[%s2 + $0x4] sm:$0xf]
  %v30 = vld [vmem:[%s3] sm:$0xff]
  %v31 = vld [vmem:[%s3 + $0x8] sm:$0xff]
  %33 = vset.pattern.permute.xlu0 0
  %34 = vperm.xlu0 %33, %v30
  %v35 = vpop.permute.xlu0 %34
  %38 = vset.pattern.permute.xlu0 0
  %39 = vperm.xlu0 %38, %v31
  %v40 = vpop.permute.xlu0 %39
  %v44 = vunpack.c.l.b16 %v28
  %v45 = vunpack.c.l.b16 %v29
  %v46 = vpack.c.b16 %v45, %v44
  %vm47 = vcmask 23552
  %v49 = vsel %vm47, %v46, 0
  %vm51 = vcmask 1040384
  %vm52 = vcmask 1041408
  %v53 = vsel %vm51, 4294967295, 65535
  %v54 = vsel %vm52, %v53, 0
  %v56 = vand.u32 %v27, %v54
  %58 = vmatprep.subr.bf16.mxu0 0
  %59 = vmatpush1.bf16.msra.mxu0 0
  %60 = vmatprep.subr.bf16.mxu0 0
  %61 = vmatpush1.bf16.msra.mxu0 0
  %62 = vmatprep.subr.bf16.mxu0 0
  %63 = vmatpush1.bf16.msra.mxu0 0
  %64 = vmatprep.subr.bf16.mxu0 0
  %65 = vmatpush1.bf16.msra.mxu0 0
  %66 = vmatprep.subr.bf16.mxu0 0
  %67 = vmatpush1.bf16.msra.mxu0 0
  %68 = vmatprep.subr.bf16.mxu0 0
  %69 = vmatpush1.bf16.msra.mxu0 0
  %70 = vmatprep.subr.bf16.mxu0 0
  %71 = vmatpush1.bf16.msra.mxu0 0
  %72 = vmatprep.subr.bf16.mxu0 0
  %73 = vmatpush1.bf16.msra.mxu0 %v56
  %74 = vmatprep.subr.bf16.mxu0 0
  %75 = vmatpush2.bf16.msra.mxu0 0
  %76 = vmatprep.subr.bf16.mxu0 0
  %77 = vmatpush2.bf16.msra.mxu0 0
  %78 = vmatprep.subr.bf16.mxu0 0
  %79 = vmatpush2.bf16.msra.mxu0 0
  %80 = vmatprep.subr.bf16.mxu0 0
  %81 = vmatpush2.bf16.msra.mxu0 0
  %82 = vmatprep.subr.bf16.mxu0 0
  %83 = vmatpush2.bf16.msra.mxu0 0
  %84 = vmatprep.subr.bf16.mxu0 0
  %85 = vmatpush2.bf16.msra.mxu0 0
  %86 = vmatprep.subr.bf16.mxu0 0
  %87 = vmatpush2.bf16.msra.mxu0 0
  %88 = vmatprep.subr.bf16.mxu0 0
  %89 = vmatpush2.bf16.msra.mxu0 0
  %90 = vmatprep.mubr.bf16.mxu0 0
  %91 = vmatmul.mubr.bf16.gmra.mxu0 %v49
  %v92 = vpop.f32.mrf.mxu0
  %v93 = vadd.f32 %v35, %v92
  %v94 = vpop.f32.mrf.mxu0
  %v95 = vpop.f32.mrf.mxu0
  %v96 = vadd.f32 %v40, %v95
  %v97 = vpop.f32.mrf.mxu0
  %98 = vdwg.mxu0
  %v99 = vtanh.pop %v93
  %v100 = vtanh.pop %v96
  %v101 = vlaneseq
  %v102 = vshrl.u32 %v101, 7
  %v103 = vadd.s32 %v102, 8
  %v104 = vadd.s32 %v102, 16
  %v105 = vadd.s32 %v102, 24
  %v106 = vadd.s32 %v102, 32
  %v107 = vadd.s32 %v102, 40
  %v108 = vadd.s32 %v102, 48
  %v109 = vadd.s32 %v102, 56
  %v110 = vadd.s32 %v102, 64
  %v111 = vadd.s32 %v102, 72
  %v112 = vadd.s32 %v102, 80
  %v113 = vadd.s32 %v102, 88
  %v114 = vadd.s32 %v102, 96
  %v115 = vadd.s32 %v102, 104
  %v116 = vadd.s32 %v102, 112
  %v117 = vadd.s32 %v102, 120
  %vm118 = vcmp.ge.s32.totalorder %v102, 64
  %vm119 = vcmp.ge.s32.totalorder %v103, 64
  %vm120 = vcmp.ge.s32.totalorder %v104, 64
  %vm121 = vcmp.ge.s32.totalorder %v105, 64
  %vm122 = vcmp.ge.s32.totalorder %v106, 64
  %vm123 = vcmp.ge.s32.totalorder %v107, 64
  %vm124 = vcmp.ge.s32.totalorder %v108, 64
  %vm125 = vcmp.ge.s32.totalorder %v109, 64
  %vm126 = vcmp.ge.s32.totalorder %v110, 64
  %vm127 = vcmp.ge.s32.totalorder %v111, 64
  %vm128 = vcmp.ge.s32.totalorder %v112, 64
  %vm129 = vcmp.ge.s32.totalorder %v113, 64
  %vm130 = vcmp.ge.s32.totalorder %v114, 64
  %vm131 = vcmp.ge.s32.totalorder %v115, 64
  %vm132 = vcmp.ge.s32.totalorder %v116, 64
  %vm133 = vcmp.ge.s32.totalorder %v117, 64
  %vm134 = vcmp.lt.s32.totalorder %v102, 96
  %vm135 = vcmp.lt.s32.totalorder %v103, 96
  %vm136 = vcmp.lt.s32.totalorder %v104, 96
  %vm137 = vcmp.lt.s32.totalorder %v105, 96
  %vm138 = vcmp.lt.s32.totalorder %v106, 96
  %vm139 = vcmp.lt.s32.totalorder %v107, 96
  %vm140 = vcmp.lt.s32.totalorder %v108, 96
  %vm141 = vcmp.lt.s32.totalorder %v109, 96
  %vm142 = vcmp.lt.s32.totalorder %v110, 96
  %vm143 = vcmp.lt.s32.totalorder %v111, 96
  %vm144 = vcmp.lt.s32.totalorder %v112, 96
  %vm145 = vcmp.lt.s32.totalorder %v113, 96
  %vm146 = vcmp.lt.s32.totalorder %v114, 96
  %vm147 = vcmp.lt.s32.totalorder %v115, 96
  %vm148 = vcmp.lt.s32.totalorder %v116, 96
  %vm149 = vcmp.lt.s32.totalorder %v117, 96
  %vm150 = vmand %vm118, %vm134
  %vm151 = vmand %vm119, %vm135
  %vm152 = vmand %vm120, %vm136
  %vm153 = vmand %vm121, %vm137
  %vm154 = vmand %vm122, %vm138
  %vm155 = vmand %vm123, %vm139
  %vm156 = vmand %vm124, %vm140
  %vm157 = vmand %vm125, %vm141
  %vm158 = vmand %vm126, %vm142
  %vm159 = vmand %vm127, %vm143
  %vm160 = vmand %vm128, %vm144
  %vm161 = vmand %vm129, %vm145
  %vm162 = vmand %vm130, %vm146
  %vm163 = vmand %vm131, %vm147
  %vm164 = vmand %vm132, %vm148
  %vm165 = vmand %vm133, %vm149
  %v166 = vsel %vm150, 2.0, 1.0
  %v167 = vsel %vm151, 2.0, 1.0
  %v168 = vsel %vm152, 2.0, 1.0
  %v169 = vsel %vm153, 2.0, 1.0
  %v170 = vsel %vm154, 2.0, 1.0
  %v171 = vsel %vm155, 2.0, 1.0
  %v172 = vsel %vm156, 2.0, 1.0
  %v173 = vsel %vm157, 2.0, 1.0
  %v174 = vsel %vm158, 2.0, 1.0
  %v175 = vsel %vm159, 2.0, 1.0
  %v176 = vsel %vm160, 2.0, 1.0
  %v177 = vsel %vm161, 2.0, 1.0
  %v178 = vsel %vm162, 2.0, 1.0
  %v179 = vsel %vm163, 2.0, 1.0
  %v180 = vsel %vm164, 2.0, 1.0
  %v181 = vsel %vm165, 2.0, 1.0
  %v182 = vld [vmem:[%s4] sm:$0xf]
  %v183 = vld [vmem:[%s4 + $0x4] sm:$0xf]
  %v184 = vld [vmem:[%s4 + $0x8] sm:$0xf]
  %v185 = vld [vmem:[%s4 + $0xc] sm:$0xf]
  %v186 = vld [vmem:[%s4 + $0x10] sm:$0xf]
  %v187 = vld [vmem:[%s4 + $0x14] sm:$0xf]
  %v188 = vld [vmem:[%s4 + $0x18] sm:$0xf]
  %v189 = vld [vmem:[%s4 + $0x1c] sm:$0xf]
  %v190 = vld [vmem:[%s4 + $0x20] sm:$0xf]
  %v191 = vld [vmem:[%s4 + $0x24] sm:$0xf]
  %v192 = vld [vmem:[%s4 + $0x28] sm:$0xf]
  %v193 = vld [vmem:[%s4 + $0x2c] sm:$0xf]
  %v194 = vld [vmem:[%s4 + $0x30] sm:$0xf]
  %v195 = vld [vmem:[%s4 + $0x34] sm:$0xf]
  %v196 = vld [vmem:[%s4 + $0x38] sm:$0xf]
  %v197 = vld [vmem:[%s4 + $0x3c] sm:$0xf]
  %v198 = vunpack.c.l.bf16 %v182
  %v199 = vunpack.c.l.bf16 %v183
  %v200 = vunpack.c.l.bf16 %v184
  %v201 = vunpack.c.l.bf16 %v185
  %v202 = vunpack.c.l.bf16 %v186
  %v203 = vunpack.c.l.bf16 %v187
  %v204 = vunpack.c.l.bf16 %v188
  %v205 = vunpack.c.l.bf16 %v189
  %v206 = vunpack.c.l.bf16 %v190
  %v207 = vunpack.c.l.bf16 %v191
  %v208 = vunpack.c.l.bf16 %v192
  %v209 = vunpack.c.l.bf16 %v193
  %v210 = vunpack.c.l.bf16 %v194
  %v211 = vunpack.c.l.bf16 %v195
  %v212 = vunpack.c.l.bf16 %v196
  %v213 = vunpack.c.l.bf16 %v197
  %v214 = vmul.f32 %v198, %v166
  %v215 = vmul.f32 %v199, %v167
  %v216 = vmul.f32 %v200, %v168
  %v217 = vmul.f32 %v201, %v169
  %v218 = vmul.f32 %v202, %v170
  %v219 = vmul.f32 %v203, %v171
  %v220 = vmul.f32 %v204, %v172
  %v221 = vmul.f32 %v205, %v173
  %v222 = vmul.f32 %v206, %v174
  %v223 = vmul.f32 %v207, %v175
  %v224 = vmul.f32 %v208, %v176
  %v225 = vmul.f32 %v209, %v177
  %v226 = vmul.f32 %v210, %v178
  %v227 = vmul.f32 %v211, %v179
  %v228 = vmul.f32 %v212, %v180
  %v229 = vmul.f32 %v213, %v181
  %v230 = vpack.c.bf16 %v215, %v214
  %v231 = vpack.c.bf16 %v217, %v216
  %v232 = vpack.c.bf16 %v219, %v218
  %v233 = vpack.c.bf16 %v221, %v220
  %v234 = vpack.c.bf16 %v223, %v222
  %v235 = vpack.c.bf16 %v225, %v224
  %v236 = vpack.c.bf16 %v227, %v226
  %v237 = vpack.c.bf16 %v229, %v228
  %v238 = vld [vmem:[%s6] sm:$0xff]
  %v239 = vld [vmem:[%s6 + $0x8] sm:$0xff]
  %v240 = vld [vmem:[%s6 + $0x10] sm:$0xff]
  %v241 = vld [vmem:[%s6 + $0x18] sm:$0xff]
  %v242 = vld [vmem:[%s6 + $0x20] sm:$0xff]
  %v243 = vld [vmem:[%s6 + $0x28] sm:$0xff]
  %v244 = vld [vmem:[%s6 + $0x30] sm:$0xff]
  %v245 = vld [vmem:[%s6 + $0x38] sm:$0xff]
  %v246 = vld [vmem:[%s6 + $0x40] sm:$0xff]
  %v247 = vld [vmem:[%s6 + $0x48] sm:$0xff]
  %v248 = vld [vmem:[%s6 + $0x50] sm:$0xff]
  %v249 = vld [vmem:[%s6 + $0x58] sm:$0xff]
  %v250 = vld [vmem:[%s6 + $0x60] sm:$0xff]
  %v251 = vld [vmem:[%s6 + $0x68] sm:$0xff]
  %v252 = vld [vmem:[%s6 + $0x70] sm:$0xff]
  %v253 = vld [vmem:[%s6 + $0x78] sm:$0xff]
  %v254 = vmul.f32 %v238, %v166
  %v255 = vmul.f32 %v239, %v167
  %v256 = vmul.f32 %v240, %v168
  %v257 = vmul.f32 %v241, %v169
  %v258 = vmul.f32 %v242, %v170
  %v259 = vmul.f32 %v243, %v171
  %v260 = vmul.f32 %v244, %v172
  %v261 = vmul.f32 %v245, %v173
  %v262 = vmul.f32 %v246, %v174
  %v263 = vmul.f32 %v247, %v175
  %v264 = vmul.f32 %v248, %v176
  %v265 = vmul.f32 %v249, %v177
  %v266 = vmul.f32 %v250, %v178
  %v267 = vmul.f32 %v251, %v179
  %v268 = vmul.f32 %v252, %v180
  %v269 = vmul.f32 %v253, %v181
  %v270 = vld [vmem:[%s5] sm:$0xff]
  %v271 = vld [vmem:[%s5 + $0x8] sm:$0xff]
  %v272 = vld [vmem:[%s5 + $0x10] sm:$0xff]
  %v273 = vld [vmem:[%s5 + $0x18] sm:$0xff]
  %v274 = vld [vmem:[%s5 + $0x20] sm:$0xff]
  %v275 = vld [vmem:[%s5 + $0x28] sm:$0xff]
  %v276 = vld [vmem:[%s5 + $0x30] sm:$0xff]
  %v277 = vld [vmem:[%s5 + $0x38] sm:$0xff]
  %v278 = vld [vmem:[%s5 + $0x40] sm:$0xff]
  %v279 = vld [vmem:[%s5 + $0x48] sm:$0xff]
  %v280 = vld [vmem:[%s5 + $0x50] sm:$0xff]
  %v281 = vld [vmem:[%s5 + $0x58] sm:$0xff]
  %v282 = vld [vmem:[%s5 + $0x60] sm:$0xff]
  %v283 = vld [vmem:[%s5 + $0x68] sm:$0xff]
  %v284 = vld [vmem:[%s5 + $0x70] sm:$0xff]
  %v285 = vld [vmem:[%s5 + $0x78] sm:$0xff]
  %v286 = vmul.f32 %v270, %v166
  %v287 = vmul.f32 %v271, %v167
  %v288 = vmul.f32 %v272, %v168
  %v289 = vmul.f32 %v273, %v169
  %v290 = vmul.f32 %v274, %v170
  %v291 = vmul.f32 %v275, %v171
  %v292 = vmul.f32 %v276, %v172
  %v293 = vmul.f32 %v277, %v173
  %v294 = vmul.f32 %v278, %v174
  %v295 = vmul.f32 %v279, %v175
  %v296 = vmul.f32 %v280, %v176
  %v297 = vmul.f32 %v281, %v177
  %v298 = vmul.f32 %v282, %v178
  %v299 = vmul.f32 %v283, %v179
  %v300 = vmul.f32 %v284, %v180
  %v301 = vmul.f32 %v285, %v181
  %v302 = vpack.c.bf16 %v100, %v99
  %304 = vset.pattern.permute.xlu0 0
  %305 = vperm.xlu0 %304, %v254
  %v306 = vpop.permute.xlu0 %305
  %309 = vset.pattern.permute.xlu0 0
  %310 = vperm.xlu0 %309, %v255
  %v311 = vpop.permute.xlu0 %310
  %314 = vset.pattern.permute.xlu0 0
  %315 = vperm.xlu0 %314, %v256
  %v316 = vpop.permute.xlu0 %315
  %319 = vset.pattern.permute.xlu0 0
  %320 = vperm.xlu0 %319, %v257
  %v321 = vpop.permute.xlu0 %320
  %324 = vset.pattern.permute.xlu0 0
  %325 = vperm.xlu0 %324, %v258
  %v326 = vpop.permute.xlu0 %325
  %329 = vset.pattern.permute.xlu0 0
  %330 = vperm.xlu0 %329, %v259
  %v331 = vpop.permute.xlu0 %330
  %334 = vset.pattern.permute.xlu0 0
  %335 = vperm.xlu0 %334, %v260
  %v336 = vpop.permute.xlu0 %335
  %339 = vset.pattern.permute.xlu0 0
  %340 = vperm.xlu0 %339, %v261
  %v341 = vpop.permute.xlu0 %340
  %344 = vset.pattern.permute.xlu0 0
  %345 = vperm.xlu0 %344, %v262
  %v346 = vpop.permute.xlu0 %345
  %349 = vset.pattern.permute.xlu0 0
  %350 = vperm.xlu0 %349, %v263
  %v351 = vpop.permute.xlu0 %350
  %354 = vset.pattern.permute.xlu0 0
  %355 = vperm.xlu0 %354, %v264
  %v356 = vpop.permute.xlu0 %355
  %359 = vset.pattern.permute.xlu0 0
  %360 = vperm.xlu0 %359, %v265
  %v361 = vpop.permute.xlu0 %360
  %364 = vset.pattern.permute.xlu0 0
  %365 = vperm.xlu0 %364, %v266
  %v366 = vpop.permute.xlu0 %365
  %369 = vset.pattern.permute.xlu0 0
  %370 = vperm.xlu0 %369, %v267
  %v371 = vpop.permute.xlu0 %370
  %374 = vset.pattern.permute.xlu0 0
  %375 = vperm.xlu0 %374, %v268
  %v376 = vpop.permute.xlu0 %375
  %379 = vset.pattern.permute.xlu0 0
  %380 = vperm.xlu0 %379, %v269
  %v381 = vpop.permute.xlu0 %380
  %vm383 = vcmask 130048
  %v385 = vsel %vm383, %v230, 0
  %v388 = vsel %vm383, %v231, 0
  %v391 = vsel %vm383, %v232, 0
  %v394 = vsel %vm383, %v233, 0
  %v397 = vsel %vm383, %v234, 0
  %v400 = vsel %vm383, %v235, 0
  %v403 = vsel %vm383, %v236, 0
  %v406 = vsel %vm383, %v237, 0
  %408 = vmatprep.subr.bf16.mxu0 0
  %409 = vmatpush1.bf16.msra.mxu0 0
  %410 = vmatprep.subr.bf16.mxu0 0
  %411 = vmatpush1.bf16.msra.mxu0 0
  %412 = vmatprep.subr.bf16.mxu0 0
  %413 = vmatpush1.bf16.msra.mxu0 0
  %414 = vmatprep.subr.bf16.mxu0 0
  %415 = vmatpush1.bf16.msra.mxu0 0
  %416 = vmatprep.subr.bf16.mxu0 0
  %417 = vmatpush1.bf16.msra.mxu0 0
  %418 = vmatprep.subr.bf16.mxu0 0
  %419 = vmatpush1.bf16.msra.mxu0 0
  %420 = vmatprep.subr.bf16.mxu0 0
  %421 = vmatpush1.bf16.msra.mxu0 0
  %422 = vmatprep.subr.bf16.mxu0 0
  %423 = vmatpush1.bf16.msra.mxu0 %v302
  %424 = vmatprep.subr.bf16.mxu0 0
  %425 = vmatpush2.bf16.msra.mxu0 0
  %426 = vmatprep.subr.bf16.mxu0 0
  %427 = vmatpush2.bf16.msra.mxu0 0
  %428 = vmatprep.subr.bf16.mxu0 0
  %429 = vmatpush2.bf16.msra.mxu0 0
  %430 = vmatprep.subr.bf16.mxu0 0
  %431 = vmatpush2.bf16.msra.mxu0 0
  %432 = vmatprep.subr.bf16.mxu0 0
  %433 = vmatpush2.bf16.msra.mxu0 0
  %434 = vmatprep.subr.bf16.mxu0 0
  %435 = vmatpush2.bf16.msra.mxu0 0
  %436 = vmatprep.subr.bf16.mxu0 0
  %437 = vmatpush2.bf16.msra.mxu0 0
  %438 = vmatprep.subr.bf16.mxu0 0
  %439 = vmatpush2.bf16.msra.mxu0 0
  %440 = vmatprep.mubr.bf16.mxu0 0
  %441 = vmatmul.mubr.bf16.gmra.mxu0 %v385
  %v442 = vpop.f32.mrf.mxu0
  %v443 = vadd.f32 %v306, %v442
  %v444 = vpop.f32.mrf.mxu0
  %v445 = vpop.f32.mrf.mxu0
  %v446 = vadd.f32 %v311, %v445
  %v447 = vpop.f32.mrf.mxu0
  %448 = vmatprep.mubr.bf16.mxu0 0
  %449 = vmatmul.mubr.bf16.gmra.mxu0 %v388
  %v450 = vpop.f32.mrf.mxu0
  %v451 = vadd.f32 %v316, %v450
  %v452 = vpop.f32.mrf.mxu0
  %v453 = vpop.f32.mrf.mxu0
  %v454 = vadd.f32 %v321, %v453
  %v455 = vpop.f32.mrf.mxu0
  %456 = vmatprep.mubr.bf16.mxu0 0
  %457 = vmatmul.mubr.bf16.gmra.mxu0 %v391
  %v458 = vpop.f32.mrf.mxu0
  %v459 = vadd.f32 %v326, %v458
  %v460 = vpop.f32.mrf.mxu0
  %v461 = vpop.f32.mrf.mxu0
  %v462 = vadd.f32 %v331, %v461
  %v463 = vpop.f32.mrf.mxu0
  %464 = vmatprep.mubr.bf16.mxu0 0
  %465 = vmatmul.mubr.bf16.gmra.mxu0 %v394
  %v466 = vpop.f32.mrf.mxu0
  %v467 = vadd.f32 %v336, %v466
  %v468 = vpop.f32.mrf.mxu0
  %v469 = vpop.f32.mrf.mxu0
  %v470 = vadd.f32 %v341, %v469
  %v471 = vpop.f32.mrf.mxu0
  %472 = vmatprep.mubr.bf16.mxu0 0
  %473 = vmatmul.mubr.bf16.gmra.mxu0 %v397
  %v474 = vpop.f32.mrf.mxu0
  %v475 = vadd.f32 %v346, %v474
  %v476 = vpop.f32.mrf.mxu0
  %v477 = vpop.f32.mrf.mxu0
  %v478 = vadd.f32 %v351, %v477
  %v479 = vpop.f32.mrf.mxu0
  %480 = vmatprep.mubr.bf16.mxu0 0
  %481 = vmatmul.mubr.bf16.gmra.mxu0 %v400
  %v482 = vpop.f32.mrf.mxu0
  %v483 = vadd.f32 %v356, %v482
  %v484 = vpop.f32.mrf.mxu0
  %v485 = vpop.f32.mrf.mxu0
  %v486 = vadd.f32 %v361, %v485
  %v487 = vpop.f32.mrf.mxu0
  %488 = vmatprep.mubr.bf16.mxu0 0
  %489 = vmatmul.mubr.bf16.gmra.mxu0 %v403
  %v490 = vpop.f32.mrf.mxu0
  %v491 = vadd.f32 %v366, %v490
  %v492 = vpop.f32.mrf.mxu0
  %v493 = vpop.f32.mrf.mxu0
  %v494 = vadd.f32 %v371, %v493
  %v495 = vpop.f32.mrf.mxu0
  %496 = vmatprep.mubr.bf16.mxu0 0
  %497 = vmatmul.mubr.bf16.gmra.mxu0 %v406
  %v498 = vpop.f32.mrf.mxu0
  %v499 = vadd.f32 %v376, %v498
  %v500 = vpop.f32.mrf.mxu0
  %v501 = vpop.f32.mrf.mxu0
  %v502 = vadd.f32 %v381, %v501
  %v503 = vpop.f32.mrf.mxu0
  %504 = vdwg.mxu0
  %v505 = vld [vmem:[%s1] sm:$0x1]
  %v506 = vlaneseq
  %v507 = vshrl.u32 %v506, 7
  %v508 = vsub.s32 0, %v507
  %v509 = vrot.slane %v505, %v508
  %vm510 = vcmask 261120
  %v512 = vsel %vm510, %v286, 0
  %v515 = vsel %vm510, %v287, 0
  %v518 = vsel %vm510, %v288, 0
  %v521 = vsel %vm510, %v289, 0
  %v524 = vsel %vm510, %v290, 0
  %v527 = vsel %vm510, %v291, 0
  %v530 = vsel %vm510, %v292, 0
  %v533 = vsel %vm510, %v293, 0
  %v536 = vsel %vm510, %v294, 0
  %v539 = vsel %vm510, %v295, 0
  %v542 = vsel %vm510, %v296, 0
  %v545 = vsel %vm510, %v297, 0
  %v548 = vsel %vm510, %v298, 0
  %v551 = vsel %vm510, %v299, 0
  %v554 = vsel %vm510, %v300, 0
  %v557 = vsel %vm510, %v301, 0
  %559 = vmatprep.subr.mxu0 0.0
  %560 = vmatpush1.msra.mxu0 0.0
  %561 = vmatprep.subr.mxu0 0.0
  %562 = vmatpush1.msra.mxu0 0.0
  %563 = vmatprep.subr.mxu0 0.0
  %564 = vmatpush1.msra.mxu0 0.0
  %565 = vmatprep.subr.mxu0 0.0
  %566 = vmatpush1.msra.mxu0 0.0
  %567 = vmatprep.subr.mxu0 0.0
  %568 = vmatpush1.msra.mxu0 0.0
  %569 = vmatprep.subr.mxu0 0.0
  %570 = vmatpush1.msra.mxu0 0.0
  %571 = vmatprep.subr.mxu0 0.0
  %572 = vmatpush1.msra.mxu0 0.0
  %573 = vmatprep.subr.mxu0 0.0
  %574 = vmatpush1.msra.mxu0 0.0
  %575 = vmatprep.subr.mxu0 0.0
  %576 = vmatpush1.msra.mxu0 0.0
  %577 = vmatprep.subr.mxu0 0.0
  %578 = vmatpush1.msra.mxu0 0.0
  %579 = vmatprep.subr.mxu0 0.0
  %580 = vmatpush1.msra.mxu0 0.0
  %581 = vmatprep.subr.mxu0 0.0
  %582 = vmatpush1.msra.mxu0 0.0
  %583 = vmatprep.subr.mxu0 0.0
  %584 = vmatpush1.msra.mxu0 0.0
  %585 = vmatprep.subr.mxu0 0.0
  %586 = vmatpush1.msra.mxu0 0.0
  %587 = vmatprep.subr.mxu0 0.0
  %588 = vmatpush1.msra.mxu0 0.0
  %589 = vmatprep.subr.mxu0 0.0
  %590 = vmatpush1.msra.mxu0 0.0
  %591 = vmatprep.subr.mxu0 0.0
  %592 = vmatpush2.msra.mxu0 0.0
  %593 = vmatprep.subr.mxu0 0.0
  %594 = vmatpush2.msra.mxu0 0.0
  %595 = vmatprep.subr.mxu0 0.0
  %596 = vmatpush2.msra.mxu0 0.0
  %597 = vmatprep.subr.mxu0 0.0
  %598 = vmatpush2.msra.mxu0 0.0
  %599 = vmatprep.subr.mxu0 0.0
  %600 = vmatpush2.msra.mxu0 0.0
  %601 = vmatprep.subr.mxu0 0.0
  %602 = vmatpush2.msra.mxu0 0.0
  %603 = vmatprep.subr.mxu0 0.0
  %604 = vmatpush2.msra.mxu0 0.0
  %605 = vmatprep.subr.mxu0 0.0
  %606 = vmatpush2.msra.mxu0 0.0
  %607 = vmatprep.subr.mxu0 0.0
  %608 = vmatpush2.msra.mxu0 0.0
  %609 = vmatprep.subr.mxu0 0.0
  %610 = vmatpush2.msra.mxu0 0.0
  %611 = vmatprep.subr.mxu0 0.0
  %612 = vmatpush2.msra.mxu0 0.0
  %613 = vmatprep.subr.mxu0 0.0
  %614 = vmatpush2.msra.mxu0 0.0
  %615 = vmatprep.subr.mxu0 0.0
  %616 = vmatpush2.msra.mxu0 0.0
  %617 = vmatprep.subr.mxu0 0.0
  %618 = vmatpush2.msra.mxu0 0.0
  %619 = vmatprep.subr.mxu0 0.0
  %620 = vmatpush2.msra.mxu0 0.0
  %621 = vmatprep.subr.mxu0 0.0
  %622 = vmatpush2.msra.mxu0 0.0
  %623 = vmatprep.mubr.f32.mxu0 0.0
  %624 = vmatmul.mubr.f32.gmra.mxu0 %v512
  %v625 = vpop.f32.mrf.mxu0
  %v626 = vadd.f32 0.0, %v625
  %v627 = vpop.f32.mrf.mxu0
  %628 = vmatprep.mubr.f32.mxu0 0.0
  %629 = vmatmul.mubr.f32.gmra.mxu0 %v515
  %v630 = vpop.f32.mrf.mxu0
  %v631 = vadd.f32 0.0, %v630
  %v632 = vpop.f32.mrf.mxu0
  %633 = vmatprep.mubr.f32.mxu0 0.0
  %634 = vmatmul.mubr.f32.gmra.mxu0 %v518
  %v635 = vpop.f32.mrf.mxu0
  %v636 = vadd.f32 0.0, %v635
  %v637 = vpop.f32.mrf.mxu0
  %638 = vmatprep.mubr.f32.mxu0 0.0
  %639 = vmatmul.mubr.f32.gmra.mxu0 %v521
  %v640 = vpop.f32.mrf.mxu0
  %v641 = vadd.f32 0.0, %v640
  %v642 = vpop.f32.mrf.mxu0
  %643 = vmatprep.mubr.f32.mxu0 0.0
  %644 = vmatmul.mubr.f32.gmra.mxu0 %v524
  %v645 = vpop.f32.mrf.mxu0
  %v646 = vadd.f32 0.0, %v645
  %v647 = vpop.f32.mrf.mxu0
  %648 = vmatprep.mubr.f32.mxu0 0.0
  %649 = vmatmul.mubr.f32.gmra.mxu0 %v527
  %v650 = vpop.f32.mrf.mxu0
  %v651 = vadd.f32 0.0, %v650
  %v652 = vpop.f32.mrf.mxu0
  %653 = vmatprep.mubr.f32.mxu0 0.0
  %654 = vmatmul.mubr.f32.gmra.mxu0 %v530
  %v655 = vpop.f32.mrf.mxu0
  %v656 = vadd.f32 0.0, %v655
  %v657 = vpop.f32.mrf.mxu0
  %658 = vmatprep.mubr.f32.mxu0 0.0
  %659 = vmatmul.mubr.f32.gmra.mxu0 %v533
  %v660 = vpop.f32.mrf.mxu0
  %v661 = vadd.f32 0.0, %v660
  %v662 = vpop.f32.mrf.mxu0
  %663 = vmatprep.mubr.f32.mxu0 0.0
  %664 = vmatmul.mubr.f32.gmra.mxu0 %v536
  %v665 = vpop.f32.mrf.mxu0
  %v666 = vadd.f32 0.0, %v665
  %v667 = vpop.f32.mrf.mxu0
  %668 = vmatprep.mubr.f32.mxu0 0.0
  %669 = vmatmul.mubr.f32.gmra.mxu0 %v539
  %v670 = vpop.f32.mrf.mxu0
  %v671 = vadd.f32 0.0, %v670
  %v672 = vpop.f32.mrf.mxu0
  %673 = vmatprep.mubr.f32.mxu0 0.0
  %674 = vmatmul.mubr.f32.gmra.mxu0 %v542
  %v675 = vpop.f32.mrf.mxu0
  %v676 = vadd.f32 0.0, %v675
  %v677 = vpop.f32.mrf.mxu0
  %678 = vmatprep.mubr.f32.mxu0 0.0
  %679 = vmatmul.mubr.f32.gmra.mxu0 %v545
  %v680 = vpop.f32.mrf.mxu0
  %v681 = vadd.f32 0.0, %v680
  %v682 = vpop.f32.mrf.mxu0
  %683 = vmatprep.mubr.f32.mxu0 0.0
  %684 = vmatmul.mubr.f32.gmra.mxu0 %v548
  %v685 = vpop.f32.mrf.mxu0
  %v686 = vadd.f32 0.0, %v685
  %v687 = vpop.f32.mrf.mxu0
  %688 = vmatprep.mubr.f32.mxu0 0.0
  %689 = vmatmul.mubr.f32.gmra.mxu0 %v551
  %v690 = vpop.f32.mrf.mxu0
  %v691 = vadd.f32 0.0, %v690
  %v692 = vpop.f32.mrf.mxu0
  %693 = vmatprep.mubr.f32.mxu0 0.0
  %694 = vmatmul.mubr.f32.gmra.mxu0 %v554
  %v695 = vpop.f32.mrf.mxu0
  %v696 = vadd.f32 0.0, %v695
  %v697 = vpop.f32.mrf.mxu0
  %698 = vmatprep.mubr.f32.mxu0 0.0
  %699 = vmatmul.mubr.f32.gmra.mxu0 %v557
  %v700 = vpop.f32.mrf.mxu0
  %v701 = vadd.f32 0.0, %v700
  %v702 = vpop.f32.mrf.mxu0
  %703 = vdwg.mxu0
  %v704 = vadd.f32 %v443, %v626
  %v705 = vadd.f32 %v446, %v631
  %v706 = vadd.f32 %v451, %v636
  %v707 = vadd.f32 %v454, %v641
  %v708 = vadd.f32 %v459, %v646
  %v709 = vadd.f32 %v462, %v651
  %v710 = vadd.f32 %v467, %v656
  %v711 = vadd.f32 %v470, %v661
  %v712 = vadd.f32 %v475, %v666
  %v713 = vadd.f32 %v478, %v671
  %v714 = vadd.f32 %v483, %v676
  %v715 = vadd.f32 %v486, %v681
  %v716 = vadd.f32 %v491, %v686
  %v717 = vadd.f32 %v494, %v691
  %v718 = vadd.f32 %v499, %v696
  %v719 = vadd.f32 %v502, %v701
  %v720 = vxor.u32 %v704, 2147483648
  %v721 = vxor.u32 %v705, 2147483648
  %v722 = vxor.u32 %v706, 2147483648
  %v723 = vxor.u32 %v707, 2147483648
  %v724 = vxor.u32 %v708, 2147483648
  %v725 = vxor.u32 %v709, 2147483648
  %v726 = vxor.u32 %v710, 2147483648
  %v727 = vxor.u32 %v711, 2147483648
  %v728 = vxor.u32 %v712, 2147483648
  %v729 = vxor.u32 %v713, 2147483648
  %v730 = vxor.u32 %v714, 2147483648
  %v731 = vxor.u32 %v715, 2147483648
  %v732 = vxor.u32 %v716, 2147483648
  %v733 = vxor.u32 %v717, 2147483648
  %v734 = vxor.u32 %v718, 2147483648
  %v735 = vxor.u32 %v719, 2147483648
  %v736 = vmul.f32 %v720, 1.442695
  %v737 = vpow.pop %v736
  %v738 = vmul.f32 %v721, 1.442695
  %v739 = vpow.pop %v738
  %v740 = vmul.f32 %v722, 1.442695
  %v741 = vpow.pop %v740
  %v742 = vmul.f32 %v723, 1.442695
  %v743 = vpow.pop %v742
  %v744 = vmul.f32 %v724, 1.442695
  %v745 = vpow.pop %v744
  %v746 = vmul.f32 %v725, 1.442695
  %v747 = vpow.pop %v746
  %v748 = vmul.f32 %v726, 1.442695
  %v749 = vpow.pop %v748
  %v750 = vmul.f32 %v727, 1.442695
  %v751 = vpow.pop %v750
  %v752 = vmul.f32 %v728, 1.442695
  %v753 = vpow.pop %v752
  %v754 = vmul.f32 %v729, 1.442695
  %v755 = vpow.pop %v754
  %v756 = vmul.f32 %v730, 1.442695
  %v757 = vpow.pop %v756
  %v758 = vmul.f32 %v731, 1.442695
  %v759 = vpow.pop %v758
  %v760 = vmul.f32 %v732, 1.442695
  %v761 = vpow.pop %v760
  %v762 = vmul.f32 %v733, 1.442695
  %v763 = vpow.pop %v762
  %v764 = vmul.f32 %v734, 1.442695
  %v765 = vpow.pop %v764
  %v766 = vmul.f32 %v735, 1.442695
  %v767 = vpow.pop %v766
  %v768 = vadd.f32 %v737, 1.0
  %v769 = vadd.f32 %v739, 1.0
  %v770 = vadd.f32 %v741, 1.0
  %v771 = vadd.f32 %v743, 1.0
  %v772 = vadd.f32 %v745, 1.0
  %v773 = vadd.f32 %v747, 1.0
  %v774 = vadd.f32 %v749, 1.0
  %v775 = vadd.f32 %v751, 1.0
  %v776 = vadd.f32 %v753, 1.0
  %v777 = vadd.f32 %v755, 1.0
  %v778 = vadd.f32 %v757, 1.0
  %v779 = vadd.f32 %v759, 1.0
  %v780 = vadd.f32 %v761, 1.0
  %v781 = vadd.f32 %v763, 1.0
  %v782 = vadd.f32 %v765, 1.0
  %v783 = vadd.f32 %v767, 1.0
  %v784 = vrcp.pop %v768
  %v785 = vmul.f32 1.0, %v784
  %v786 = vrcp.pop %v769
  %v787 = vmul.f32 1.0, %v786
  %v788 = vrcp.pop %v770
  %v789 = vmul.f32 1.0, %v788
  %v790 = vrcp.pop %v771
  %v791 = vmul.f32 1.0, %v790
  %v792 = vrcp.pop %v772
  %v793 = vmul.f32 1.0, %v792
  %v794 = vrcp.pop %v773
  %v795 = vmul.f32 1.0, %v794
  %v796 = vrcp.pop %v774
  %v797 = vmul.f32 1.0, %v796
  %v798 = vrcp.pop %v775
  %v799 = vmul.f32 1.0, %v798
  %v800 = vrcp.pop %v776
  %v801 = vmul.f32 1.0, %v800
  %v802 = vrcp.pop %v777
  %v803 = vmul.f32 1.0, %v802
  %v804 = vrcp.pop %v778
  %v805 = vmul.f32 1.0, %v804
  %v806 = vrcp.pop %v779
  %v807 = vmul.f32 1.0, %v806
  %v808 = vrcp.pop %v780
  %v809 = vmul.f32 1.0, %v808
  %v810 = vrcp.pop %v781
  %v811 = vmul.f32 1.0, %v810
  %v812 = vrcp.pop %v782
  %v813 = vmul.f32 1.0, %v812
  %v814 = vrcp.pop %v783
  %v815 = vmul.f32 1.0, %v814
  %v816 = vmul.f32 %v801, 2.0
  %v817 = vmul.f32 %v803, 2.0
  %v818 = vmul.f32 %v805, 2.0
  %v819 = vmul.f32 %v807, 2.0
  %v820 = vsub.f32 %v816, 1.0
  %v821 = vsub.f32 %v817, 1.0
  %v822 = vsub.f32 %v818, 1.0
  %v823 = vsub.f32 %v819, 1.0
  %v824 = vmul.f32 %v793, 0.0
  %v825 = vmul.f32 %v795, 0.0
  %v826 = vmul.f32 %v797, 0.0
  %v827 = vmul.f32 %v799, 0.0
  %v828 = vmul.f32 %v785, %v820
  %v829 = vmul.f32 %v787, %v821
  %v830 = vmul.f32 %v789, %v822
  %v831 = vmul.f32 %v791, %v823
  %v832 = vadd.f32 %v824, %v828
  %v833 = vadd.f32 %v825, %v829
  %v834 = vadd.f32 %v826, %v830
  %v835 = vadd.f32 %v827, %v831
  %v836 = vtanh.pop %v832
  %v837 = vtanh.pop %v833
  %v838 = vtanh.pop %v834
  %v839 = vtanh.pop %v835
  %v840 = vmul.f32 %v809, %v836
  %v841 = vmul.f32 %v811, %v837
  %v842 = vmul.f32 %v813, %v838
  %v843 = vmul.f32 %v815, %v839
  %vm844 = vcmp.gt.s32.totalorder %v509, 0
  %v845 = vsel %vm844, %v832, 0.0
  %v846 = vsel %vm844, %v833, 0.0
  %v847 = vsel %vm844, %v834, 0.0
  %v848 = vsel %vm844, %v835, 0.0
  %v849 = vsel %vm844, %v840, 0.0
  %v850 = vsel %vm844, %v841, 0.0
  %v851 = vsel %vm844, %v842, 0.0
  %v852 = vsel %vm844, %v843, 0.0
  %853 = vmatprep.subr.mxu0 0.0
  %854 = vmatpush1.msra.mxu0 0.0
  %855 = vmatprep.subr.mxu0 0.0
  %856 = vmatpush1.msra.mxu0 0.0
  %857 = vmatprep.subr.mxu0 0.0
  %858 = vmatpush1.msra.mxu0 0.0
  %859 = vmatprep.subr.mxu0 0.0
  %860 = vmatpush1.msra.mxu0 0.0
  %861 = vmatprep.subr.mxu0 0.0
  %862 = vmatpush1.msra.mxu0 0.0
  %863 = vmatprep.subr.mxu0 0.0
  %864 = vmatpush1.msra.mxu0 0.0
  %865 = vmatprep.subr.mxu0 0.0
  %866 = vmatpush1.msra.mxu0 0.0
  %867 = vmatprep.subr.mxu0 0.0
  %868 = vmatpush1.msra.mxu0 0.0
  %869 = vmatprep.subr.mxu0 0.0
  %870 = vmatpush1.msra.mxu0 0.0
  %871 = vmatprep.subr.mxu0 0.0
  %872 = vmatpush1.msra.mxu0 0.0
  %873 = vmatprep.subr.mxu0 0.0
  %874 = vmatpush1.msra.mxu0 0.0
  %875 = vmatprep.subr.mxu0 0.0
  %876 = vmatpush1.msra.mxu0 0.0
  %877 = vmatprep.subr.mxu0 0.0
  %878 = vmatpush1.msra.mxu0 %v852
  %879 = vmatprep.subr.mxu0 0.0
  %880 = vmatpush1.msra.mxu0 %v851
  %881 = vmatprep.subr.mxu0 0.0
  %882 = vmatpush1.msra.mxu0 %v850
  %883 = vmatprep.subr.mxu0 0.0
  %884 = vmatpush1.msra.mxu0 %v849
  %885 = vmatprep.subr.mxu0 0.0
  %886 = vmatpush2.msra.mxu0 0.0
  %887 = vmatprep.subr.mxu0 0.0
  %888 = vmatpush2.msra.mxu0 0.0
  %889 = vmatprep.subr.mxu0 0.0
  %890 = vmatpush2.msra.mxu0 0.0
  %891 = vmatprep.subr.mxu0 0.0
  %892 = vmatpush2.msra.mxu0 0.0
  %893 = vmatprep.subr.mxu0 0.0
  %894 = vmatpush2.msra.mxu0 0.0
  %895 = vmatprep.subr.mxu0 0.0
  %896 = vmatpush2.msra.mxu0 0.0
  %897 = vmatprep.subr.mxu0 0.0
  %898 = vmatpush2.msra.mxu0 0.0
  %899 = vmatprep.subr.mxu0 0.0
  %900 = vmatpush2.msra.mxu0 0.0
  %901 = vmatprep.subr.mxu0 0.0
  %902 = vmatpush2.msra.mxu0 0.0
  %903 = vmatprep.subr.mxu0 0.0
  %904 = vmatpush2.msra.mxu0 0.0
  %905 = vmatprep.subr.mxu0 0.0
  %906 = vmatpush2.msra.mxu0 0.0
  %907 = vmatprep.subr.mxu0 0.0
  %908 = vmatpush2.msra.mxu0 0.0
  %909 = vmatprep.subr.mxu0 0.0
  %910 = vmatpush2.msra.mxu0 0.0
  %911 = vmatprep.subr.mxu0 0.0
  %912 = vmatpush2.msra.mxu0 0.0
  %913 = vmatprep.subr.mxu0 0.0
  %914 = vmatpush2.msra.mxu0 0.0
  %915 = vmatprep.subr.mxu0 0.0
  %916 = vmatpush2.msra.mxu0 0.0
  %917 = vmatprep.mubr.f32.mxu0 0.0
  %918 = vmatmul.mubr.f32.gmra.mxu0 %v512
  %v919 = vpop.f32.mrf.mxu0
  %v920 = vadd.f32 0.0, %v919
  %v921 = vpop.f32.mrf.mxu0
  %922 = vmatprep.mubr.f32.mxu0 0.0
  %923 = vmatmul.mubr.f32.gmra.mxu0 %v515
  %v924 = vpop.f32.mrf.mxu0
  %v925 = vadd.f32 0.0, %v924
  %v926 = vpop.f32.mrf.mxu0
  %927 = vmatprep.mubr.f32.mxu0 0.0
  %928 = vmatmul.mubr.f32.gmra.mxu0 %v518
  %v929 = vpop.f32.mrf.mxu0
  %v930 = vadd.f32 0.0, %v929
  %v931 = vpop.f32.mrf.mxu0
  %932 = vmatprep.mubr.f32.mxu0 0.0
  %933 = vmatmul.mubr.f32.gmra.mxu0 %v521
  %v934 = vpop.f32.mrf.mxu0
  %v935 = vadd.f32 0.0, %v934
  %v936 = vpop.f32.mrf.mxu0
  %937 = vmatprep.mubr.f32.mxu0 0.0
  %938 = vmatmul.mubr.f32.gmra.mxu0 %v524
  %v939 = vpop.f32.mrf.mxu0
  %v940 = vadd.f32 0.0, %v939
  %v941 = vpop.f32.mrf.mxu0
  %942 = vmatprep.mubr.f32.mxu0 0.0
  %943 = vmatmul.mubr.f32.gmra.mxu0 %v527
  %v944 = vpop.f32.mrf.mxu0
  %v945 = vadd.f32 0.0, %v944
  %v946 = vpop.f32.mrf.mxu0
  %947 = vmatprep.mubr.f32.mxu0 0.0
  %948 = vmatmul.mubr.f32.gmra.mxu0 %v530
  %v949 = vpop.f32.mrf.mxu0
  %v950 = vadd.f32 0.0, %v949
  %v951 = vpop.f32.mrf.mxu0
  %952 = vmatprep.mubr.f32.mxu0 0.0
  %953 = vmatmul.mubr.f32.gmra.mxu0 %v533
  %v954 = vpop.f32.mrf.mxu0
  %v955 = vadd.f32 0.0, %v954
  %v956 = vpop.f32.mrf.mxu0
  %957 = vmatprep.mubr.f32.mxu0 0.0
  %958 = vmatmul.mubr.f32.gmra.mxu0 %v536
  %v959 = vpop.f32.mrf.mxu0
  %v960 = vadd.f32 0.0, %v959
  %v961 = vpop.f32.mrf.mxu0
  %962 = vmatprep.mubr.f32.mxu0 0.0
  %963 = vmatmul.mubr.f32.gmra.mxu0 %v539
  %v964 = vpop.f32.mrf.mxu0
  %v965 = vadd.f32 0.0, %v964
  %v966 = vpop.f32.mrf.mxu0
  %967 = vmatprep.mubr.f32.mxu0 0.0
  %968 = vmatmul.mubr.f32.gmra.mxu0 %v542
  %v969 = vpop.f32.mrf.mxu0
  %v970 = vadd.f32 0.0, %v969
  %v971 = vpop.f32.mrf.mxu0
  %972 = vmatprep.mubr.f32.mxu0 0.0
  %973 = vmatmul.mubr.f32.gmra.mxu0 %v545
  %v974 = vpop.f32.mrf.mxu0
  %v975 = vadd.f32 0.0, %v974
  %v976 = vpop.f32.mrf.mxu0
  %977 = vmatprep.mubr.f32.mxu0 0.0
  %978 = vmatmul.mubr.f32.gmra.mxu0 %v548
  %v979 = vpop.f32.mrf.mxu0
  %v980 = vadd.f32 0.0, %v979
  %v981 = vpop.f32.mrf.mxu0
  %982 = vmatprep.mubr.f32.mxu0 0.0
  %983 = vmatmul.mubr.f32.gmra.mxu0 %v551
  %v984 = vpop.f32.mrf.mxu0
  %v985 = vadd.f32 0.0, %v984
  %v986 = vpop.f32.mrf.mxu0
  %987 = vmatprep.mubr.f32.mxu0 0.0
  %988 = vmatmul.mubr.f32.gmra.mxu0 %v554
  %v989 = vpop.f32.mrf.mxu0
  %v990 = vadd.f32 0.0, %v989
  %v991 = vpop.f32.mrf.mxu0
  %992 = vmatprep.mubr.f32.mxu0 0.0
  %993 = vmatmul.mubr.f32.gmra.mxu0 %v557
  %v994 = vpop.f32.mrf.mxu0
  %v995 = vadd.f32 0.0, %v994
  %v996 = vpop.f32.mrf.mxu0
  %997 = vdwg.mxu0
  %1014 = vrot.lane.b32.xlu0 %v920, 8
  %v1015 = vpop.permute.xlu0 %1014
  %1016 = vrot.lane.b32.xlu0 %v925, 8
  %v1017 = vpop.permute.xlu0 %1016
  %1018 = vrot.lane.b32.xlu0 %v930, 8
  %v1019 = vpop.permute.xlu0 %1018
  %1020 = vrot.lane.b32.xlu0 %v935, 8
  %v1021 = vpop.permute.xlu0 %1020
  %1022 = vrot.lane.b32.xlu0 %v940, 8
  %v1023 = vpop.permute.xlu0 %1022
  %1024 = vrot.lane.b32.xlu0 %v945, 8
  %v1025 = vpop.permute.xlu0 %1024
  %1026 = vrot.lane.b32.xlu0 %v950, 8
  %v1027 = vpop.permute.xlu0 %1026
  %1028 = vrot.lane.b32.xlu0 %v955, 8
  %v1029 = vpop.permute.xlu0 %1028
  %1030 = vrot.lane.b32.xlu0 %v960, 8
  %v1031 = vpop.permute.xlu0 %1030
  %1032 = vrot.lane.b32.xlu0 %v965, 8
  %v1033 = vpop.permute.xlu0 %1032
  %1034 = vrot.lane.b32.xlu0 %v970, 8
  %v1035 = vpop.permute.xlu0 %1034
  %1036 = vrot.lane.b32.xlu0 %v975, 8
  %v1037 = vpop.permute.xlu0 %1036
  %1038 = vrot.lane.b32.xlu0 %v980, 8
  %v1039 = vpop.permute.xlu0 %1038
  %1040 = vrot.lane.b32.xlu0 %v985, 8
  %v1041 = vpop.permute.xlu0 %1040
  %1042 = vrot.lane.b32.xlu0 %v990, 8
  %v1043 = vpop.permute.xlu0 %1042
  %1044 = vrot.lane.b32.xlu0 %v995, 8
  %v1045 = vpop.permute.xlu0 %1044
  %v1062 = vadd.f32 %v443, %v1015
  %v1063 = vadd.f32 %v446, %v1017
  %v1064 = vadd.f32 %v451, %v1019
  %v1065 = vadd.f32 %v454, %v1021
  %v1066 = vadd.f32 %v459, %v1023
  %v1067 = vadd.f32 %v462, %v1025
  %v1068 = vadd.f32 %v467, %v1027
  %v1069 = vadd.f32 %v470, %v1029
  %v1070 = vadd.f32 %v475, %v1031
  %v1071 = vadd.f32 %v478, %v1033
  %v1072 = vadd.f32 %v483, %v1035
  %v1073 = vadd.f32 %v486, %v1037
  %v1074 = vadd.f32 %v491, %v1039
  %v1075 = vadd.f32 %v494, %v1041
  %v1076 = vadd.f32 %v499, %v1043
  %v1077 = vadd.f32 %v502, %v1045
  %v1078 = vxor.u32 %v1062, 2147483648
  %v1079 = vxor.u32 %v1063, 2147483648
  %v1080 = vxor.u32 %v1064, 2147483648
  %v1081 = vxor.u32 %v1065, 2147483648
  %v1082 = vxor.u32 %v1066, 2147483648
  %v1083 = vxor.u32 %v1067, 2147483648
  %v1084 = vxor.u32 %v1068, 2147483648
  %v1085 = vxor.u32 %v1069, 2147483648
  %v1086 = vxor.u32 %v1070, 2147483648
  %v1087 = vxor.u32 %v1071, 2147483648
  %v1088 = vxor.u32 %v1072, 2147483648
  %v1089 = vxor.u32 %v1073, 2147483648
  %v1090 = vxor.u32 %v1074, 2147483648
  %v1091 = vxor.u32 %v1075, 2147483648
  %v1092 = vxor.u32 %v1076, 2147483648
  %v1093 = vxor.u32 %v1077, 2147483648
  %v1094 = vmul.f32 %v1078, 1.442695
  %v1095 = vpow.pop %v1094
  %v1096 = vmul.f32 %v1079, 1.442695
  %v1097 = vpow.pop %v1096
  %v1098 = vmul.f32 %v1080, 1.442695
  %v1099 = vpow.pop %v1098
  %v1100 = vmul.f32 %v1081, 1.442695
  %v1101 = vpow.pop %v1100
  %v1102 = vmul.f32 %v1082, 1.442695
  %v1103 = vpow.pop %v1102
  %v1104 = vmul.f32 %v1083, 1.442695
  %v1105 = vpow.pop %v1104
  %v1106 = vmul.f32 %v1084, 1.442695
  %v1107 = vpow.pop %v1106
  %v1108 = vmul.f32 %v1085, 1.442695
  %v1109 = vpow.pop %v1108
  %v1110 = vmul.f32 %v1086, 1.442695
  %v1111 = vpow.pop %v1110
  %v1112 = vmul.f32 %v1087, 1.442695
  %v1113 = vpow.pop %v1112
  %v1114 = vmul.f32 %v1088, 1.442695
  %v1115 = vpow.pop %v1114
  %v1116 = vmul.f32 %v1089, 1.442695
  %v1117 = vpow.pop %v1116
  %v1118 = vmul.f32 %v1090, 1.442695
  %v1119 = vpow.pop %v1118
  %v1120 = vmul.f32 %v1091, 1.442695
  %v1121 = vpow.pop %v1120
  %v1122 = vmul.f32 %v1092, 1.442695
  %v1123 = vpow.pop %v1122
  %v1124 = vmul.f32 %v1093, 1.442695
  %v1125 = vpow.pop %v1124
  %v1126 = vadd.f32 %v1095, 1.0
  %v1127 = vadd.f32 %v1097, 1.0
  %v1128 = vadd.f32 %v1099, 1.0
  %v1129 = vadd.f32 %v1101, 1.0
  %v1130 = vadd.f32 %v1103, 1.0
  %v1131 = vadd.f32 %v1105, 1.0
  %v1132 = vadd.f32 %v1107, 1.0
  %v1133 = vadd.f32 %v1109, 1.0
  %v1134 = vadd.f32 %v1111, 1.0
  %v1135 = vadd.f32 %v1113, 1.0
  %v1136 = vadd.f32 %v1115, 1.0
  %v1137 = vadd.f32 %v1117, 1.0
  %v1138 = vadd.f32 %v1119, 1.0
  %v1139 = vadd.f32 %v1121, 1.0
  %v1140 = vadd.f32 %v1123, 1.0
  %v1141 = vadd.f32 %v1125, 1.0
  %v1142 = vrcp.pop %v1126
  %v1143 = vmul.f32 1.0, %v1142
  %v1144 = vrcp.pop %v1127
  %v1145 = vmul.f32 1.0, %v1144
  %v1146 = vrcp.pop %v1128
  %v1147 = vmul.f32 1.0, %v1146
  %v1148 = vrcp.pop %v1129
  %v1149 = vmul.f32 1.0, %v1148
  %v1150 = vrcp.pop %v1130
  %v1151 = vmul.f32 1.0, %v1150
  %v1152 = vrcp.pop %v1131
  %v1153 = vmul.f32 1.0, %v1152
  %v1154 = vrcp.pop %v1132
  %v1155 = vmul.f32 1.0, %v1154
  %v1156 = vrcp.pop %v1133
  %v1157 = vmul.f32 1.0, %v1156
  %v1158 = vrcp.pop %v1134
  %v1159 = vmul.f32 1.0, %v1158
  %v1160 = vrcp.pop %v1135
  %v1161 = vmul.f32 1.0, %v1160
  %v1162 = vrcp.pop %v1136
  %v1163 = vmul.f32 1.0, %v1162
  %v1164 = vrcp.pop %v1137
  %v1165 = vmul.f32 1.0, %v1164
  %v1166 = vrcp.pop %v1138
  %v1167 = vmul.f32 1.0, %v1166
  %v1168 = vrcp.pop %v1139
  %v1169 = vmul.f32 1.0, %v1168
  %v1170 = vrcp.pop %v1140
  %v1171 = vmul.f32 1.0, %v1170
  %v1172 = vrcp.pop %v1141
  %v1173 = vmul.f32 1.0, %v1172
  %v1174 = vmul.f32 %v1159, 2.0
  %v1175 = vmul.f32 %v1161, 2.0
  %v1176 = vmul.f32 %v1163, 2.0
  %v1177 = vmul.f32 %v1165, 2.0
  %v1178 = vsub.f32 %v1174, 1.0
  %v1179 = vsub.f32 %v1175, 1.0
  %v1180 = vsub.f32 %v1176, 1.0
  %v1181 = vsub.f32 %v1177, 1.0
  %1186 = vrot.lane.b32.xlu0 %v845, 8
  %v1187 = vpop.permute.xlu0 %1186
  %1188 = vrot.lane.b32.xlu0 %v846, 8
  %v1189 = vpop.permute.xlu0 %1188
  %1190 = vrot.lane.b32.xlu0 %v847, 8
  %v1191 = vpop.permute.xlu0 %1190
  %1192 = vrot.lane.b32.xlu0 %v848, 8
  %v1193 = vpop.permute.xlu0 %1192
  %v1198 = vmul.f32 %v1151, %v1187
  %v1199 = vmul.f32 %v1153, %v1189
  %v1200 = vmul.f32 %v1155, %v1191
  %v1201 = vmul.f32 %v1157, %v1193
  %v1202 = vmul.f32 %v1143, %v1178
  %v1203 = vmul.f32 %v1145, %v1179
  %v1204 = vmul.f32 %v1147, %v1180
  %v1205 = vmul.f32 %v1149, %v1181
  %v1206 = vadd.f32 %v1198, %v1202
  %v1207 = vadd.f32 %v1199, %v1203
  %v1208 = vadd.f32 %v1200, %v1204
  %v1209 = vadd.f32 %v1201, %v1205
  %v1210 = vtanh.pop %v1206
  %v1211 = vtanh.pop %v1207
  %v1212 = vtanh.pop %v1208
  %v1213 = vtanh.pop %v1209
  %v1214 = vmul.f32 %v1167, %v1210
  %v1215 = vmul.f32 %v1169, %v1211
  %v1216 = vmul.f32 %v1171, %v1212
  %v1217 = vmul.f32 %v1173, %v1213
  %vm1218 = vcmp.gt.s32.totalorder %v509, 1
  %1223 = vrot.lane.b32.xlu0 %v1206, 120
  %v1224 = vpop.permute.xlu0 %1223
  %1225 = vrot.lane.b32.xlu0 %v1207, 120
  %v1226 = vpop.permute.xlu0 %1225
  %1227 = vrot.lane.b32.xlu0 %v1208, 120
  %v1228 = vpop.permute.xlu0 %1227
  %1229 = vrot.lane.b32.xlu0 %v1209, 120
  %v1230 = vpop.permute.xlu0 %1229
  %v1235 = vsel %vm1218, %v1224, %v845
  %v1236 = vsel %vm1218, %v1226, %v846
  %v1237 = vsel %vm1218, %v1228, %v847
  %v1238 = vsel %vm1218, %v1230, %v848
  %1243 = vrot.lane.b32.xlu0 %v1214, 120
  %v1244 = vpop.permute.xlu0 %1243
  %1245 = vrot.lane.b32.xlu0 %v1215, 120
  %v1246 = vpop.permute.xlu0 %1245
  %1247 = vrot.lane.b32.xlu0 %v1216, 120
  %v1248 = vpop.permute.xlu0 %1247
  %1249 = vrot.lane.b32.xlu0 %v1217, 120
  %v1250 = vpop.permute.xlu0 %1249
  %v1255 = vsel %vm1218, %v1244, %v849
  %v1256 = vsel %vm1218, %v1246, %v850
  %v1257 = vsel %vm1218, %v1248, %v851
  %v1258 = vsel %vm1218, %v1250, %v852
  %1259 = vmatprep.subr.mxu0 0.0
  %1260 = vmatpush1.msra.mxu0 0.0
  %1261 = vmatprep.subr.mxu0 0.0
  %1262 = vmatpush1.msra.mxu0 0.0
  %1263 = vmatprep.subr.mxu0 0.0
  %1264 = vmatpush1.msra.mxu0 0.0
  %1265 = vmatprep.subr.mxu0 0.0
  %1266 = vmatpush1.msra.mxu0 0.0
  %1267 = vmatprep.subr.mxu0 0.0
  %1268 = vmatpush1.msra.mxu0 0.0
  %1269 = vmatprep.subr.mxu0 0.0
  %1270 = vmatpush1.msra.mxu0 0.0
  %1271 = vmatprep.subr.mxu0 0.0
  %1272 = vmatpush1.msra.mxu0 0.0
  %1273 = vmatprep.subr.mxu0 0.0
  %1274 = vmatpush1.msra.mxu0 0.0
  %1275 = vmatprep.subr.mxu0 0.0
  %1276 = vmatpush1.msra.mxu0 0.0
  %1277 = vmatprep.subr.mxu0 0.0
  %1278 = vmatpush1.msra.mxu0 0.0
  %1279 = vmatprep.subr.mxu0 0.0
  %1280 = vmatpush1.msra.mxu0 0.0
  %1281 = vmatprep.subr.mxu0 0.0
  %1282 = vmatpush1.msra.mxu0 0.0
  %1283 = vmatprep.subr.mxu0 0.0
  %1284 = vmatpush1.msra.mxu0 %v1258
  %1285 = vmatprep.subr.mxu0 0.0
  %1286 = vmatpush1.msra.mxu0 %v1257
  %1287 = vmatprep.subr.mxu0 0.0
  %1288 = vmatpush1.msra.mxu0 %v1256
  %1289 = vmatprep.subr.mxu0 0.0
  %1290 = vmatpush1.msra.mxu0 %v1255
  %1291 = vmatprep.subr.mxu0 0.0
  %1292 = vmatpush2.msra.mxu0 0.0
  %1293 = vmatprep.subr.mxu0 0.0
  %1294 = vmatpush2.msra.mxu0 0.0
  %1295 = vmatprep.subr.mxu0 0.0
  %1296 = vmatpush2.msra.mxu0 0.0
  %1297 = vmatprep.subr.mxu0 0.0
  %1298 = vmatpush2.msra.mxu0 0.0
  %1299 = vmatprep.subr.mxu0 0.0
  %1300 = vmatpush2.msra.mxu0 0.0
  %1301 = vmatprep.subr.mxu0 0.0
  %1302 = vmatpush2.msra.mxu0 0.0
  %1303 = vmatprep.subr.mxu0 0.0
  %1304 = vmatpush2.msra.mxu0 0.0
  %1305 = vmatprep.subr.mxu0 0.0
  %1306 = vmatpush2.msra.mxu0 0.0
  %1307 = vmatprep.subr.mxu0 0.0
  %1308 = vmatpush2.msra.mxu0 0.0
  %1309 = vmatprep.subr.mxu0 0.0
  %1310 = vmatpush2.msra.mxu0 0.0
  %1311 = vmatprep.subr.mxu0 0.0
  %1312 = vmatpush2.msra.mxu0 0.0
  %1313 = vmatprep.subr.mxu0 0.0
  %1314 = vmatpush2.msra.mxu0 0.0
  %1315 = vmatprep.subr.mxu0 0.0
  %1316 = vmatpush2.msra.mxu0 0.0
  %1317 = vmatprep.subr.mxu0 0.0
  %1318 = vmatpush2.msra.mxu0 0.0
  %1319 = vmatprep.subr.mxu0 0.0
  %1320 = vmatpush2.msra.mxu0 0.0
  %1321 = vmatprep.subr.mxu0 0.0
  %1322 = vmatpush2.msra.mxu0 0.0
  %1323 = vmatprep.mubr.f32.mxu0 0.0
  %1324 = vmatmul.mubr.f32.gmra.mxu0 %v512
  %v1325 = vpop.f32.mrf.mxu0
  %v1326 = vadd.f32 0.0, %v1325
  %v1327 = vpop.f32.mrf.mxu0
  %1328 = vmatprep.mubr.f32.mxu0 0.0
  %1329 = vmatmul.mubr.f32.gmra.mxu0 %v515
  %v1330 = vpop.f32.mrf.mxu0
  %v1331 = vadd.f32 0.0, %v1330
  %v1332 = vpop.f32.mrf.mxu0
  %1333 = vmatprep.mubr.f32.mxu0 0.0
  %1334 = vmatmul.mubr.f32.gmra.mxu0 %v518
  %v1335 = vpop.f32.mrf.mxu0
  %v1336 = vadd.f32 0.0, %v1335
  %v1337 = vpop.f32.mrf.mxu0
  %1338 = vmatprep.mubr.f32.mxu0 0.0
  %1339 = vmatmul.mubr.f32.gmra.mxu0 %v521
  %v1340 = vpop.f32.mrf.mxu0
  %v1341 = vadd.f32 0.0, %v1340
  %v1342 = vpop.f32.mrf.mxu0
  %1343 = vmatprep.mubr.f32.mxu0 0.0
  %1344 = vmatmul.mubr.f32.gmra.mxu0 %v524
  %v1345 = vpop.f32.mrf.mxu0
  %v1346 = vadd.f32 0.0, %v1345
  %v1347 = vpop.f32.mrf.mxu0
  %1348 = vmatprep.mubr.f32.mxu0 0.0
  %1349 = vmatmul.mubr.f32.gmra.mxu0 %v527
  %v1350 = vpop.f32.mrf.mxu0
  %v1351 = vadd.f32 0.0, %v1350
  %v1352 = vpop.f32.mrf.mxu0
  %1353 = vmatprep.mubr.f32.mxu0 0.0
  %1354 = vmatmul.mubr.f32.gmra.mxu0 %v530
  %v1355 = vpop.f32.mrf.mxu0
  %v1356 = vadd.f32 0.0, %v1355
  %v1357 = vpop.f32.mrf.mxu0
  %1358 = vmatprep.mubr.f32.mxu0 0.0
  %1359 = vmatmul.mubr.f32.gmra.mxu0 %v533
  %v1360 = vpop.f32.mrf.mxu0
  %v1361 = vadd.f32 0.0, %v1360
  %v1362 = vpop.f32.mrf.mxu0
  %1363 = vmatprep.mubr.f32.mxu0 0.0
  %1364 = vmatmul.mubr.f32.gmra.mxu0 %v536
  %v1365 = vpop.f32.mrf.mxu0
  %v1366 = vadd.f32 0.0, %v1365
  %v1367 = vpop.f32.mrf.mxu0
  %1368 = vmatprep.mubr.f32.mxu0 0.0
  %1369 = vmatmul.mubr.f32.gmra.mxu0 %v539
  %v1370 = vpop.f32.mrf.mxu0
  %v1371 = vadd.f32 0.0, %v1370
  %v1372 = vpop.f32.mrf.mxu0
  %1373 = vmatprep.mubr.f32.mxu0 0.0
  %1374 = vmatmul.mubr.f32.gmra.mxu0 %v542
  %v1375 = vpop.f32.mrf.mxu0
  %v1376 = vadd.f32 0.0, %v1375
  %v1377 = vpop.f32.mrf.mxu0
  %1378 = vmatprep.mubr.f32.mxu0 0.0
  %1379 = vmatmul.mubr.f32.gmra.mxu0 %v545
  %v1380 = vpop.f32.mrf.mxu0
  %v1381 = vadd.f32 0.0, %v1380
  %v1382 = vpop.f32.mrf.mxu0
  %1383 = vmatprep.mubr.f32.mxu0 0.0
  %1384 = vmatmul.mubr.f32.gmra.mxu0 %v548
  %v1385 = vpop.f32.mrf.mxu0
  %v1386 = vadd.f32 0.0, %v1385
  %v1387 = vpop.f32.mrf.mxu0
  %1388 = vmatprep.mubr.f32.mxu0 0.0
  %1389 = vmatmul.mubr.f32.gmra.mxu0 %v551
  %v1390 = vpop.f32.mrf.mxu0
  %v1391 = vadd.f32 0.0, %v1390
  %v1392 = vpop.f32.mrf.mxu0
  %1393 = vmatprep.mubr.f32.mxu0 0.0
  %1394 = vmatmul.mubr.f32.gmra.mxu0 %v554
  %v1395 = vpop.f32.mrf.mxu0
  %v1396 = vadd.f32 0.0, %v1395
  %v1397 = vpop.f32.mrf.mxu0
  %1398 = vmatprep.mubr.f32.mxu0 0.0
  %1399 = vmatmul.mubr.f32.gmra.mxu0 %v557
  %v1400 = vpop.f32.mrf.mxu0
  %v1401 = vadd.f32 0.0, %v1400
  %v1402 = vpop.f32.mrf.mxu0
  %1403 = vdwg.mxu0
  %1420 = vrot.lane.b32.xlu0 %v1326, 16
  %v1421 = vpop.permute.xlu0 %1420
  %1422 = vrot.lane.b32.xlu0 %v1331, 16
  %v1423 = vpop.permute.xlu0 %1422
  %1424 = vrot.lane.b32.xlu0 %v1336, 16
  %v1425 = vpop.permute.xlu0 %1424
  %1426 = vrot.lane.b32.xlu0 %v1341, 16
  %v1427 = vpop.permute.xlu0 %1426
  %1428 = vrot.lane.b32.xlu0 %v1346, 16
  %v1429 = vpop.permute.xlu0 %1428
  %1430 = vrot.lane.b32.xlu0 %v1351, 16
  %v1431 = vpop.permute.xlu0 %1430
  %1432 = vrot.lane.b32.xlu0 %v1356, 16
  %v1433 = vpop.permute.xlu0 %1432
  %1434 = vrot.lane.b32.xlu0 %v1361, 16
  %v1435 = vpop.permute.xlu0 %1434
  %1436 = vrot.lane.b32.xlu0 %v1366, 16
  %v1437 = vpop.permute.xlu0 %1436
  %1438 = vrot.lane.b32.xlu0 %v1371, 16
  %v1439 = vpop.permute.xlu0 %1438
  %1440 = vrot.lane.b32.xlu0 %v1376, 16
  %v1441 = vpop.permute.xlu0 %1440
  %1442 = vrot.lane.b32.xlu0 %v1381, 16
  %v1443 = vpop.permute.xlu0 %1442
  %1444 = vrot.lane.b32.xlu0 %v1386, 16
  %v1445 = vpop.permute.xlu0 %1444
  %1446 = vrot.lane.b32.xlu0 %v1391, 16
  %v1447 = vpop.permute.xlu0 %1446
  %1448 = vrot.lane.b32.xlu0 %v1396, 16
  %v1449 = vpop.permute.xlu0 %1448
  %1450 = vrot.lane.b32.xlu0 %v1401, 16
  %v1451 = vpop.permute.xlu0 %1450
  %v1468 = vadd.f32 %v443, %v1421
  %v1469 = vadd.f32 %v446, %v1423
  %v1470 = vadd.f32 %v451, %v1425
  %v1471 = vadd.f32 %v454, %v1427
  %v1472 = vadd.f32 %v459, %v1429
  %v1473 = vadd.f32 %v462, %v1431
  %v1474 = vadd.f32 %v467, %v1433
  %v1475 = vadd.f32 %v470, %v1435
  %v1476 = vadd.f32 %v475, %v1437
  %v1477 = vadd.f32 %v478, %v1439
  %v1478 = vadd.f32 %v483, %v1441
  %v1479 = vadd.f32 %v486, %v1443
  %v1480 = vadd.f32 %v491, %v1445
  %v1481 = vadd.f32 %v494, %v1447
  %v1482 = vadd.f32 %v499, %v1449
  %v1483 = vadd.f32 %v502, %v1451
  %v1484 = vxor.u32 %v1468, 2147483648
  %v1485 = vxor.u32 %v1469, 2147483648
  %v1486 = vxor.u32 %v1470, 2147483648
  %v1487 = vxor.u32 %v1471, 2147483648
  %v1488 = vxor.u32 %v1472, 2147483648
  %v1489 = vxor.u32 %v1473, 2147483648
  %v1490 = vxor.u32 %v1474, 2147483648
  %v1491 = vxor.u32 %v1475, 2147483648
  %v1492 = vxor.u32 %v1476, 2147483648
  %v1493 = vxor.u32 %v1477, 2147483648
  %v1494 = vxor.u32 %v1478, 2147483648
  %v1495 = vxor.u32 %v1479, 2147483648
  %v1496 = vxor.u32 %v1480, 2147483648
  %v1497 = vxor.u32 %v1481, 2147483648
  %v1498 = vxor.u32 %v1482, 2147483648
  %v1499 = vxor.u32 %v1483, 2147483648
  %v1500 = vmul.f32 %v1484, 1.442695
  %v1501 = vpow.pop %v1500
  %v1502 = vmul.f32 %v1485, 1.442695
  %v1503 = vpow.pop %v1502
  %v1504 = vmul.f32 %v1486, 1.442695
  %v1505 = vpow.pop %v1504
  %v1506 = vmul.f32 %v1487, 1.442695
  %v1507 = vpow.pop %v1506
  %v1508 = vmul.f32 %v1488, 1.442695
  %v1509 = vpow.pop %v1508
  %v1510 = vmul.f32 %v1489, 1.442695
  %v1511 = vpow.pop %v1510
  %v1512 = vmul.f32 %v1490, 1.442695
  %v1513 = vpow.pop %v1512
  %v1514 = vmul.f32 %v1491, 1.442695
  %v1515 = vpow.pop %v1514
  %v1516 = vmul.f32 %v1492, 1.442695
  %v1517 = vpow.pop %v1516
  %v1518 = vmul.f32 %v1493, 1.442695
  %v1519 = vpow.pop %v1518
  %v1520 = vmul.f32 %v1494, 1.442695
  %v1521 = vpow.pop %v1520
  %v1522 = vmul.f32 %v1495, 1.442695
  %v1523 = vpow.pop %v1522
  %v1524 = vmul.f32 %v1496, 1.442695
  %v1525 = vpow.pop %v1524
  %v1526 = vmul.f32 %v1497, 1.442695
  %v1527 = vpow.pop %v1526
  %v1528 = vmul.f32 %v1498, 1.442695
  %v1529 = vpow.pop %v1528
  %v1530 = vmul.f32 %v1499, 1.442695
  %v1531 = vpow.pop %v1530
  %v1532 = vadd.f32 %v1501, 1.0
  %v1533 = vadd.f32 %v1503, 1.0
  %v1534 = vadd.f32 %v1505, 1.0
  %v1535 = vadd.f32 %v1507, 1.0
  %v1536 = vadd.f32 %v1509, 1.0
  %v1537 = vadd.f32 %v1511, 1.0
  %v1538 = vadd.f32 %v1513, 1.0
  %v1539 = vadd.f32 %v1515, 1.0
  %v1540 = vadd.f32 %v1517, 1.0
  %v1541 = vadd.f32 %v1519, 1.0
  %v1542 = vadd.f32 %v1521, 1.0
  %v1543 = vadd.f32 %v1523, 1.0
  %v1544 = vadd.f32 %v1525, 1.0
  %v1545 = vadd.f32 %v1527, 1.0
  %v1546 = vadd.f32 %v1529, 1.0
  %v1547 = vadd.f32 %v1531, 1.0
  %v1548 = vrcp.pop %v1532
  %v1549 = vmul.f32 1.0, %v1548
  %v1550 = vrcp.pop %v1533
  %v1551 = vmul.f32 1.0, %v1550
  %v1552 = vrcp.pop %v1534
  %v1553 = vmul.f32 1.0, %v1552
  %v1554 = vrcp.pop %v1535
  %v1555 = vmul.f32 1.0, %v1554
  %v1556 = vrcp.pop %v1536
  %v1557 = vmul.f32 1.0, %v1556
  %v1558 = vrcp.pop %v1537
  %v1559 = vmul.f32 1.0, %v1558
  %v1560 = vrcp.pop %v1538
  %v1561 = vmul.f32 1.0, %v1560
  %v1562 = vrcp.pop %v1539
  %v1563 = vmul.f32 1.0, %v1562
  %v1564 = vrcp.pop %v1540
  %v1565 = vmul.f32 1.0, %v1564
  %v1566 = vrcp.pop %v1541
  %v1567 = vmul.f32 1.0, %v1566
  %v1568 = vrcp.pop %v1542
  %v1569 = vmul.f32 1.0, %v1568
  %v1570 = vrcp.pop %v1543
  %v1571 = vmul.f32 1.0, %v1570
  %v1572 = vrcp.pop %v1544
  %v1573 = vmul.f32 1.0, %v1572
  %v1574 = vrcp.pop %v1545
  %v1575 = vmul.f32 1.0, %v1574
  %v1576 = vrcp.pop %v1546
  %v1577 = vmul.f32 1.0, %v1576
  %v1578 = vrcp.pop %v1547
  %v1579 = vmul.f32 1.0, %v1578
  %v1580 = vmul.f32 %v1565, 2.0
  %v1581 = vmul.f32 %v1567, 2.0
  %v1582 = vmul.f32 %v1569, 2.0
  %v1583 = vmul.f32 %v1571, 2.0
  %v1584 = vsub.f32 %v1580, 1.0
  %v1585 = vsub.f32 %v1581, 1.0
  %v1586 = vsub.f32 %v1582, 1.0
  %v1587 = vsub.f32 %v1583, 1.0
  %1592 = vrot.lane.b32.xlu0 %v1235, 16
  %v1593 = vpop.permute.xlu0 %1592
  %1594 = vrot.lane.b32.xlu0 %v1236, 16
  %v1595 = vpop.permute.xlu0 %1594
  %1596 = vrot.lane.b32.xlu0 %v1237, 16
  %v1597 = vpop.permute.xlu0 %1596
  %1598 = vrot.lane.b32.xlu0 %v1238, 16
  %v1599 = vpop.permute.xlu0 %1598
  %v1604 = vmul.f32 %v1557, %v1593
  %v1605 = vmul.f32 %v1559, %v1595
  %v1606 = vmul.f32 %v1561, %v1597
  %v1607 = vmul.f32 %v1563, %v1599
  %v1608 = vmul.f32 %v1549, %v1584
  %v1609 = vmul.f32 %v1551, %v1585
  %v1610 = vmul.f32 %v1553, %v1586
  %v1611 = vmul.f32 %v1555, %v1587
  %v1612 = vadd.f32 %v1604, %v1608
  %v1613 = vadd.f32 %v1605, %v1609
  %v1614 = vadd.f32 %v1606, %v1610
  %v1615 = vadd.f32 %v1607, %v1611
  %v1616 = vtanh.pop %v1612
  %v1617 = vtanh.pop %v1613
  %v1618 = vtanh.pop %v1614
  %v1619 = vtanh.pop %v1615
  %v1620 = vmul.f32 %v1573, %v1616
  %v1621 = vmul.f32 %v1575, %v1617
  %v1622 = vmul.f32 %v1577, %v1618
  %v1623 = vmul.f32 %v1579, %v1619
  %vm1624 = vcmp.gt.s32.totalorder %v509, 2
  %1629 = vrot.lane.b32.xlu0 %v1612, 112
  %v1630 = vpop.permute.xlu0 %1629
  %1631 = vrot.lane.b32.xlu0 %v1613, 112
  %v1632 = vpop.permute.xlu0 %1631
  %1633 = vrot.lane.b32.xlu0 %v1614, 112
  %v1634 = vpop.permute.xlu0 %1633
  %1635 = vrot.lane.b32.xlu0 %v1615, 112
  %v1636 = vpop.permute.xlu0 %1635
  %v1641 = vsel %vm1624, %v1630, %v1235
  %v1642 = vsel %vm1624, %v1632, %v1236
  %v1643 = vsel %vm1624, %v1634, %v1237
  %v1644 = vsel %vm1624, %v1636, %v1238
  %1649 = vrot.lane.b32.xlu0 %v1620, 112
  %v1650 = vpop.permute.xlu0 %1649
  %1651 = vrot.lane.b32.xlu0 %v1621, 112
  %v1652 = vpop.permute.xlu0 %1651
  %1653 = vrot.lane.b32.xlu0 %v1622, 112
  %v1654 = vpop.permute.xlu0 %1653
  %1655 = vrot.lane.b32.xlu0 %v1623, 112
  %v1656 = vpop.permute.xlu0 %1655
  %v1661 = vsel %vm1624, %v1650, %v1255
  %v1662 = vsel %vm1624, %v1652, %v1256
  %v1663 = vsel %vm1624, %v1654, %v1257
  %v1664 = vsel %vm1624, %v1656, %v1258
  %1665 = vmatprep.subr.mxu0 0.0
  %1666 = vmatpush1.msra.mxu0 0.0
  %1667 = vmatprep.subr.mxu0 0.0
  %1668 = vmatpush1.msra.mxu0 0.0
  %1669 = vmatprep.subr.mxu0 0.0
  %1670 = vmatpush1.msra.mxu0 0.0
  %1671 = vmatprep.subr.mxu0 0.0
  %1672 = vmatpush1.msra.mxu0 0.0
  %1673 = vmatprep.subr.mxu0 0.0
  %1674 = vmatpush1.msra.mxu0 0.0
  %1675 = vmatprep.subr.mxu0 0.0
  %1676 = vmatpush1.msra.mxu0 0.0
  %1677 = vmatprep.subr.mxu0 0.0
  %1678 = vmatpush1.msra.mxu0 0.0
  %1679 = vmatprep.subr.mxu0 0.0
  %1680 = vmatpush1.msra.mxu0 0.0
  %1681 = vmatprep.subr.mxu0 0.0
  %1682 = vmatpush1.msra.mxu0 0.0
  %1683 = vmatprep.subr.mxu0 0.0
  %1684 = vmatpush1.msra.mxu0 0.0
  %1685 = vmatprep.subr.mxu0 0.0
  %1686 = vmatpush1.msra.mxu0 0.0
  %1687 = vmatprep.subr.mxu0 0.0
  %1688 = vmatpush1.msra.mxu0 0.0
  %1689 = vmatprep.subr.mxu0 0.0
  %1690 = vmatpush1.msra.mxu0 %v1664
  %1691 = vmatprep.subr.mxu0 0.0
  %1692 = vmatpush1.msra.mxu0 %v1663
  %1693 = vmatprep.subr.mxu0 0.0
  %1694 = vmatpush1.msra.mxu0 %v1662
  %1695 = vmatprep.subr.mxu0 0.0
  %1696 = vmatpush1.msra.mxu0 %v1661
  %1697 = vmatprep.subr.mxu0 0.0
  %1698 = vmatpush2.msra.mxu0 0.0
  %1699 = vmatprep.subr.mxu0 0.0
  %1700 = vmatpush2.msra.mxu0 0.0
  %1701 = vmatprep.subr.mxu0 0.0
  %1702 = vmatpush2.msra.mxu0 0.0
  %1703 = vmatprep.subr.mxu0 0.0
  %1704 = vmatpush2.msra.mxu0 0.0
  %1705 = vmatprep.subr.mxu0 0.0
  %1706 = vmatpush2.msra.mxu0 0.0
  %1707 = vmatprep.subr.mxu0 0.0
  %1708 = vmatpush2.msra.mxu0 0.0
  %1709 = vmatprep.subr.mxu0 0.0
  %1710 = vmatpush2.msra.mxu0 0.0
  %1711 = vmatprep.subr.mxu0 0.0
  %1712 = vmatpush2.msra.mxu0 0.0
  %1713 = vmatprep.subr.mxu0 0.0
  %1714 = vmatpush2.msra.mxu0 0.0
  %1715 = vmatprep.subr.mxu0 0.0
  %1716 = vmatpush2.msra.mxu0 0.0
  %1717 = vmatprep.subr.mxu0 0.0
  %1718 = vmatpush2.msra.mxu0 0.0
  %1719 = vmatprep.subr.mxu0 0.0
  %1720 = vmatpush2.msra.mxu0 0.0
  %1721 = vmatprep.subr.mxu0 0.0
  %1722 = vmatpush2.msra.mxu0 0.0
  %1723 = vmatprep.subr.mxu0 0.0
  %1724 = vmatpush2.msra.mxu0 0.0
  %1725 = vmatprep.subr.mxu0 0.0
  %1726 = vmatpush2.msra.mxu0 0.0
  %1727 = vmatprep.subr.mxu0 0.0
  %1728 = vmatpush2.msra.mxu0 0.0
  %1729 = vmatprep.mubr.f32.mxu0 0.0
  %1730 = vmatmul.mubr.f32.gmra.mxu0 %v512
  %v1731 = vpop.f32.mrf.mxu0
  %v1732 = vadd.f32 0.0, %v1731
  %v1733 = vpop.f32.mrf.mxu0
  %1734 = vmatprep.mubr.f32.mxu0 0.0
  %1735 = vmatmul.mubr.f32.gmra.mxu0 %v515
  %v1736 = vpop.f32.mrf.mxu0
  %v1737 = vadd.f32 0.0, %v1736
  %v1738 = vpop.f32.mrf.mxu0
  %1739 = vmatprep.mubr.f32.mxu0 0.0
  %1740 = vmatmul.mubr.f32.gmra.mxu0 %v518
  %v1741 = vpop.f32.mrf.mxu0
  %v1742 = vadd.f32 0.0, %v1741
  %v1743 = vpop.f32.mrf.mxu0
  %1744 = vmatprep.mubr.f32.mxu0 0.0
  %1745 = vmatmul.mubr.f32.gmra.mxu0 %v521
  %v1746 = vpop.f32.mrf.mxu0
  %v1747 = vadd.f32 0.0, %v1746
  %v1748 = vpop.f32.mrf.mxu0
  %1749 = vmatprep.mubr.f32.mxu0 0.0
  %1750 = vmatmul.mubr.f32.gmra.mxu0 %v524
  %v1751 = vpop.f32.mrf.mxu0
  %v1752 = vadd.f32 0.0, %v1751
  %v1753 = vpop.f32.mrf.mxu0
  %1754 = vmatprep.mubr.f32.mxu0 0.0
  %1755 = vmatmul.mubr.f32.gmra.mxu0 %v527
  %v1756 = vpop.f32.mrf.mxu0
  %v1757 = vadd.f32 0.0, %v1756
  %v1758 = vpop.f32.mrf.mxu0
  %1759 = vmatprep.mubr.f32.mxu0 0.0
  %1760 = vmatmul.mubr.f32.gmra.mxu0 %v530
  %v1761 = vpop.f32.mrf.mxu0
  %v1762 = vadd.f32 0.0, %v1761
  %v1763 = vpop.f32.mrf.mxu0
  %1764 = vmatprep.mubr.f32.mxu0 0.0
  %1765 = vmatmul.mubr.f32.gmra.mxu0 %v533
  %v1766 = vpop.f32.mrf.mxu0
  %v1767 = vadd.f32 0.0, %v1766
  %v1768 = vpop.f32.mrf.mxu0
  %1769 = vmatprep.mubr.f32.mxu0 0.0
  %1770 = vmatmul.mubr.f32.gmra.mxu0 %v536
  %v1771 = vpop.f32.mrf.mxu0
  %v1772 = vadd.f32 0.0, %v1771
  %v1773 = vpop.f32.mrf.mxu0
  %1774 = vmatprep.mubr.f32.mxu0 0.0
  %1775 = vmatmul.mubr.f32.gmra.mxu0 %v539
  %v1776 = vpop.f32.mrf.mxu0
  %v1777 = vadd.f32 0.0, %v1776
  %v1778 = vpop.f32.mrf.mxu0
  %1779 = vmatprep.mubr.f32.mxu0 0.0
  %1780 = vmatmul.mubr.f32.gmra.mxu0 %v542
  %v1781 = vpop.f32.mrf.mxu0
  %v1782 = vadd.f32 0.0, %v1781
  %v1783 = vpop.f32.mrf.mxu0
  %1784 = vmatprep.mubr.f32.mxu0 0.0
  %1785 = vmatmul.mubr.f32.gmra.mxu0 %v545
  %v1786 = vpop.f32.mrf.mxu0
  %v1787 = vadd.f32 0.0, %v1786
  %v1788 = vpop.f32.mrf.mxu0
  %1789 = vmatprep.mubr.f32.mxu0 0.0
  %1790 = vmatmul.mubr.f32.gmra.mxu0 %v548
  %v1791 = vpop.f32.mrf.mxu0
  %v1792 = vadd.f32 0.0, %v1791
  %v1793 = vpop.f32.mrf.mxu0
  %1794 = vmatprep.mubr.f32.mxu0 0.0
  %1795 = vmatmul.mubr.f32.gmra.mxu0 %v551
  %v1796 = vpop.f32.mrf.mxu0
  %v1797 = vadd.f32 0.0, %v1796
  %v1798 = vpop.f32.mrf.mxu0
  %1799 = vmatprep.mubr.f32.mxu0 0.0
  %1800 = vmatmul.mubr.f32.gmra.mxu0 %v554
  %v1801 = vpop.f32.mrf.mxu0
  %v1802 = vadd.f32 0.0, %v1801
  %v1803 = vpop.f32.mrf.mxu0
  %1804 = vmatprep.mubr.f32.mxu0 0.0
  %1805 = vmatmul.mubr.f32.gmra.mxu0 %v557
  %v1806 = vpop.f32.mrf.mxu0
  %v1807 = vadd.f32 0.0, %v1806
  %v1808 = vpop.f32.mrf.mxu0
  %1809 = vdwg.mxu0
  %1826 = vrot.lane.b32.xlu0 %v1732, 24
  %v1827 = vpop.permute.xlu0 %1826
  %1828 = vrot.lane.b32.xlu0 %v1737, 24
  %v1829 = vpop.permute.xlu0 %1828
  %1830 = vrot.lane.b32.xlu0 %v1742, 24
  %v1831 = vpop.permute.xlu0 %1830
  %1832 = vrot.lane.b32.xlu0 %v1747, 24
  %v1833 = vpop.permute.xlu0 %1832
  %1834 = vrot.lane.b32.xlu0 %v1752, 24
  %v1835 = vpop.permute.xlu0 %1834
  %1836 = vrot.lane.b32.xlu0 %v1757, 24
  %v1837 = vpop.permute.xlu0 %1836
  %1838 = vrot.lane.b32.xlu0 %v1762, 24
  %v1839 = vpop.permute.xlu0 %1838
  %1840 = vrot.lane.b32.xlu0 %v1767, 24
  %v1841 = vpop.permute.xlu0 %1840
  %1842 = vrot.lane.b32.xlu0 %v1772, 24
  %v1843 = vpop.permute.xlu0 %1842
  %1844 = vrot.lane.b32.xlu0 %v1777, 24
  %v1845 = vpop.permute.xlu0 %1844
  %1846 = vrot.lane.b32.xlu0 %v1782, 24
  %v1847 = vpop.permute.xlu0 %1846
  %1848 = vrot.lane.b32.xlu0 %v1787, 24
  %v1849 = vpop.permute.xlu0 %1848
  %1850 = vrot.lane.b32.xlu0 %v1792, 24
  %v1851 = vpop.permute.xlu0 %1850
  %1852 = vrot.lane.b32.xlu0 %v1797, 24
  %v1853 = vpop.permute.xlu0 %1852
  %1854 = vrot.lane.b32.xlu0 %v1802, 24
  %v1855 = vpop.permute.xlu0 %1854
  %1856 = vrot.lane.b32.xlu0 %v1807, 24
  %v1857 = vpop.permute.xlu0 %1856
  %v1874 = vadd.f32 %v443, %v1827
  %v1875 = vadd.f32 %v446, %v1829
  %v1876 = vadd.f32 %v451, %v1831
  %v1877 = vadd.f32 %v454, %v1833
  %v1878 = vadd.f32 %v459, %v1835
  %v1879 = vadd.f32 %v462, %v1837
  %v1880 = vadd.f32 %v467, %v1839
  %v1881 = vadd.f32 %v470, %v1841
  %v1882 = vadd.f32 %v475, %v1843
  %v1883 = vadd.f32 %v478, %v1845
  %v1884 = vadd.f32 %v483, %v1847
  %v1885 = vadd.f32 %v486, %v1849
  %v1886 = vadd.f32 %v491, %v1851
  %v1887 = vadd.f32 %v494, %v1853
  %v1888 = vadd.f32 %v499, %v1855
  %v1889 = vadd.f32 %v502, %v1857
  %v1890 = vxor.u32 %v1874, 2147483648
  %v1891 = vxor.u32 %v1875, 2147483648
  %v1892 = vxor.u32 %v1876, 2147483648
  %v1893 = vxor.u32 %v1877, 2147483648
  %v1894 = vxor.u32 %v1878, 2147483648
  %v1895 = vxor.u32 %v1879, 2147483648
  %v1896 = vxor.u32 %v1880, 2147483648
  %v1897 = vxor.u32 %v1881, 2147483648
  %v1898 = vxor.u32 %v1882, 2147483648
  %v1899 = vxor.u32 %v1883, 2147483648
  %v1900 = vxor.u32 %v1884, 2147483648
  %v1901 = vxor.u32 %v1885, 2147483648
  %v1902 = vxor.u32 %v1886, 2147483648
  %v1903 = vxor.u32 %v1887, 2147483648
  %v1904 = vxor.u32 %v1888, 2147483648
  %v1905 = vxor.u32 %v1889, 2147483648
  %v1906 = vmul.f32 %v1890, 1.442695
  %v1907 = vpow.pop %v1906
  %v1908 = vmul.f32 %v1891, 1.442695
  %v1909 = vpow.pop %v1908
  %v1910 = vmul.f32 %v1892, 1.442695
  %v1911 = vpow.pop %v1910
  %v1912 = vmul.f32 %v1893, 1.442695
  %v1913 = vpow.pop %v1912
  %v1914 = vmul.f32 %v1894, 1.442695
  %v1915 = vpow.pop %v1914
  %v1916 = vmul.f32 %v1895, 1.442695
  %v1917 = vpow.pop %v1916
  %v1918 = vmul.f32 %v1896, 1.442695
  %v1919 = vpow.pop %v1918
  %v1920 = vmul.f32 %v1897, 1.442695
  %v1921 = vpow.pop %v1920
  %v1922 = vmul.f32 %v1898, 1.442695
  %v1923 = vpow.pop %v1922
  %v1924 = vmul.f32 %v1899, 1.442695
  %v1925 = vpow.pop %v1924
  %v1926 = vmul.f32 %v1900, 1.442695
  %v1927 = vpow.pop %v1926
  %v1928 = vmul.f32 %v1901, 1.442695
  %v1929 = vpow.pop %v1928
  %v1930 = vmul.f32 %v1902, 1.442695
  %v1931 = vpow.pop %v1930
  %v1932 = vmul.f32 %v1903, 1.442695
  %v1933 = vpow.pop %v1932
  %v1934 = vmul.f32 %v1904, 1.442695
  %v1935 = vpow.pop %v1934
  %v1936 = vmul.f32 %v1905, 1.442695
  %v1937 = vpow.pop %v1936
  %v1938 = vadd.f32 %v1907, 1.0
  %v1939 = vadd.f32 %v1909, 1.0
  %v1940 = vadd.f32 %v1911, 1.0
  %v1941 = vadd.f32 %v1913, 1.0
  %v1942 = vadd.f32 %v1915, 1.0
  %v1943 = vadd.f32 %v1917, 1.0
  %v1944 = vadd.f32 %v1919, 1.0
  %v1945 = vadd.f32 %v1921, 1.0
  %v1946 = vadd.f32 %v1923, 1.0
  %v1947 = vadd.f32 %v1925, 1.0
  %v1948 = vadd.f32 %v1927, 1.0
  %v1949 = vadd.f32 %v1929, 1.0
  %v1950 = vadd.f32 %v1931, 1.0
  %v1951 = vadd.f32 %v1933, 1.0
  %v1952 = vadd.f32 %v1935, 1.0
  %v1953 = vadd.f32 %v1937, 1.0
  %v1954 = vrcp.pop %v1938
  %v1955 = vmul.f32 1.0, %v1954
  %v1956 = vrcp.pop %v1939
  %v1957 = vmul.f32 1.0, %v1956
  %v1958 = vrcp.pop %v1940
  %v1959 = vmul.f32 1.0, %v1958
  %v1960 = vrcp.pop %v1941
  %v1961 = vmul.f32 1.0, %v1960
  %v1962 = vrcp.pop %v1942
  %v1963 = vmul.f32 1.0, %v1962
  %v1964 = vrcp.pop %v1943
  %v1965 = vmul.f32 1.0, %v1964
  %v1966 = vrcp.pop %v1944
  %v1967 = vmul.f32 1.0, %v1966
  %v1968 = vrcp.pop %v1945
  %v1969 = vmul.f32 1.0, %v1968
  %v1970 = vrcp.pop %v1946
  %v1971 = vmul.f32 1.0, %v1970
  %v1972 = vrcp.pop %v1947
  %v1973 = vmul.f32 1.0, %v1972
  %v1974 = vrcp.pop %v1948
  %v1975 = vmul.f32 1.0, %v1974
  %v1976 = vrcp.pop %v1949
  %v1977 = vmul.f32 1.0, %v1976
  %v1978 = vrcp.pop %v1950
  %v1979 = vmul.f32 1.0, %v1978
  %v1980 = vrcp.pop %v1951
  %v1981 = vmul.f32 1.0, %v1980
  %v1982 = vrcp.pop %v1952
  %v1983 = vmul.f32 1.0, %v1982
  %v1984 = vrcp.pop %v1953
  %v1985 = vmul.f32 1.0, %v1984
  %v1986 = vmul.f32 %v1971, 2.0
  %v1987 = vmul.f32 %v1973, 2.0
  %v1988 = vmul.f32 %v1975, 2.0
  %v1989 = vmul.f32 %v1977, 2.0
  %v1990 = vsub.f32 %v1986, 1.0
  %v1991 = vsub.f32 %v1987, 1.0
  %v1992 = vsub.f32 %v1988, 1.0
  %v1993 = vsub.f32 %v1989, 1.0
  %1998 = vrot.lane.b32.xlu0 %v1641, 24
  %v1999 = vpop.permute.xlu0 %1998
  %2000 = vrot.lane.b32.xlu0 %v1642, 24
  %v2001 = vpop.permute.xlu0 %2000
  %2002 = vrot.lane.b32.xlu0 %v1643, 24
  %v2003 = vpop.permute.xlu0 %2002
  %2004 = vrot.lane.b32.xlu0 %v1644, 24
  %v2005 = vpop.permute.xlu0 %2004
  %v2010 = vmul.f32 %v1963, %v1999
  %v2011 = vmul.f32 %v1965, %v2001
  %v2012 = vmul.f32 %v1967, %v2003
  %v2013 = vmul.f32 %v1969, %v2005
  %v2014 = vmul.f32 %v1955, %v1990
  %v2015 = vmul.f32 %v1957, %v1991
  %v2016 = vmul.f32 %v1959, %v1992
  %v2017 = vmul.f32 %v1961, %v1993
  %v2018 = vadd.f32 %v2010, %v2014
  %v2019 = vadd.f32 %v2011, %v2015
  %v2020 = vadd.f32 %v2012, %v2016
  %v2021 = vadd.f32 %v2013, %v2017
  %v2022 = vtanh.pop %v2018
  %v2023 = vtanh.pop %v2019
  %v2024 = vtanh.pop %v2020
  %v2025 = vtanh.pop %v2021
  %v2026 = vmul.f32 %v1979, %v2022
  %v2027 = vmul.f32 %v1981, %v2023
  %v2028 = vmul.f32 %v1983, %v2024
  %v2029 = vmul.f32 %v1985, %v2025
  %vm2030 = vcmp.gt.s32.totalorder %v509, 3
  %2035 = vrot.lane.b32.xlu0 %v2018, 104
  %v2036 = vpop.permute.xlu0 %2035
  %2037 = vrot.lane.b32.xlu0 %v2019, 104
  %v2038 = vpop.permute.xlu0 %2037
  %2039 = vrot.lane.b32.xlu0 %v2020, 104
  %v2040 = vpop.permute.xlu0 %2039
  %2041 = vrot.lane.b32.xlu0 %v2021, 104
  %v2042 = vpop.permute.xlu0 %2041
  %v2047 = vsel %vm2030, %v2036, %v1641
  %v2048 = vsel %vm2030, %v2038, %v1642
  %v2049 = vsel %vm2030, %v2040, %v1643
  %v2050 = vsel %vm2030, %v2042, %v1644
  %2055 = vrot.lane.b32.xlu0 %v2026, 104
  %v2056 = vpop.permute.xlu0 %2055
  %2057 = vrot.lane.b32.xlu0 %v2027, 104
  %v2058 = vpop.permute.xlu0 %2057
  %2059 = vrot.lane.b32.xlu0 %v2028, 104
  %v2060 = vpop.permute.xlu0 %2059
  %2061 = vrot.lane.b32.xlu0 %v2029, 104
  %v2062 = vpop.permute.xlu0 %2061
  %v2067 = vsel %vm2030, %v2056, %v1661
  %v2068 = vsel %vm2030, %v2058, %v1662
  %v2069 = vsel %vm2030, %v2060, %v1663
  %v2070 = vsel %vm2030, %v2062, %v1664
  %2071 = vmatprep.subr.mxu0 0.0
  %2072 = vmatpush1.msra.mxu0 0.0
  %2073 = vmatprep.subr.mxu0 0.0
  %2074 = vmatpush1.msra.mxu0 0.0
  %2075 = vmatprep.subr.mxu0 0.0
  %2076 = vmatpush1.msra.mxu0 0.0
  %2077 = vmatprep.subr.mxu0 0.0
  %2078 = vmatpush1.msra.mxu0 0.0
  %2079 = vmatprep.subr.mxu0 0.0
  %2080 = vmatpush1.msra.mxu0 0.0
  %2081 = vmatprep.subr.mxu0 0.0
  %2082 = vmatpush1.msra.mxu0 0.0
  %2083 = vmatprep.subr.mxu0 0.0
  %2084 = vmatpush1.msra.mxu0 0.0
  %2085 = vmatprep.subr.mxu0 0.0
  %2086 = vmatpush1.msra.mxu0 0.0
  %2087 = vmatprep.subr.mxu0 0.0
  %2088 = vmatpush1.msra.mxu0 0.0
  %2089 = vmatprep.subr.mxu0 0.0
  %2090 = vmatpush1.msra.mxu0 0.0
  %2091 = vmatprep.subr.mxu0 0.0
  %2092 = vmatpush1.msra.mxu0 0.0
  %2093 = vmatprep.subr.mxu0 0.0
  %2094 = vmatpush1.msra.mxu0 0.0
  %2095 = vmatprep.subr.mxu0 0.0
  %2096 = vmatpush1.msra.mxu0 %v2070
  %2097 = vmatprep.subr.mxu0 0.0
  %2098 = vmatpush1.msra.mxu0 %v2069
  %2099 = vmatprep.subr.mxu0 0.0
  %2100 = vmatpush1.msra.mxu0 %v2068
  %2101 = vmatprep.subr.mxu0 0.0
  %2102 = vmatpush1.msra.mxu0 %v2067
  %2103 = vmatprep.subr.mxu0 0.0
  %2104 = vmatpush2.msra.mxu0 0.0
  %2105 = vmatprep.subr.mxu0 0.0
  %2106 = vmatpush2.msra.mxu0 0.0
  %2107 = vmatprep.subr.mxu0 0.0
  %2108 = vmatpush2.msra.mxu0 0.0
  %2109 = vmatprep.subr.mxu0 0.0
  %2110 = vmatpush2.msra.mxu0 0.0
  %2111 = vmatprep.subr.mxu0 0.0
  %2112 = vmatpush2.msra.mxu0 0.0
  %2113 = vmatprep.subr.mxu0 0.0
  %2114 = vmatpush2.msra.mxu0 0.0
  %2115 = vmatprep.subr.mxu0 0.0
  %2116 = vmatpush2.msra.mxu0 0.0
  %2117 = vmatprep.subr.mxu0 0.0
  %2118 = vmatpush2.msra.mxu0 0.0
  %2119 = vmatprep.subr.mxu0 0.0
  %2120 = vmatpush2.msra.mxu0 0.0
  %2121 = vmatprep.subr.mxu0 0.0
  %2122 = vmatpush2.msra.mxu0 0.0
  %2123 = vmatprep.subr.mxu0 0.0
  %2124 = vmatpush2.msra.mxu0 0.0
  %2125 = vmatprep.subr.mxu0 0.0
  %2126 = vmatpush2.msra.mxu0 0.0
  %2127 = vmatprep.subr.mxu0 0.0
  %2128 = vmatpush2.msra.mxu0 0.0
  %2129 = vmatprep.subr.mxu0 0.0
  %2130 = vmatpush2.msra.mxu0 0.0
  %2131 = vmatprep.subr.mxu0 0.0
  %2132 = vmatpush2.msra.mxu0 0.0
  %2133 = vmatprep.subr.mxu0 0.0
  %2134 = vmatpush2.msra.mxu0 0.0
  %2135 = vmatprep.mubr.f32.mxu0 0.0
  %2136 = vmatmul.mubr.f32.gmra.mxu0 %v512
  %v2137 = vpop.f32.mrf.mxu0
  %v2138 = vadd.f32 0.0, %v2137
  %v2139 = vpop.f32.mrf.mxu0
  %2140 = vmatprep.mubr.f32.mxu0 0.0
  %2141 = vmatmul.mubr.f32.gmra.mxu0 %v515
  %v2142 = vpop.f32.mrf.mxu0
  %v2143 = vadd.f32 0.0, %v2142
  %v2144 = vpop.f32.mrf.mxu0
  %2145 = vmatprep.mubr.f32.mxu0 0.0
  %2146 = vmatmul.mubr.f32.gmra.mxu0 %v518
  %v2147 = vpop.f32.mrf.mxu0
  %v2148 = vadd.f32 0.0, %v2147
  %v2149 = vpop.f32.mrf.mxu0
  %2150 = vmatprep.mubr.f32.mxu0 0.0
  %2151 = vmatmul.mubr.f32.gmra.mxu0 %v521
  %v2152 = vpop.f32.mrf.mxu0
  %v2153 = vadd.f32 0.0, %v2152
  %v2154 = vpop.f32.mrf.mxu0
  %2155 = vmatprep.mubr.f32.mxu0 0.0
  %2156 = vmatmul.mubr.f32.gmra.mxu0 %v524
  %v2157 = vpop.f32.mrf.mxu0
  %v2158 = vadd.f32 0.0, %v2157
  %v2159 = vpop.f32.mrf.mxu0
  %2160 = vmatprep.mubr.f32.mxu0 0.0
  %2161 = vmatmul.mubr.f32.gmra.mxu0 %v527
  %v2162 = vpop.f32.mrf.mxu0
  %v2163 = vadd.f32 0.0, %v2162
  %v2164 = vpop.f32.mrf.mxu0
  %2165 = vmatprep.mubr.f32.mxu0 0.0
  %2166 = vmatmul.mubr.f32.gmra.mxu0 %v530
  %v2167 = vpop.f32.mrf.mxu0
  %v2168 = vadd.f32 0.0, %v2167
  %v2169 = vpop.f32.mrf.mxu0
  %2170 = vmatprep.mubr.f32.mxu0 0.0
  %2171 = vmatmul.mubr.f32.gmra.mxu0 %v533
  %v2172 = vpop.f32.mrf.mxu0
  %v2173 = vadd.f32 0.0, %v2172
  %v2174 = vpop.f32.mrf.mxu0
  %2175 = vmatprep.mubr.f32.mxu0 0.0
  %2176 = vmatmul.mubr.f32.gmra.mxu0 %v536
  %v2177 = vpop.f32.mrf.mxu0
  %v2178 = vadd.f32 0.0, %v2177
  %v2179 = vpop.f32.mrf.mxu0
  %2180 = vmatprep.mubr.f32.mxu0 0.0
  %2181 = vmatmul.mubr.f32.gmra.mxu0 %v539
  %v2182 = vpop.f32.mrf.mxu0
  %v2183 = vadd.f32 0.0, %v2182
  %v2184 = vpop.f32.mrf.mxu0
  %2185 = vmatprep.mubr.f32.mxu0 0.0
  %2186 = vmatmul.mubr.f32.gmra.mxu0 %v542
  %v2187 = vpop.f32.mrf.mxu0
  %v2188 = vadd.f32 0.0, %v2187
  %v2189 = vpop.f32.mrf.mxu0
  %2190 = vmatprep.mubr.f32.mxu0 0.0
  %2191 = vmatmul.mubr.f32.gmra.mxu0 %v545
  %v2192 = vpop.f32.mrf.mxu0
  %v2193 = vadd.f32 0.0, %v2192
  %v2194 = vpop.f32.mrf.mxu0
  %2195 = vmatprep.mubr.f32.mxu0 0.0
  %2196 = vmatmul.mubr.f32.gmra.mxu0 %v548
  %v2197 = vpop.f32.mrf.mxu0
  %v2198 = vadd.f32 0.0, %v2197
  %v2199 = vpop.f32.mrf.mxu0
  %2200 = vmatprep.mubr.f32.mxu0 0.0
  %2201 = vmatmul.mubr.f32.gmra.mxu0 %v551
  %v2202 = vpop.f32.mrf.mxu0
  %v2203 = vadd.f32 0.0, %v2202
  %v2204 = vpop.f32.mrf.mxu0
  %2205 = vmatprep.mubr.f32.mxu0 0.0
  %2206 = vmatmul.mubr.f32.gmra.mxu0 %v554
  %v2207 = vpop.f32.mrf.mxu0
  %v2208 = vadd.f32 0.0, %v2207
  %v2209 = vpop.f32.mrf.mxu0
  %2210 = vmatprep.mubr.f32.mxu0 0.0
  %2211 = vmatmul.mubr.f32.gmra.mxu0 %v557
  %v2212 = vpop.f32.mrf.mxu0
  %v2213 = vadd.f32 0.0, %v2212
  %v2214 = vpop.f32.mrf.mxu0
  %2215 = vdwg.mxu0
  %2232 = vrot.lane.b32.xlu0 %v2138, 32
  %v2233 = vpop.permute.xlu0 %2232
  %2234 = vrot.lane.b32.xlu0 %v2143, 32
  %v2235 = vpop.permute.xlu0 %2234
  %2236 = vrot.lane.b32.xlu0 %v2148, 32
  %v2237 = vpop.permute.xlu0 %2236
  %2238 = vrot.lane.b32.xlu0 %v2153, 32
  %v2239 = vpop.permute.xlu0 %2238
  %2240 = vrot.lane.b32.xlu0 %v2158, 32
  %v2241 = vpop.permute.xlu0 %2240
  %2242 = vrot.lane.b32.xlu0 %v2163, 32
  %v2243 = vpop.permute.xlu0 %2242
  %2244 = vrot.lane.b32.xlu0 %v2168, 32
  %v2245 = vpop.permute.xlu0 %2244
  %2246 = vrot.lane.b32.xlu0 %v2173, 32
  %v2247 = vpop.permute.xlu0 %2246
  %2248 = vrot.lane.b32.xlu0 %v2178, 32
  %v2249 = vpop.permute.xlu0 %2248
  %2250 = vrot.lane.b32.xlu0 %v2183, 32
  %v2251 = vpop.permute.xlu0 %2250
  %2252 = vrot.lane.b32.xlu0 %v2188, 32
  %v2253 = vpop.permute.xlu0 %2252
  %2254 = vrot.lane.b32.xlu0 %v2193, 32
  %v2255 = vpop.permute.xlu0 %2254
  %2256 = vrot.lane.b32.xlu0 %v2198, 32
  %v2257 = vpop.permute.xlu0 %2256
  %2258 = vrot.lane.b32.xlu0 %v2203, 32
  %v2259 = vpop.permute.xlu0 %2258
  %2260 = vrot.lane.b32.xlu0 %v2208, 32
  %v2261 = vpop.permute.xlu0 %2260
  %2262 = vrot.lane.b32.xlu0 %v2213, 32
  %v2263 = vpop.permute.xlu0 %2262
  %v2280 = vadd.f32 %v443, %v2233
  %v2281 = vadd.f32 %v446, %v2235
  %v2282 = vadd.f32 %v451, %v2237
  %v2283 = vadd.f32 %v454, %v2239
  %v2284 = vadd.f32 %v459, %v2241
  %v2285 = vadd.f32 %v462, %v2243
  %v2286 = vadd.f32 %v467, %v2245
  %v2287 = vadd.f32 %v470, %v2247
  %v2288 = vadd.f32 %v475, %v2249
  %v2289 = vadd.f32 %v478, %v2251
  %v2290 = vadd.f32 %v483, %v2253
  %v2291 = vadd.f32 %v486, %v2255
  %v2292 = vadd.f32 %v491, %v2257
  %v2293 = vadd.f32 %v494, %v2259
  %v2294 = vadd.f32 %v499, %v2261
  %v2295 = vadd.f32 %v502, %v2263
  %v2296 = vxor.u32 %v2280, 2147483648
  %v2297 = vxor.u32 %v2281, 2147483648
  %v2298 = vxor.u32 %v2282, 2147483648
  %v2299 = vxor.u32 %v2283, 2147483648
  %v2300 = vxor.u32 %v2284, 2147483648
  %v2301 = vxor.u32 %v2285, 2147483648
  %v2302 = vxor.u32 %v2286, 2147483648
  %v2303 = vxor.u32 %v2287, 2147483648
  %v2304 = vxor.u32 %v2288, 2147483648
  %v2305 = vxor.u32 %v2289, 2147483648
  %v2306 = vxor.u32 %v2290, 2147483648
  %v2307 = vxor.u32 %v2291, 2147483648
  %v2308 = vxor.u32 %v2292, 2147483648
  %v2309 = vxor.u32 %v2293, 2147483648
  %v2310 = vxor.u32 %v2294, 2147483648
  %v2311 = vxor.u32 %v2295, 2147483648
  %v2312 = vmul.f32 %v2296, 1.442695
  %v2313 = vpow.pop %v2312
  %v2314 = vmul.f32 %v2297, 1.442695
  %v2315 = vpow.pop %v2314
  %v2316 = vmul.f32 %v2298, 1.442695
  %v2317 = vpow.pop %v2316
  %v2318 = vmul.f32 %v2299, 1.442695
  %v2319 = vpow.pop %v2318
  %v2320 = vmul.f32 %v2300, 1.442695
  %v2321 = vpow.pop %v2320
  %v2322 = vmul.f32 %v2301, 1.442695
  %v2323 = vpow.pop %v2322
  %v2324 = vmul.f32 %v2302, 1.442695
  %v2325 = vpow.pop %v2324
  %v2326 = vmul.f32 %v2303, 1.442695
  %v2327 = vpow.pop %v2326
  %v2328 = vmul.f32 %v2304, 1.442695
  %v2329 = vpow.pop %v2328
  %v2330 = vmul.f32 %v2305, 1.442695
  %v2331 = vpow.pop %v2330
  %v2332 = vmul.f32 %v2306, 1.442695
  %v2333 = vpow.pop %v2332
  %v2334 = vmul.f32 %v2307, 1.442695
  %v2335 = vpow.pop %v2334
  %v2336 = vmul.f32 %v2308, 1.442695
  %v2337 = vpow.pop %v2336
  %v2338 = vmul.f32 %v2309, 1.442695
  %v2339 = vpow.pop %v2338
  %v2340 = vmul.f32 %v2310, 1.442695
  %v2341 = vpow.pop %v2340
  %v2342 = vmul.f32 %v2311, 1.442695
  %v2343 = vpow.pop %v2342
  %v2344 = vadd.f32 %v2313, 1.0
  %v2345 = vadd.f32 %v2315, 1.0
  %v2346 = vadd.f32 %v2317, 1.0
  %v2347 = vadd.f32 %v2319, 1.0
  %v2348 = vadd.f32 %v2321, 1.0
  %v2349 = vadd.f32 %v2323, 1.0
  %v2350 = vadd.f32 %v2325, 1.0
  %v2351 = vadd.f32 %v2327, 1.0
  %v2352 = vadd.f32 %v2329, 1.0
  %v2353 = vadd.f32 %v2331, 1.0
  %v2354 = vadd.f32 %v2333, 1.0
  %v2355 = vadd.f32 %v2335, 1.0
  %v2356 = vadd.f32 %v2337, 1.0
  %v2357 = vadd.f32 %v2339, 1.0
  %v2358 = vadd.f32 %v2341, 1.0
  %v2359 = vadd.f32 %v2343, 1.0
  %v2360 = vrcp.pop %v2344
  %v2361 = vmul.f32 1.0, %v2360
  %v2362 = vrcp.pop %v2345
  %v2363 = vmul.f32 1.0, %v2362
  %v2364 = vrcp.pop %v2346
  %v2365 = vmul.f32 1.0, %v2364
  %v2366 = vrcp.pop %v2347
  %v2367 = vmul.f32 1.0, %v2366
  %v2368 = vrcp.pop %v2348
  %v2369 = vmul.f32 1.0, %v2368
  %v2370 = vrcp.pop %v2349
  %v2371 = vmul.f32 1.0, %v2370
  %v2372 = vrcp.pop %v2350
  %v2373 = vmul.f32 1.0, %v2372
  %v2374 = vrcp.pop %v2351
  %v2375 = vmul.f32 1.0, %v2374
  %v2376 = vrcp.pop %v2352
  %v2377 = vmul.f32 1.0, %v2376
  %v2378 = vrcp.pop %v2353
  %v2379 = vmul.f32 1.0, %v2378
  %v2380 = vrcp.pop %v2354
  %v2381 = vmul.f32 1.0, %v2380
  %v2382 = vrcp.pop %v2355
  %v2383 = vmul.f32 1.0, %v2382
  %v2384 = vrcp.pop %v2356
  %v2385 = vmul.f32 1.0, %v2384
  %v2386 = vrcp.pop %v2357
  %v2387 = vmul.f32 1.0, %v2386
  %v2388 = vrcp.pop %v2358
  %v2389 = vmul.f32 1.0, %v2388
  %v2390 = vrcp.pop %v2359
  %v2391 = vmul.f32 1.0, %v2390
  %v2392 = vmul.f32 %v2377, 2.0
  %v2393 = vmul.f32 %v2379, 2.0
  %v2394 = vmul.f32 %v2381, 2.0
  %v2395 = vmul.f32 %v2383, 2.0
  %v2396 = vsub.f32 %v2392, 1.0
  %v2397 = vsub.f32 %v2393, 1.0
  %v2398 = vsub.f32 %v2394, 1.0
  %v2399 = vsub.f32 %v2395, 1.0
  %2404 = vrot.lane.b32.xlu0 %v2047, 32
  %v2405 = vpop.permute.xlu0 %2404
  %2406 = vrot.lane.b32.xlu0 %v2048, 32
  %v2407 = vpop.permute.xlu0 %2406
  %2408 = vrot.lane.b32.xlu0 %v2049, 32
  %v2409 = vpop.permute.xlu0 %2408
  %2410 = vrot.lane.b32.xlu0 %v2050, 32
  %v2411 = vpop.permute.xlu0 %2410
  %v2416 = vmul.f32 %v2369, %v2405
  %v2417 = vmul.f32 %v2371, %v2407
  %v2418 = vmul.f32 %v2373, %v2409
  %v2419 = vmul.f32 %v2375, %v2411
  %v2420 = vmul.f32 %v2361, %v2396
  %v2421 = vmul.f32 %v2363, %v2397
  %v2422 = vmul.f32 %v2365, %v2398
  %v2423 = vmul.f32 %v2367, %v2399
  %v2424 = vadd.f32 %v2416, %v2420
  %v2425 = vadd.f32 %v2417, %v2421
  %v2426 = vadd.f32 %v2418, %v2422
  %v2427 = vadd.f32 %v2419, %v2423
  %v2428 = vtanh.pop %v2424
  %v2429 = vtanh.pop %v2425
  %v2430 = vtanh.pop %v2426
  %v2431 = vtanh.pop %v2427
  %v2432 = vmul.f32 %v2385, %v2428
  %v2433 = vmul.f32 %v2387, %v2429
  %v2434 = vmul.f32 %v2389, %v2430
  %v2435 = vmul.f32 %v2391, %v2431
  %vm2436 = vcmp.gt.s32.totalorder %v509, 4
  %2441 = vrot.lane.b32.xlu0 %v2424, 96
  %v2442 = vpop.permute.xlu0 %2441
  %2443 = vrot.lane.b32.xlu0 %v2425, 96
  %v2444 = vpop.permute.xlu0 %2443
  %2445 = vrot.lane.b32.xlu0 %v2426, 96
  %v2446 = vpop.permute.xlu0 %2445
  %2447 = vrot.lane.b32.xlu0 %v2427, 96
  %v2448 = vpop.permute.xlu0 %2447
  %v2453 = vsel %vm2436, %v2442, %v2047
  %v2454 = vsel %vm2436, %v2444, %v2048
  %v2455 = vsel %vm2436, %v2446, %v2049
  %v2456 = vsel %vm2436, %v2448, %v2050
  %2461 = vrot.lane.b32.xlu0 %v2432, 96
  %v2462 = vpop.permute.xlu0 %2461
  %2463 = vrot.lane.b32.xlu0 %v2433, 96
  %v2464 = vpop.permute.xlu0 %2463
  %2465 = vrot.lane.b32.xlu0 %v2434, 96
  %v2466 = vpop.permute.xlu0 %2465
  %2467 = vrot.lane.b32.xlu0 %v2435, 96
  %v2468 = vpop.permute.xlu0 %2467
  %v2473 = vsel %vm2436, %v2462, %v2067
  %v2474 = vsel %vm2436, %v2464, %v2068
  %v2475 = vsel %vm2436, %v2466, %v2069
  %v2476 = vsel %vm2436, %v2468, %v2070
  %2477 = vmatprep.subr.mxu0 0.0
  %2478 = vmatpush1.msra.mxu0 0.0
  %2479 = vmatprep.subr.mxu0 0.0
  %2480 = vmatpush1.msra.mxu0 0.0
  %2481 = vmatprep.subr.mxu0 0.0
  %2482 = vmatpush1.msra.mxu0 0.0
  %2483 = vmatprep.subr.mxu0 0.0
  %2484 = vmatpush1.msra.mxu0 0.0
  %2485 = vmatprep.subr.mxu0 0.0
  %2486 = vmatpush1.msra.mxu0 0.0
  %2487 = vmatprep.subr.mxu0 0.0
  %2488 = vmatpush1.msra.mxu0 0.0
  %2489 = vmatprep.subr.mxu0 0.0
  %2490 = vmatpush1.msra.mxu0 0.0
  %2491 = vmatprep.subr.mxu0 0.0
  %2492 = vmatpush1.msra.mxu0 0.0
  %2493 = vmatprep.subr.mxu0 0.0
  %2494 = vmatpush1.msra.mxu0 0.0
  %2495 = vmatprep.subr.mxu0 0.0
  %2496 = vmatpush1.msra.mxu0 0.0
  %2497 = vmatprep.subr.mxu0 0.0
  %2498 = vmatpush1.msra.mxu0 0.0
  %2499 = vmatprep.subr.mxu0 0.0
  %2500 = vmatpush1.msra.mxu0 0.0
  %2501 = vmatprep.subr.mxu0 0.0
  %2502 = vmatpush1.msra.mxu0 %v2476
  %2503 = vmatprep.subr.mxu0 0.0
  %2504 = vmatpush1.msra.mxu0 %v2475
  %2505 = vmatprep.subr.mxu0 0.0
  %2506 = vmatpush1.msra.mxu0 %v2474
  %2507 = vmatprep.subr.mxu0 0.0
  %2508 = vmatpush1.msra.mxu0 %v2473
  %2509 = vmatprep.subr.mxu0 0.0
  %2510 = vmatpush2.msra.mxu0 0.0
  %2511 = vmatprep.subr.mxu0 0.0
  %2512 = vmatpush2.msra.mxu0 0.0
  %2513 = vmatprep.subr.mxu0 0.0
  %2514 = vmatpush2.msra.mxu0 0.0
  %2515 = vmatprep.subr.mxu0 0.0
  %2516 = vmatpush2.msra.mxu0 0.0
  %2517 = vmatprep.subr.mxu0 0.0
  %2518 = vmatpush2.msra.mxu0 0.0
  %2519 = vmatprep.subr.mxu0 0.0
  %2520 = vmatpush2.msra.mxu0 0.0
  %2521 = vmatprep.subr.mxu0 0.0
  %2522 = vmatpush2.msra.mxu0 0.0
  %2523 = vmatprep.subr.mxu0 0.0
  %2524 = vmatpush2.msra.mxu0 0.0
  %2525 = vmatprep.subr.mxu0 0.0
  %2526 = vmatpush2.msra.mxu0 0.0
  %2527 = vmatprep.subr.mxu0 0.0
  %2528 = vmatpush2.msra.mxu0 0.0
  %2529 = vmatprep.subr.mxu0 0.0
  %2530 = vmatpush2.msra.mxu0 0.0
  %2531 = vmatprep.subr.mxu0 0.0
  %2532 = vmatpush2.msra.mxu0 0.0
  %2533 = vmatprep.subr.mxu0 0.0
  %2534 = vmatpush2.msra.mxu0 0.0
  %2535 = vmatprep.subr.mxu0 0.0
  %2536 = vmatpush2.msra.mxu0 0.0
  %2537 = vmatprep.subr.mxu0 0.0
  %2538 = vmatpush2.msra.mxu0 0.0
  %2539 = vmatprep.subr.mxu0 0.0
  %2540 = vmatpush2.msra.mxu0 0.0
  %2541 = vmatprep.mubr.f32.mxu0 0.0
  %2542 = vmatmul.mubr.f32.gmra.mxu0 %v512
  %v2543 = vpop.f32.mrf.mxu0
  %v2544 = vadd.f32 0.0, %v2543
  %v2545 = vpop.f32.mrf.mxu0
  %2546 = vmatprep.mubr.f32.mxu0 0.0
  %2547 = vmatmul.mubr.f32.gmra.mxu0 %v515
  %v2548 = vpop.f32.mrf.mxu0
  %v2549 = vadd.f32 0.0, %v2548
  %v2550 = vpop.f32.mrf.mxu0
  %2551 = vmatprep.mubr.f32.mxu0 0.0
  %2552 = vmatmul.mubr.f32.gmra.mxu0 %v518
  %v2553 = vpop.f32.mrf.mxu0
  %v2554 = vadd.f32 0.0, %v2553
  %v2555 = vpop.f32.mrf.mxu0
  %2556 = vmatprep.mubr.f32.mxu0 0.0
  %2557 = vmatmul.mubr.f32.gmra.mxu0 %v521
  %v2558 = vpop.f32.mrf.mxu0
  %v2559 = vadd.f32 0.0, %v2558
  %v2560 = vpop.f32.mrf.mxu0
  %2561 = vmatprep.mubr.f32.mxu0 0.0
  %2562 = vmatmul.mubr.f32.gmra.mxu0 %v524
  %v2563 = vpop.f32.mrf.mxu0
  %v2564 = vadd.f32 0.0, %v2563
  %v2565 = vpop.f32.mrf.mxu0
  %2566 = vmatprep.mubr.f32.mxu0 0.0
  %2567 = vmatmul.mubr.f32.gmra.mxu0 %v527
  %v2568 = vpop.f32.mrf.mxu0
  %v2569 = vadd.f32 0.0, %v2568
  %v2570 = vpop.f32.mrf.mxu0
  %2571 = vmatprep.mubr.f32.mxu0 0.0
  %2572 = vmatmul.mubr.f32.gmra.mxu0 %v530
  %v2573 = vpop.f32.mrf.mxu0
  %v2574 = vadd.f32 0.0, %v2573
  %v2575 = vpop.f32.mrf.mxu0
  %2576 = vmatprep.mubr.f32.mxu0 0.0
  %2577 = vmatmul.mubr.f32.gmra.mxu0 %v533
  %v2578 = vpop.f32.mrf.mxu0
  %v2579 = vadd.f32 0.0, %v2578
  %v2580 = vpop.f32.mrf.mxu0
  %2581 = vmatprep.mubr.f32.mxu0 0.0
  %2582 = vmatmul.mubr.f32.gmra.mxu0 %v536
  %v2583 = vpop.f32.mrf.mxu0
  %v2584 = vadd.f32 0.0, %v2583
  %v2585 = vpop.f32.mrf.mxu0
  %2586 = vmatprep.mubr.f32.mxu0 0.0
  %2587 = vmatmul.mubr.f32.gmra.mxu0 %v539
  %v2588 = vpop.f32.mrf.mxu0
  %v2589 = vadd.f32 0.0, %v2588
  %v2590 = vpop.f32.mrf.mxu0
  %2591 = vmatprep.mubr.f32.mxu0 0.0
  %2592 = vmatmul.mubr.f32.gmra.mxu0 %v542
  %v2593 = vpop.f32.mrf.mxu0
  %v2594 = vadd.f32 0.0, %v2593
  %v2595 = vpop.f32.mrf.mxu0
  %2596 = vmatprep.mubr.f32.mxu0 0.0
  %2597 = vmatmul.mubr.f32.gmra.mxu0 %v545
  %v2598 = vpop.f32.mrf.mxu0
  %v2599 = vadd.f32 0.0, %v2598
  %v2600 = vpop.f32.mrf.mxu0
  %2601 = vmatprep.mubr.f32.mxu0 0.0
  %2602 = vmatmul.mubr.f32.gmra.mxu0 %v548
  %v2603 = vpop.f32.mrf.mxu0
  %v2604 = vadd.f32 0.0, %v2603
  %v2605 = vpop.f32.mrf.mxu0
  %2606 = vmatprep.mubr.f32.mxu0 0.0
  %2607 = vmatmul.mubr.f32.gmra.mxu0 %v551
  %v2608 = vpop.f32.mrf.mxu0
  %v2609 = vadd.f32 0.0, %v2608
  %v2610 = vpop.f32.mrf.mxu0
  %2611 = vmatprep.mubr.f32.mxu0 0.0
  %2612 = vmatmul.mubr.f32.gmra.mxu0 %v554
  %v2613 = vpop.f32.mrf.mxu0
  %v2614 = vadd.f32 0.0, %v2613
  %v2615 = vpop.f32.mrf.mxu0
  %2616 = vmatprep.mubr.f32.mxu0 0.0
  %2617 = vmatmul.mubr.f32.gmra.mxu0 %v557
  %v2618 = vpop.f32.mrf.mxu0
  %v2619 = vadd.f32 0.0, %v2618
  %v2620 = vpop.f32.mrf.mxu0
  %2621 = vdwg.mxu0
  %2638 = vrot.lane.b32.xlu0 %v2544, 40
  %v2639 = vpop.permute.xlu0 %2638
  %2640 = vrot.lane.b32.xlu0 %v2549, 40
  %v2641 = vpop.permute.xlu0 %2640
  %2642 = vrot.lane.b32.xlu0 %v2554, 40
  %v2643 = vpop.permute.xlu0 %2642
  %2644 = vrot.lane.b32.xlu0 %v2559, 40
  %v2645 = vpop.permute.xlu0 %2644
  %2646 = vrot.lane.b32.xlu0 %v2564, 40
  %v2647 = vpop.permute.xlu0 %2646
  %2648 = vrot.lane.b32.xlu0 %v2569, 40
  %v2649 = vpop.permute.xlu0 %2648
  %2650 = vrot.lane.b32.xlu0 %v2574, 40
  %v2651 = vpop.permute.xlu0 %2650
  %2652 = vrot.lane.b32.xlu0 %v2579, 40
  %v2653 = vpop.permute.xlu0 %2652
  %2654 = vrot.lane.b32.xlu0 %v2584, 40
  %v2655 = vpop.permute.xlu0 %2654
  %2656 = vrot.lane.b32.xlu0 %v2589, 40
  %v2657 = vpop.permute.xlu0 %2656
  %2658 = vrot.lane.b32.xlu0 %v2594, 40
  %v2659 = vpop.permute.xlu0 %2658
  %2660 = vrot.lane.b32.xlu0 %v2599, 40
  %v2661 = vpop.permute.xlu0 %2660
  %2662 = vrot.lane.b32.xlu0 %v2604, 40
  %v2663 = vpop.permute.xlu0 %2662
  %2664 = vrot.lane.b32.xlu0 %v2609, 40
  %v2665 = vpop.permute.xlu0 %2664
  %2666 = vrot.lane.b32.xlu0 %v2614, 40
  %v2667 = vpop.permute.xlu0 %2666
  %2668 = vrot.lane.b32.xlu0 %v2619, 40
  %v2669 = vpop.permute.xlu0 %2668
  %v2686 = vadd.f32 %v443, %v2639
  %v2687 = vadd.f32 %v446, %v2641
  %v2688 = vadd.f32 %v451, %v2643
  %v2689 = vadd.f32 %v454, %v2645
  %v2690 = vadd.f32 %v459, %v2647
  %v2691 = vadd.f32 %v462, %v2649
  %v2692 = vadd.f32 %v467, %v2651
  %v2693 = vadd.f32 %v470, %v2653
  %v2694 = vadd.f32 %v475, %v2655
  %v2695 = vadd.f32 %v478, %v2657
  %v2696 = vadd.f32 %v483, %v2659
  %v2697 = vadd.f32 %v486, %v2661
  %v2698 = vadd.f32 %v491, %v2663
  %v2699 = vadd.f32 %v494, %v2665
  %v2700 = vadd.f32 %v499, %v2667
  %v2701 = vadd.f32 %v502, %v2669
  %v2702 = vxor.u32 %v2686, 2147483648
  %v2703 = vxor.u32 %v2687, 2147483648
  %v2704 = vxor.u32 %v2688, 2147483648
  %v2705 = vxor.u32 %v2689, 2147483648
  %v2706 = vxor.u32 %v2690, 2147483648
  %v2707 = vxor.u32 %v2691, 2147483648
  %v2708 = vxor.u32 %v2692, 2147483648
  %v2709 = vxor.u32 %v2693, 2147483648
  %v2710 = vxor.u32 %v2694, 2147483648
  %v2711 = vxor.u32 %v2695, 2147483648
  %v2712 = vxor.u32 %v2696, 2147483648
  %v2713 = vxor.u32 %v2697, 2147483648
  %v2714 = vxor.u32 %v2698, 2147483648
  %v2715 = vxor.u32 %v2699, 2147483648
  %v2716 = vxor.u32 %v2700, 2147483648
  %v2717 = vxor.u32 %v2701, 2147483648
  %v2718 = vmul.f32 %v2702, 1.442695
  %v2719 = vpow.pop %v2718
  %v2720 = vmul.f32 %v2703, 1.442695
  %v2721 = vpow.pop %v2720
  %v2722 = vmul.f32 %v2704, 1.442695
  %v2723 = vpow.pop %v2722
  %v2724 = vmul.f32 %v2705, 1.442695
  %v2725 = vpow.pop %v2724
  %v2726 = vmul.f32 %v2706, 1.442695
  %v2727 = vpow.pop %v2726
  %v2728 = vmul.f32 %v2707, 1.442695
  %v2729 = vpow.pop %v2728
  %v2730 = vmul.f32 %v2708, 1.442695
  %v2731 = vpow.pop %v2730
  %v2732 = vmul.f32 %v2709, 1.442695
  %v2733 = vpow.pop %v2732
  %v2734 = vmul.f32 %v2710, 1.442695
  %v2735 = vpow.pop %v2734
  %v2736 = vmul.f32 %v2711, 1.442695
  %v2737 = vpow.pop %v2736
  %v2738 = vmul.f32 %v2712, 1.442695
  %v2739 = vpow.pop %v2738
  %v2740 = vmul.f32 %v2713, 1.442695
  %v2741 = vpow.pop %v2740
  %v2742 = vmul.f32 %v2714, 1.442695
  %v2743 = vpow.pop %v2742
  %v2744 = vmul.f32 %v2715, 1.442695
  %v2745 = vpow.pop %v2744
  %v2746 = vmul.f32 %v2716, 1.442695
  %v2747 = vpow.pop %v2746
  %v2748 = vmul.f32 %v2717, 1.442695
  %v2749 = vpow.pop %v2748
  %v2750 = vadd.f32 %v2719, 1.0
  %v2751 = vadd.f32 %v2721, 1.0
  %v2752 = vadd.f32 %v2723, 1.0
  %v2753 = vadd.f32 %v2725, 1.0
  %v2754 = vadd.f32 %v2727, 1.0
  %v2755 = vadd.f32 %v2729, 1.0
  %v2756 = vadd.f32 %v2731, 1.0
  %v2757 = vadd.f32 %v2733, 1.0
  %v2758 = vadd.f32 %v2735, 1.0
  %v2759 = vadd.f32 %v2737, 1.0
  %v2760 = vadd.f32 %v2739, 1.0
  %v2761 = vadd.f32 %v2741, 1.0
  %v2762 = vadd.f32 %v2743, 1.0
  %v2763 = vadd.f32 %v2745, 1.0
  %v2764 = vadd.f32 %v2747, 1.0
  %v2765 = vadd.f32 %v2749, 1.0
  %v2766 = vrcp.pop %v2750
  %v2767 = vmul.f32 1.0, %v2766
  %v2768 = vrcp.pop %v2751
  %v2769 = vmul.f32 1.0, %v2768
  %v2770 = vrcp.pop %v2752
  %v2771 = vmul.f32 1.0, %v2770
  %v2772 = vrcp.pop %v2753
  %v2773 = vmul.f32 1.0, %v2772
  %v2774 = vrcp.pop %v2754
  %v2775 = vmul.f32 1.0, %v2774
  %v2776 = vrcp.pop %v2755
  %v2777 = vmul.f32 1.0, %v2776
  %v2778 = vrcp.pop %v2756
  %v2779 = vmul.f32 1.0, %v2778
  %v2780 = vrcp.pop %v2757
  %v2781 = vmul.f32 1.0, %v2780
  %v2782 = vrcp.pop %v2758
  %v2783 = vmul.f32 1.0, %v2782
  %v2784 = vrcp.pop %v2759
  %v2785 = vmul.f32 1.0, %v2784
  %v2786 = vrcp.pop %v2760
  %v2787 = vmul.f32 1.0, %v2786
  %v2788 = vrcp.pop %v2761
  %v2789 = vmul.f32 1.0, %v2788
  %v2790 = vrcp.pop %v2762
  %v2791 = vmul.f32 1.0, %v2790
  %v2792 = vrcp.pop %v2763
  %v2793 = vmul.f32 1.0, %v2792
  %v2794 = vrcp.pop %v2764
  %v2795 = vmul.f32 1.0, %v2794
  %v2796 = vrcp.pop %v2765
  %v2797 = vmul.f32 1.0, %v2796
  %v2798 = vmul.f32 %v2783, 2.0
  %v2799 = vmul.f32 %v2785, 2.0
  %v2800 = vmul.f32 %v2787, 2.0
  %v2801 = vmul.f32 %v2789, 2.0
  %v2802 = vsub.f32 %v2798, 1.0
  %v2803 = vsub.f32 %v2799, 1.0
  %v2804 = vsub.f32 %v2800, 1.0
  %v2805 = vsub.f32 %v2801, 1.0
  %2810 = vrot.lane.b32.xlu0 %v2453, 40
  %v2811 = vpop.permute.xlu0 %2810
  %2812 = vrot.lane.b32.xlu0 %v2454, 40
  %v2813 = vpop.permute.xlu0 %2812
  %2814 = vrot.lane.b32.xlu0 %v2455, 40
  %v2815 = vpop.permute.xlu0 %2814
  %2816 = vrot.lane.b32.xlu0 %v2456, 40
  %v2817 = vpop.permute.xlu0 %2816
  %v2822 = vmul.f32 %v2775, %v2811
  %v2823 = vmul.f32 %v2777, %v2813
  %v2824 = vmul.f32 %v2779, %v2815
  %v2825 = vmul.f32 %v2781, %v2817
  %v2826 = vmul.f32 %v2767, %v2802
  %v2827 = vmul.f32 %v2769, %v2803
  %v2828 = vmul.f32 %v2771, %v2804
  %v2829 = vmul.f32 %v2773, %v2805
  %v2830 = vadd.f32 %v2822, %v2826
  %v2831 = vadd.f32 %v2823, %v2827
  %v2832 = vadd.f32 %v2824, %v2828
  %v2833 = vadd.f32 %v2825, %v2829
  %v2834 = vtanh.pop %v2830
  %v2835 = vtanh.pop %v2831
  %v2836 = vtanh.pop %v2832
  %v2837 = vtanh.pop %v2833
  %v2838 = vmul.f32 %v2791, %v2834
  %v2839 = vmul.f32 %v2793, %v2835
  %v2840 = vmul.f32 %v2795, %v2836
  %v2841 = vmul.f32 %v2797, %v2837
  %vm2842 = vcmp.gt.s32.totalorder %v509, 5
  %2847 = vrot.lane.b32.xlu0 %v2830, 88
  %v2848 = vpop.permute.xlu0 %2847
  %2849 = vrot.lane.b32.xlu0 %v2831, 88
  %v2850 = vpop.permute.xlu0 %2849
  %2851 = vrot.lane.b32.xlu0 %v2832, 88
  %v2852 = vpop.permute.xlu0 %2851
  %2853 = vrot.lane.b32.xlu0 %v2833, 88
  %v2854 = vpop.permute.xlu0 %2853
  %v2859 = vsel %vm2842, %v2848, %v2453
  %v2860 = vsel %vm2842, %v2850, %v2454
  %v2861 = vsel %vm2842, %v2852, %v2455
  %v2862 = vsel %vm2842, %v2854, %v2456
  %2867 = vrot.lane.b32.xlu0 %v2838, 88
  %v2868 = vpop.permute.xlu0 %2867
  %2869 = vrot.lane.b32.xlu0 %v2839, 88
  %v2870 = vpop.permute.xlu0 %2869
  %2871 = vrot.lane.b32.xlu0 %v2840, 88
  %v2872 = vpop.permute.xlu0 %2871
  %2873 = vrot.lane.b32.xlu0 %v2841, 88
  %v2874 = vpop.permute.xlu0 %2873
  %v2879 = vsel %vm2842, %v2868, %v2473
  %v2880 = vsel %vm2842, %v2870, %v2474
  %v2881 = vsel %vm2842, %v2872, %v2475
  %v2882 = vsel %vm2842, %v2874, %v2476
  %2883 = vmatprep.subr.mxu0 0.0
  %2884 = vmatpush1.msra.mxu0 0.0
  %2885 = vmatprep.subr.mxu0 0.0
  %2886 = vmatpush1.msra.mxu0 0.0
  %2887 = vmatprep.subr.mxu0 0.0
  %2888 = vmatpush1.msra.mxu0 0.0
  %2889 = vmatprep.subr.mxu0 0.0
  %2890 = vmatpush1.msra.mxu0 0.0
  %2891 = vmatprep.subr.mxu0 0.0
  %2892 = vmatpush1.msra.mxu0 0.0
  %2893 = vmatprep.subr.mxu0 0.0
  %2894 = vmatpush1.msra.mxu0 0.0
  %2895 = vmatprep.subr.mxu0 0.0
  %2896 = vmatpush1.msra.mxu0 0.0
  %2897 = vmatprep.subr.mxu0 0.0
  %2898 = vmatpush1.msra.mxu0 0.0
  %2899 = vmatprep.subr.mxu0 0.0
  %2900 = vmatpush1.msra.mxu0 0.0
  %2901 = vmatprep.subr.mxu0 0.0
  %2902 = vmatpush1.msra.mxu0 0.0
  %2903 = vmatprep.subr.mxu0 0.0
  %2904 = vmatpush1.msra.mxu0 0.0
  %2905 = vmatprep.subr.mxu0 0.0
  %2906 = vmatpush1.msra.mxu0 0.0
  %2907 = vmatprep.subr.mxu0 0.0
  %2908 = vmatpush1.msra.mxu0 %v2882
  %2909 = vmatprep.subr.mxu0 0.0
  %2910 = vmatpush1.msra.mxu0 %v2881
  %2911 = vmatprep.subr.mxu0 0.0
  %2912 = vmatpush1.msra.mxu0 %v2880
  %2913 = vmatprep.subr.mxu0 0.0
  %2914 = vmatpush1.msra.mxu0 %v2879
  %2915 = vmatprep.subr.mxu0 0.0
  %2916 = vmatpush2.msra.mxu0 0.0
  %2917 = vmatprep.subr.mxu0 0.0
  %2918 = vmatpush2.msra.mxu0 0.0
  %2919 = vmatprep.subr.mxu0 0.0
  %2920 = vmatpush2.msra.mxu0 0.0
  %2921 = vmatprep.subr.mxu0 0.0
  %2922 = vmatpush2.msra.mxu0 0.0
  %2923 = vmatprep.subr.mxu0 0.0
  %2924 = vmatpush2.msra.mxu0 0.0
  %2925 = vmatprep.subr.mxu0 0.0
  %2926 = vmatpush2.msra.mxu0 0.0
  %2927 = vmatprep.subr.mxu0 0.0
  %2928 = vmatpush2.msra.mxu0 0.0
  %2929 = vmatprep.subr.mxu0 0.0
  %2930 = vmatpush2.msra.mxu0 0.0
  %2931 = vmatprep.subr.mxu0 0.0
  %2932 = vmatpush2.msra.mxu0 0.0
  %2933 = vmatprep.subr.mxu0 0.0
  %2934 = vmatpush2.msra.mxu0 0.0
  %2935 = vmatprep.subr.mxu0 0.0
  %2936 = vmatpush2.msra.mxu0 0.0
  %2937 = vmatprep.subr.mxu0 0.0
  %2938 = vmatpush2.msra.mxu0 0.0
  %2939 = vmatprep.subr.mxu0 0.0
  %2940 = vmatpush2.msra.mxu0 0.0
  %2941 = vmatprep.subr.mxu0 0.0
  %2942 = vmatpush2.msra.mxu0 0.0
  %2943 = vmatprep.subr.mxu0 0.0
  %2944 = vmatpush2.msra.mxu0 0.0
  %2945 = vmatprep.subr.mxu0 0.0
  %2946 = vmatpush2.msra.mxu0 0.0
  %2947 = vmatprep.mubr.f32.mxu0 0.0
  %2948 = vmatmul.mubr.f32.gmra.mxu0 %v512
  %v2949 = vpop.f32.mrf.mxu0
  %v2950 = vadd.f32 0.0, %v2949
  %v2951 = vpop.f32.mrf.mxu0
  %2952 = vmatprep.mubr.f32.mxu0 0.0
  %2953 = vmatmul.mubr.f32.gmra.mxu0 %v515
  %v2954 = vpop.f32.mrf.mxu0
  %v2955 = vadd.f32 0.0, %v2954
  %v2956 = vpop.f32.mrf.mxu0
  %2957 = vmatprep.mubr.f32.mxu0 0.0
  %2958 = vmatmul.mubr.f32.gmra.mxu0 %v518
  %v2959 = vpop.f32.mrf.mxu0
  %v2960 = vadd.f32 0.0, %v2959
  %v2961 = vpop.f32.mrf.mxu0
  %2962 = vmatprep.mubr.f32.mxu0 0.0
  %2963 = vmatmul.mubr.f32.gmra.mxu0 %v521
  %v2964 = vpop.f32.mrf.mxu0
  %v2965 = vadd.f32 0.0, %v2964
  %v2966 = vpop.f32.mrf.mxu0
  %2967 = vmatprep.mubr.f32.mxu0 0.0
  %2968 = vmatmul.mubr.f32.gmra.mxu0 %v524
  %v2969 = vpop.f32.mrf.mxu0
  %v2970 = vadd.f32 0.0, %v2969
  %v2971 = vpop.f32.mrf.mxu0
  %2972 = vmatprep.mubr.f32.mxu0 0.0
  %2973 = vmatmul.mubr.f32.gmra.mxu0 %v527
  %v2974 = vpop.f32.mrf.mxu0
  %v2975 = vadd.f32 0.0, %v2974
  %v2976 = vpop.f32.mrf.mxu0
  %2977 = vmatprep.mubr.f32.mxu0 0.0
  %2978 = vmatmul.mubr.f32.gmra.mxu0 %v530
  %v2979 = vpop.f32.mrf.mxu0
  %v2980 = vadd.f32 0.0, %v2979
  %v2981 = vpop.f32.mrf.mxu0
  %2982 = vmatprep.mubr.f32.mxu0 0.0
  %2983 = vmatmul.mubr.f32.gmra.mxu0 %v533
  %v2984 = vpop.f32.mrf.mxu0
  %v2985 = vadd.f32 0.0, %v2984
  %v2986 = vpop.f32.mrf.mxu0
  %2987 = vmatprep.mubr.f32.mxu0 0.0
  %2988 = vmatmul.mubr.f32.gmra.mxu0 %v536
  %v2989 = vpop.f32.mrf.mxu0
  %v2990 = vadd.f32 0.0, %v2989
  %v2991 = vpop.f32.mrf.mxu0
  %2992 = vmatprep.mubr.f32.mxu0 0.0
  %2993 = vmatmul.mubr.f32.gmra.mxu0 %v539
  %v2994 = vpop.f32.mrf.mxu0
  %v2995 = vadd.f32 0.0, %v2994
  %v2996 = vpop.f32.mrf.mxu0
  %2997 = vmatprep.mubr.f32.mxu0 0.0
  %2998 = vmatmul.mubr.f32.gmra.mxu0 %v542
  %v2999 = vpop.f32.mrf.mxu0
  %v3000 = vadd.f32 0.0, %v2999
  %v3001 = vpop.f32.mrf.mxu0
  %3002 = vmatprep.mubr.f32.mxu0 0.0
  %3003 = vmatmul.mubr.f32.gmra.mxu0 %v545
  %v3004 = vpop.f32.mrf.mxu0
  %v3005 = vadd.f32 0.0, %v3004
  %v3006 = vpop.f32.mrf.mxu0
  %3007 = vmatprep.mubr.f32.mxu0 0.0
  %3008 = vmatmul.mubr.f32.gmra.mxu0 %v548
  %v3009 = vpop.f32.mrf.mxu0
  %v3010 = vadd.f32 0.0, %v3009
  %v3011 = vpop.f32.mrf.mxu0
  %3012 = vmatprep.mubr.f32.mxu0 0.0
  %3013 = vmatmul.mubr.f32.gmra.mxu0 %v551
  %v3014 = vpop.f32.mrf.mxu0
  %v3015 = vadd.f32 0.0, %v3014
  %v3016 = vpop.f32.mrf.mxu0
  %3017 = vmatprep.mubr.f32.mxu0 0.0
  %3018 = vmatmul.mubr.f32.gmra.mxu0 %v554
  %v3019 = vpop.f32.mrf.mxu0
  %v3020 = vadd.f32 0.0, %v3019
  %v3021 = vpop.f32.mrf.mxu0
  %3022 = vmatprep.mubr.f32.mxu0 0.0
  %3023 = vmatmul.mubr.f32.gmra.mxu0 %v557
  %v3024 = vpop.f32.mrf.mxu0
  %v3025 = vadd.f32 0.0, %v3024
  %v3026 = vpop.f32.mrf.mxu0
  %3027 = vdwg.mxu0
  %3044 = vrot.lane.b32.xlu0 %v2950, 48
  %v3045 = vpop.permute.xlu0 %3044
  %3046 = vrot.lane.b32.xlu0 %v2955, 48
  %v3047 = vpop.permute.xlu0 %3046
  %3048 = vrot.lane.b32.xlu0 %v2960, 48
  %v3049 = vpop.permute.xlu0 %3048
  %3050 = vrot.lane.b32.xlu0 %v2965, 48
  %v3051 = vpop.permute.xlu0 %3050
  %3052 = vrot.lane.b32.xlu0 %v2970, 48
  %v3053 = vpop.permute.xlu0 %3052
  %3054 = vrot.lane.b32.xlu0 %v2975, 48
  %v3055 = vpop.permute.xlu0 %3054
  %3056 = vrot.lane.b32.xlu0 %v2980, 48
  %v3057 = vpop.permute.xlu0 %3056
  %3058 = vrot.lane.b32.xlu0 %v2985, 48
  %v3059 = vpop.permute.xlu0 %3058
  %3060 = vrot.lane.b32.xlu0 %v2990, 48
  %v3061 = vpop.permute.xlu0 %3060
  %3062 = vrot.lane.b32.xlu0 %v2995, 48
  %v3063 = vpop.permute.xlu0 %3062
  %3064 = vrot.lane.b32.xlu0 %v3000, 48
  %v3065 = vpop.permute.xlu0 %3064
  %3066 = vrot.lane.b32.xlu0 %v3005, 48
  %v3067 = vpop.permute.xlu0 %3066
  %3068 = vrot.lane.b32.xlu0 %v3010, 48
  %v3069 = vpop.permute.xlu0 %3068
  %3070 = vrot.lane.b32.xlu0 %v3015, 48
  %v3071 = vpop.permute.xlu0 %3070
  %3072 = vrot.lane.b32.xlu0 %v3020, 48
  %v3073 = vpop.permute.xlu0 %3072
  %3074 = vrot.lane.b32.xlu0 %v3025, 48
  %v3075 = vpop.permute.xlu0 %3074
  %v3092 = vadd.f32 %v443, %v3045
  %v3093 = vadd.f32 %v446, %v3047
  %v3094 = vadd.f32 %v451, %v3049
  %v3095 = vadd.f32 %v454, %v3051
  %v3096 = vadd.f32 %v459, %v3053
  %v3097 = vadd.f32 %v462, %v3055
  %v3098 = vadd.f32 %v467, %v3057
  %v3099 = vadd.f32 %v470, %v3059
  %v3100 = vadd.f32 %v475, %v3061
  %v3101 = vadd.f32 %v478, %v3063
  %v3102 = vadd.f32 %v483, %v3065
  %v3103 = vadd.f32 %v486, %v3067
  %v3104 = vadd.f32 %v491, %v3069
  %v3105 = vadd.f32 %v494, %v3071
  %v3106 = vadd.f32 %v499, %v3073
  %v3107 = vadd.f32 %v502, %v3075
  %v3108 = vxor.u32 %v3092, 2147483648
  %v3109 = vxor.u32 %v3093, 2147483648
  %v3110 = vxor.u32 %v3094, 2147483648
  %v3111 = vxor.u32 %v3095, 2147483648
  %v3112 = vxor.u32 %v3096, 2147483648
  %v3113 = vxor.u32 %v3097, 2147483648
  %v3114 = vxor.u32 %v3098, 2147483648
  %v3115 = vxor.u32 %v3099, 2147483648
  %v3116 = vxor.u32 %v3100, 2147483648
  %v3117 = vxor.u32 %v3101, 2147483648
  %v3118 = vxor.u32 %v3102, 2147483648
  %v3119 = vxor.u32 %v3103, 2147483648
  %v3120 = vxor.u32 %v3104, 2147483648
  %v3121 = vxor.u32 %v3105, 2147483648
  %v3122 = vxor.u32 %v3106, 2147483648
  %v3123 = vxor.u32 %v3107, 2147483648
  %v3124 = vmul.f32 %v3108, 1.442695
  %v3125 = vpow.pop %v3124
  %v3126 = vmul.f32 %v3109, 1.442695
  %v3127 = vpow.pop %v3126
  %v3128 = vmul.f32 %v3110, 1.442695
  %v3129 = vpow.pop %v3128
  %v3130 = vmul.f32 %v3111, 1.442695
  %v3131 = vpow.pop %v3130
  %v3132 = vmul.f32 %v3112, 1.442695
  %v3133 = vpow.pop %v3132
  %v3134 = vmul.f32 %v3113, 1.442695
  %v3135 = vpow.pop %v3134
  %v3136 = vmul.f32 %v3114, 1.442695
  %v3137 = vpow.pop %v3136
  %v3138 = vmul.f32 %v3115, 1.442695
  %v3139 = vpow.pop %v3138
  %v3140 = vmul.f32 %v3116, 1.442695
  %v3141 = vpow.pop %v3140
  %v3142 = vmul.f32 %v3117, 1.442695
  %v3143 = vpow.pop %v3142
  %v3144 = vmul.f32 %v3118, 1.442695
  %v3145 = vpow.pop %v3144
  %v3146 = vmul.f32 %v3119, 1.442695
  %v3147 = vpow.pop %v3146
  %v3148 = vmul.f32 %v3120, 1.442695
  %v3149 = vpow.pop %v3148
  %v3150 = vmul.f32 %v3121, 1.442695
  %v3151 = vpow.pop %v3150
  %v3152 = vmul.f32 %v3122, 1.442695
  %v3153 = vpow.pop %v3152
  %v3154 = vmul.f32 %v3123, 1.442695
  %v3155 = vpow.pop %v3154
  %v3156 = vadd.f32 %v3125, 1.0
  %v3157 = vadd.f32 %v3127, 1.0
  %v3158 = vadd.f32 %v3129, 1.0
  %v3159 = vadd.f32 %v3131, 1.0
  %v3160 = vadd.f32 %v3133, 1.0
  %v3161 = vadd.f32 %v3135, 1.0
  %v3162 = vadd.f32 %v3137, 1.0
  %v3163 = vadd.f32 %v3139, 1.0
  %v3164 = vadd.f32 %v3141, 1.0
  %v3165 = vadd.f32 %v3143, 1.0
  %v3166 = vadd.f32 %v3145, 1.0
  %v3167 = vadd.f32 %v3147, 1.0
  %v3168 = vadd.f32 %v3149, 1.0
  %v3169 = vadd.f32 %v3151, 1.0
  %v3170 = vadd.f32 %v3153, 1.0
  %v3171 = vadd.f32 %v3155, 1.0
  %v3172 = vrcp.pop %v3156
  %v3173 = vmul.f32 1.0, %v3172
  %v3174 = vrcp.pop %v3157
  %v3175 = vmul.f32 1.0, %v3174
  %v3176 = vrcp.pop %v3158
  %v3177 = vmul.f32 1.0, %v3176
  %v3178 = vrcp.pop %v3159
  %v3179 = vmul.f32 1.0, %v3178
  %v3180 = vrcp.pop %v3160
  %v3181 = vmul.f32 1.0, %v3180
  %v3182 = vrcp.pop %v3161
  %v3183 = vmul.f32 1.0, %v3182
  %v3184 = vrcp.pop %v3162
  %v3185 = vmul.f32 1.0, %v3184
  %v3186 = vrcp.pop %v3163
  %v3187 = vmul.f32 1.0, %v3186
  %v3188 = vrcp.pop %v3164
  %v3189 = vmul.f32 1.0, %v3188
  %v3190 = vrcp.pop %v3165
  %v3191 = vmul.f32 1.0, %v3190
  %v3192 = vrcp.pop %v3166
  %v3193 = vmul.f32 1.0, %v3192
  %v3194 = vrcp.pop %v3167
  %v3195 = vmul.f32 1.0, %v3194
  %v3196 = vrcp.pop %v3168
  %v3197 = vmul.f32 1.0, %v3196
  %v3198 = vrcp.pop %v3169
  %v3199 = vmul.f32 1.0, %v3198
  %v3200 = vrcp.pop %v3170
  %v3201 = vmul.f32 1.0, %v3200
  %v3202 = vrcp.pop %v3171
  %v3203 = vmul.f32 1.0, %v3202
  %v3204 = vmul.f32 %v3189, 2.0
  %v3205 = vmul.f32 %v3191, 2.0
  %v3206 = vmul.f32 %v3193, 2.0
  %v3207 = vmul.f32 %v3195, 2.0
  %v3208 = vsub.f32 %v3204, 1.0
  %v3209 = vsub.f32 %v3205, 1.0
  %v3210 = vsub.f32 %v3206, 1.0
  %v3211 = vsub.f32 %v3207, 1.0
  %3216 = vrot.lane.b32.xlu0 %v2859, 48
  %v3217 = vpop.permute.xlu0 %3216
  %3218 = vrot.lane.b32.xlu0 %v2860, 48
  %v3219 = vpop.permute.xlu0 %3218
  %3220 = vrot.lane.b32.xlu0 %v2861, 48
  %v3221 = vpop.permute.xlu0 %3220
  %3222 = vrot.lane.b32.xlu0 %v2862, 48
  %v3223 = vpop.permute.xlu0 %3222
  %v3228 = vmul.f32 %v3181, %v3217
  %v3229 = vmul.f32 %v3183, %v3219
  %v3230 = vmul.f32 %v3185, %v3221
  %v3231 = vmul.f32 %v3187, %v3223
  %v3232 = vmul.f32 %v3173, %v3208
  %v3233 = vmul.f32 %v3175, %v3209
  %v3234 = vmul.f32 %v3177, %v3210
  %v3235 = vmul.f32 %v3179, %v3211
  %v3236 = vadd.f32 %v3228, %v3232
  %v3237 = vadd.f32 %v3229, %v3233
  %v3238 = vadd.f32 %v3230, %v3234
  %v3239 = vadd.f32 %v3231, %v3235
  %v3240 = vtanh.pop %v3236
  %v3241 = vtanh.pop %v3237
  %v3242 = vtanh.pop %v3238
  %v3243 = vtanh.pop %v3239
  %v3244 = vmul.f32 %v3197, %v3240
  %v3245 = vmul.f32 %v3199, %v3241
  %v3246 = vmul.f32 %v3201, %v3242
  %v3247 = vmul.f32 %v3203, %v3243
  %vm3248 = vcmp.gt.s32.totalorder %v509, 6
  %3253 = vrot.lane.b32.xlu0 %v3236, 80
  %v3254 = vpop.permute.xlu0 %3253
  %3255 = vrot.lane.b32.xlu0 %v3237, 80
  %v3256 = vpop.permute.xlu0 %3255
  %3257 = vrot.lane.b32.xlu0 %v3238, 80
  %v3258 = vpop.permute.xlu0 %3257
  %3259 = vrot.lane.b32.xlu0 %v3239, 80
  %v3260 = vpop.permute.xlu0 %3259
  %v3265 = vsel %vm3248, %v3254, %v2859
  %v3266 = vsel %vm3248, %v3256, %v2860
  %v3267 = vsel %vm3248, %v3258, %v2861
  %v3268 = vsel %vm3248, %v3260, %v2862
  %3273 = vrot.lane.b32.xlu0 %v3244, 80
  %v3274 = vpop.permute.xlu0 %3273
  %3275 = vrot.lane.b32.xlu0 %v3245, 80
  %v3276 = vpop.permute.xlu0 %3275
  %3277 = vrot.lane.b32.xlu0 %v3246, 80
  %v3278 = vpop.permute.xlu0 %3277
  %3279 = vrot.lane.b32.xlu0 %v3247, 80
  %v3280 = vpop.permute.xlu0 %3279
  %v3285 = vsel %vm3248, %v3274, %v2879
  %v3286 = vsel %vm3248, %v3276, %v2880
  %v3287 = vsel %vm3248, %v3278, %v2881
  %v3288 = vsel %vm3248, %v3280, %v2882
  %3289 = vmatprep.subr.mxu0 0.0
  %3290 = vmatpush1.msra.mxu0 0.0
  %3291 = vmatprep.subr.mxu0 0.0
  %3292 = vmatpush1.msra.mxu0 0.0
  %3293 = vmatprep.subr.mxu0 0.0
  %3294 = vmatpush1.msra.mxu0 0.0
  %3295 = vmatprep.subr.mxu0 0.0
  %3296 = vmatpush1.msra.mxu0 0.0
  %3297 = vmatprep.subr.mxu0 0.0
  %3298 = vmatpush1.msra.mxu0 0.0
  %3299 = vmatprep.subr.mxu0 0.0
  %3300 = vmatpush1.msra.mxu0 0.0
  %3301 = vmatprep.subr.mxu0 0.0
  %3302 = vmatpush1.msra.mxu0 0.0
  %3303 = vmatprep.subr.mxu0 0.0
  %3304 = vmatpush1.msra.mxu0 0.0
  %3305 = vmatprep.subr.mxu0 0.0
  %3306 = vmatpush1.msra.mxu0 0.0
  %3307 = vmatprep.subr.mxu0 0.0
  %3308 = vmatpush1.msra.mxu0 0.0
  %3309 = vmatprep.subr.mxu0 0.0
  %3310 = vmatpush1.msra.mxu0 0.0
  %3311 = vmatprep.subr.mxu0 0.0
  %3312 = vmatpush1.msra.mxu0 0.0
  %3313 = vmatprep.subr.mxu0 0.0
  %3314 = vmatpush1.msra.mxu0 %v3288
  %3315 = vmatprep.subr.mxu0 0.0
  %3316 = vmatpush1.msra.mxu0 %v3287
  %3317 = vmatprep.subr.mxu0 0.0
  %3318 = vmatpush1.msra.mxu0 %v3286
  %3319 = vmatprep.subr.mxu0 0.0
  %3320 = vmatpush1.msra.mxu0 %v3285
  %3321 = vmatprep.subr.mxu0 0.0
  %3322 = vmatpush2.msra.mxu0 0.0
  %3323 = vmatprep.subr.mxu0 0.0
  %3324 = vmatpush2.msra.mxu0 0.0
  %3325 = vmatprep.subr.mxu0 0.0
  %3326 = vmatpush2.msra.mxu0 0.0
  %3327 = vmatprep.subr.mxu0 0.0
  %3328 = vmatpush2.msra.mxu0 0.0
  %3329 = vmatprep.subr.mxu0 0.0
  %3330 = vmatpush2.msra.mxu0 0.0
  %3331 = vmatprep.subr.mxu0 0.0
  %3332 = vmatpush2.msra.mxu0 0.0
  %3333 = vmatprep.subr.mxu0 0.0
  %3334 = vmatpush2.msra.mxu0 0.0
  %3335 = vmatprep.subr.mxu0 0.0
  %3336 = vmatpush2.msra.mxu0 0.0
  %3337 = vmatprep.subr.mxu0 0.0
  %3338 = vmatpush2.msra.mxu0 0.0
  %3339 = vmatprep.subr.mxu0 0.0
  %3340 = vmatpush2.msra.mxu0 0.0
  %3341 = vmatprep.subr.mxu0 0.0
  %3342 = vmatpush2.msra.mxu0 0.0
  %3343 = vmatprep.subr.mxu0 0.0
  %3344 = vmatpush2.msra.mxu0 0.0
  %3345 = vmatprep.subr.mxu0 0.0
  %3346 = vmatpush2.msra.mxu0 0.0
  %3347 = vmatprep.subr.mxu0 0.0
  %3348 = vmatpush2.msra.mxu0 0.0
  %3349 = vmatprep.subr.mxu0 0.0
  %3350 = vmatpush2.msra.mxu0 0.0
  %3351 = vmatprep.subr.mxu0 0.0
  %3352 = vmatpush2.msra.mxu0 0.0
  %3353 = vmatprep.mubr.f32.mxu0 0.0
  %3354 = vmatmul.mubr.f32.gmra.mxu0 %v512
  %v3355 = vpop.f32.mrf.mxu0
  %v3356 = vadd.f32 0.0, %v3355
  %v3357 = vpop.f32.mrf.mxu0
  %3358 = vmatprep.mubr.f32.mxu0 0.0
  %3359 = vmatmul.mubr.f32.gmra.mxu0 %v515
  %v3360 = vpop.f32.mrf.mxu0
  %v3361 = vadd.f32 0.0, %v3360
  %v3362 = vpop.f32.mrf.mxu0
  %3363 = vmatprep.mubr.f32.mxu0 0.0
  %3364 = vmatmul.mubr.f32.gmra.mxu0 %v518
  %v3365 = vpop.f32.mrf.mxu0
  %v3366 = vadd.f32 0.0, %v3365
  %v3367 = vpop.f32.mrf.mxu0
  %3368 = vmatprep.mubr.f32.mxu0 0.0
  %3369 = vmatmul.mubr.f32.gmra.mxu0 %v521
  %v3370 = vpop.f32.mrf.mxu0
  %v3371 = vadd.f32 0.0, %v3370
  %v3372 = vpop.f32.mrf.mxu0
  %3373 = vmatprep.mubr.f32.mxu0 0.0
  %3374 = vmatmul.mubr.f32.gmra.mxu0 %v524
  %v3375 = vpop.f32.mrf.mxu0
  %v3376 = vadd.f32 0.0, %v3375
  %v3377 = vpop.f32.mrf.mxu0
  %3378 = vmatprep.mubr.f32.mxu0 0.0
  %3379 = vmatmul.mubr.f32.gmra.mxu0 %v527
  %v3380 = vpop.f32.mrf.mxu0
  %v3381 = vadd.f32 0.0, %v3380
  %v3382 = vpop.f32.mrf.mxu0
  %3383 = vmatprep.mubr.f32.mxu0 0.0
  %3384 = vmatmul.mubr.f32.gmra.mxu0 %v530
  %v3385 = vpop.f32.mrf.mxu0
  %v3386 = vadd.f32 0.0, %v3385
  %v3387 = vpop.f32.mrf.mxu0
  %3388 = vmatprep.mubr.f32.mxu0 0.0
  %3389 = vmatmul.mubr.f32.gmra.mxu0 %v533
  %v3390 = vpop.f32.mrf.mxu0
  %v3391 = vadd.f32 0.0, %v3390
  %v3392 = vpop.f32.mrf.mxu0
  %3393 = vmatprep.mubr.f32.mxu0 0.0
  %3394 = vmatmul.mubr.f32.gmra.mxu0 %v536
  %v3395 = vpop.f32.mrf.mxu0
  %v3396 = vadd.f32 0.0, %v3395
  %v3397 = vpop.f32.mrf.mxu0
  %3398 = vmatprep.mubr.f32.mxu0 0.0
  %3399 = vmatmul.mubr.f32.gmra.mxu0 %v539
  %v3400 = vpop.f32.mrf.mxu0
  %v3401 = vadd.f32 0.0, %v3400
  %v3402 = vpop.f32.mrf.mxu0
  %3403 = vmatprep.mubr.f32.mxu0 0.0
  %3404 = vmatmul.mubr.f32.gmra.mxu0 %v542
  %v3405 = vpop.f32.mrf.mxu0
  %v3406 = vadd.f32 0.0, %v3405
  %v3407 = vpop.f32.mrf.mxu0
  %3408 = vmatprep.mubr.f32.mxu0 0.0
  %3409 = vmatmul.mubr.f32.gmra.mxu0 %v545
  %v3410 = vpop.f32.mrf.mxu0
  %v3411 = vadd.f32 0.0, %v3410
  %v3412 = vpop.f32.mrf.mxu0
  %3413 = vmatprep.mubr.f32.mxu0 0.0
  %3414 = vmatmul.mubr.f32.gmra.mxu0 %v548
  %v3415 = vpop.f32.mrf.mxu0
  %v3416 = vadd.f32 0.0, %v3415
  %v3417 = vpop.f32.mrf.mxu0
  %3418 = vmatprep.mubr.f32.mxu0 0.0
  %3419 = vmatmul.mubr.f32.gmra.mxu0 %v551
  %v3420 = vpop.f32.mrf.mxu0
  %v3421 = vadd.f32 0.0, %v3420
  %v3422 = vpop.f32.mrf.mxu0
  %3423 = vmatprep.mubr.f32.mxu0 0.0
  %3424 = vmatmul.mubr.f32.gmra.mxu0 %v554
  %v3425 = vpop.f32.mrf.mxu0
  %v3426 = vadd.f32 0.0, %v3425
  %v3427 = vpop.f32.mrf.mxu0
  %3428 = vmatprep.mubr.f32.mxu0 0.0
  %3429 = vmatmul.mubr.f32.gmra.mxu0 %v557
  %v3430 = vpop.f32.mrf.mxu0
  %v3431 = vadd.f32 0.0, %v3430
  %v3432 = vpop.f32.mrf.mxu0
  %3433 = vdwg.mxu0
  %3450 = vrot.lane.b32.xlu0 %v3356, 56
  %v3451 = vpop.permute.xlu0 %3450
  %3452 = vrot.lane.b32.xlu0 %v3361, 56
  %v3453 = vpop.permute.xlu0 %3452
  %3454 = vrot.lane.b32.xlu0 %v3366, 56
  %v3455 = vpop.permute.xlu0 %3454
  %3456 = vrot.lane.b32.xlu0 %v3371, 56
  %v3457 = vpop.permute.xlu0 %3456
  %3458 = vrot.lane.b32.xlu0 %v3376, 56
  %v3459 = vpop.permute.xlu0 %3458
  %3460 = vrot.lane.b32.xlu0 %v3381, 56
  %v3461 = vpop.permute.xlu0 %3460
  %3462 = vrot.lane.b32.xlu0 %v3386, 56
  %v3463 = vpop.permute.xlu0 %3462
  %3464 = vrot.lane.b32.xlu0 %v3391, 56
  %v3465 = vpop.permute.xlu0 %3464
  %3466 = vrot.lane.b32.xlu0 %v3396, 56
  %v3467 = vpop.permute.xlu0 %3466
  %3468 = vrot.lane.b32.xlu0 %v3401, 56
  %v3469 = vpop.permute.xlu0 %3468
  %3470 = vrot.lane.b32.xlu0 %v3406, 56
  %v3471 = vpop.permute.xlu0 %3470
  %3472 = vrot.lane.b32.xlu0 %v3411, 56
  %v3473 = vpop.permute.xlu0 %3472
  %3474 = vrot.lane.b32.xlu0 %v3416, 56
  %v3475 = vpop.permute.xlu0 %3474
  %3476 = vrot.lane.b32.xlu0 %v3421, 56
  %v3477 = vpop.permute.xlu0 %3476
  %3478 = vrot.lane.b32.xlu0 %v3426, 56
  %v3479 = vpop.permute.xlu0 %3478
  %3480 = vrot.lane.b32.xlu0 %v3431, 56
  %v3481 = vpop.permute.xlu0 %3480
  %v3498 = vadd.f32 %v443, %v3451
  %v3499 = vadd.f32 %v446, %v3453
  %v3500 = vadd.f32 %v451, %v3455
  %v3501 = vadd.f32 %v454, %v3457
  %v3502 = vadd.f32 %v459, %v3459
  %v3503 = vadd.f32 %v462, %v3461
  %v3504 = vadd.f32 %v467, %v3463
  %v3505 = vadd.f32 %v470, %v3465
  %v3506 = vadd.f32 %v475, %v3467
  %v3507 = vadd.f32 %v478, %v3469
  %v3508 = vadd.f32 %v483, %v3471
  %v3509 = vadd.f32 %v486, %v3473
  %v3510 = vadd.f32 %v491, %v3475
  %v3511 = vadd.f32 %v494, %v3477
  %v3512 = vadd.f32 %v499, %v3479
  %v3513 = vadd.f32 %v502, %v3481
  %v3514 = vxor.u32 %v3498, 2147483648
  %v3515 = vxor.u32 %v3499, 2147483648
  %v3516 = vxor.u32 %v3500, 2147483648
  %v3517 = vxor.u32 %v3501, 2147483648
  %v3518 = vxor.u32 %v3502, 2147483648
  %v3519 = vxor.u32 %v3503, 2147483648
  %v3520 = vxor.u32 %v3504, 2147483648
  %v3521 = vxor.u32 %v3505, 2147483648
  %v3522 = vxor.u32 %v3506, 2147483648
  %v3523 = vxor.u32 %v3507, 2147483648
  %v3524 = vxor.u32 %v3508, 2147483648
  %v3525 = vxor.u32 %v3509, 2147483648
  %v3526 = vxor.u32 %v3510, 2147483648
  %v3527 = vxor.u32 %v3511, 2147483648
  %v3528 = vxor.u32 %v3512, 2147483648
  %v3529 = vxor.u32 %v3513, 2147483648
  %v3530 = vmul.f32 %v3514, 1.442695
  %v3531 = vpow.pop %v3530
  %v3532 = vmul.f32 %v3515, 1.442695
  %v3533 = vpow.pop %v3532
  %v3534 = vmul.f32 %v3516, 1.442695
  %v3535 = vpow.pop %v3534
  %v3536 = vmul.f32 %v3517, 1.442695
  %v3537 = vpow.pop %v3536
  %v3538 = vmul.f32 %v3518, 1.442695
  %v3539 = vpow.pop %v3538
  %v3540 = vmul.f32 %v3519, 1.442695
  %v3541 = vpow.pop %v3540
  %v3542 = vmul.f32 %v3520, 1.442695
  %v3543 = vpow.pop %v3542
  %v3544 = vmul.f32 %v3521, 1.442695
  %v3545 = vpow.pop %v3544
  %v3546 = vmul.f32 %v3522, 1.442695
  %v3547 = vpow.pop %v3546
  %v3548 = vmul.f32 %v3523, 1.442695
  %v3549 = vpow.pop %v3548
  %v3550 = vmul.f32 %v3524, 1.442695
  %v3551 = vpow.pop %v3550
  %v3552 = vmul.f32 %v3525, 1.442695
  %v3553 = vpow.pop %v3552
  %v3554 = vmul.f32 %v3526, 1.442695
  %v3555 = vpow.pop %v3554
  %v3556 = vmul.f32 %v3527, 1.442695
  %v3557 = vpow.pop %v3556
  %v3558 = vmul.f32 %v3528, 1.442695
  %v3559 = vpow.pop %v3558
  %v3560 = vmul.f32 %v3529, 1.442695
  %v3561 = vpow.pop %v3560
  %v3562 = vadd.f32 %v3531, 1.0
  %v3563 = vadd.f32 %v3533, 1.0
  %v3564 = vadd.f32 %v3535, 1.0
  %v3565 = vadd.f32 %v3537, 1.0
  %v3566 = vadd.f32 %v3539, 1.0
  %v3567 = vadd.f32 %v3541, 1.0
  %v3568 = vadd.f32 %v3543, 1.0
  %v3569 = vadd.f32 %v3545, 1.0
  %v3570 = vadd.f32 %v3547, 1.0
  %v3571 = vadd.f32 %v3549, 1.0
  %v3572 = vadd.f32 %v3551, 1.0
  %v3573 = vadd.f32 %v3553, 1.0
  %v3574 = vadd.f32 %v3555, 1.0
  %v3575 = vadd.f32 %v3557, 1.0
  %v3576 = vadd.f32 %v3559, 1.0
  %v3577 = vadd.f32 %v3561, 1.0
  %v3578 = vrcp.pop %v3562
  %v3579 = vmul.f32 1.0, %v3578
  %v3580 = vrcp.pop %v3563
  %v3581 = vmul.f32 1.0, %v3580
  %v3582 = vrcp.pop %v3564
  %v3583 = vmul.f32 1.0, %v3582
  %v3584 = vrcp.pop %v3565
  %v3585 = vmul.f32 1.0, %v3584
  %v3586 = vrcp.pop %v3566
  %v3587 = vmul.f32 1.0, %v3586
  %v3588 = vrcp.pop %v3567
  %v3589 = vmul.f32 1.0, %v3588
  %v3590 = vrcp.pop %v3568
  %v3591 = vmul.f32 1.0, %v3590
  %v3592 = vrcp.pop %v3569
  %v3593 = vmul.f32 1.0, %v3592
  %v3594 = vrcp.pop %v3570
  %v3595 = vmul.f32 1.0, %v3594
  %v3596 = vrcp.pop %v3571
  %v3597 = vmul.f32 1.0, %v3596
  %v3598 = vrcp.pop %v3572
  %v3599 = vmul.f32 1.0, %v3598
  %v3600 = vrcp.pop %v3573
  %v3601 = vmul.f32 1.0, %v3600
  %v3602 = vrcp.pop %v3574
  %v3603 = vmul.f32 1.0, %v3602
  %v3604 = vrcp.pop %v3575
  %v3605 = vmul.f32 1.0, %v3604
  %v3606 = vrcp.pop %v3576
  %v3607 = vmul.f32 1.0, %v3606
  %v3608 = vrcp.pop %v3577
  %v3609 = vmul.f32 1.0, %v3608
  %v3610 = vmul.f32 %v3595, 2.0
  %v3611 = vmul.f32 %v3597, 2.0
  %v3612 = vmul.f32 %v3599, 2.0
  %v3613 = vmul.f32 %v3601, 2.0
  %v3614 = vsub.f32 %v3610, 1.0
  %v3615 = vsub.f32 %v3611, 1.0
  %v3616 = vsub.f32 %v3612, 1.0
  %v3617 = vsub.f32 %v3613, 1.0
  %3622 = vrot.lane.b32.xlu0 %v3265, 56
  %v3623 = vpop.permute.xlu0 %3622
  %3624 = vrot.lane.b32.xlu0 %v3266, 56
  %v3625 = vpop.permute.xlu0 %3624
  %3626 = vrot.lane.b32.xlu0 %v3267, 56
  %v3627 = vpop.permute.xlu0 %3626
  %3628 = vrot.lane.b32.xlu0 %v3268, 56
  %v3629 = vpop.permute.xlu0 %3628
  %v3634 = vmul.f32 %v3587, %v3623
  %v3635 = vmul.f32 %v3589, %v3625
  %v3636 = vmul.f32 %v3591, %v3627
  %v3637 = vmul.f32 %v3593, %v3629
  %v3638 = vmul.f32 %v3579, %v3614
  %v3639 = vmul.f32 %v3581, %v3615
  %v3640 = vmul.f32 %v3583, %v3616
  %v3641 = vmul.f32 %v3585, %v3617
  %v3642 = vadd.f32 %v3634, %v3638
  %v3643 = vadd.f32 %v3635, %v3639
  %v3644 = vadd.f32 %v3636, %v3640
  %v3645 = vadd.f32 %v3637, %v3641
  %v3646 = vtanh.pop %v3642
  %v3647 = vtanh.pop %v3643
  %v3648 = vtanh.pop %v3644
  %v3649 = vtanh.pop %v3645
  %v3650 = vmul.f32 %v3603, %v3646
  %v3651 = vmul.f32 %v3605, %v3647
  %v3652 = vmul.f32 %v3607, %v3648
  %v3653 = vmul.f32 %v3609, %v3649
  %vm3654 = vcmp.gt.s32.totalorder %v509, 7
  %3659 = vrot.lane.b32.xlu0 %v3650, 72
  %v3660 = vpop.permute.xlu0 %3659
  %3661 = vrot.lane.b32.xlu0 %v3651, 72
  %v3662 = vpop.permute.xlu0 %3661
  %3663 = vrot.lane.b32.xlu0 %v3652, 72
  %v3664 = vpop.permute.xlu0 %3663
  %3665 = vrot.lane.b32.xlu0 %v3653, 72
  %v3666 = vpop.permute.xlu0 %3665
  %v3671 = vsel %vm3654, %v3660, %v3285
  %v3672 = vsel %vm3654, %v3662, %v3286
  %v3673 = vsel %vm3654, %v3664, %v3287
  %v3674 = vsel %vm3654, %v3666, %v3288
  %vm3675 = vcmask 64512
  %3676 = vst.msk [vmem:[%s7] sm:$0xff] %vm3675, %v3671
  %3677 = vst.msk [vmem:[%s7 + $0x8] sm:$0xff] %vm3675, %v3672
  %3678 = vst.msk [vmem:[%s7 + $0x10] sm:$0xff] %vm3675, %v3673
  %3679 = vst.msk [vmem:[%s7 + $0x18] sm:$0xff] %vm3675, %v3674
  // Predicated region
  $region30: #{tpu_custom_call.1} parent=0 // pred_check
    _
  $region31: #{tpu_custom_call.1} parent=0 // pred_check_branch
    %3681 = sbr.rel (0) target = $region33
  $region32: #{tpu_custom_call.1} parent=0 // pred_region
    _
  $region33: #{tpu_custom_call.1} parent=0 // pred_fallthru
    _
  // Predicated region
  $region34: #{tpu_custom_call.1} parent=0 // pred_check
    _
  $region35: #{tpu_custom_call.1} parent=0 // pred_check_branch
    %3683 = sbr.rel (0) target = $region37
  $region36: #{tpu_custom_call.1} parent=0 // pred_region
    _
  $region37: #{tpu_custom_call.1} parent=0 // pred_fallthru
    _

</llo_original>
